<compile_context>
chip_gen: v7x
topology: tpu7x:2x2x1
jax: 0.10.0
libtpu: 0.0.40
codegen_flags: <defaults>
</compile_context>

<pallas_src>
import functools
import math

import numpy as np

import jax
import jax.numpy as jnp
from jax.experimental import pallas as pl
from jax.experimental.pallas import tpu as pltpu

# ----------------------------- tiny BERT config ------------------------------
VOCAB = 128
HIDDEN = 32
N_HEADS = 4
HEAD_DIM = HIDDEN // N_HEADS
INTER = 64
N_LAYERS = 2
MAX_POS = 16
EPS = 1e-12


# --------------------- static layout of the packed table ---------------------
def _layout_entries():
    """(name, rows, cols) for every parameter block, cols <= 128."""
    e = [
        ("emb_w", VOCAB + MAX_POS, HIDDEN),     # [wte ; wpe + wtt[0]]
        ("emb_ln_g", 1, HIDDEN), ("emb_ln_b", 1, HIDDEN),
    ]
    for l in range(N_LAYERS):
        for hh in range(N_HEADS):
            tag = f"{l}_{hh}"
            e += [
                (f"wq_{tag}", HIDDEN, HEAD_DIM), (f"wk_{tag}", HIDDEN, HEAD_DIM),
                (f"wv_{tag}", HIDDEN, HEAD_DIM), (f"wo_{tag}", HEAD_DIM, HIDDEN),
                (f"bq_{tag}", 1, HEAD_DIM), (f"bk_{tag}", 1, HEAD_DIM),
                (f"bv_{tag}", 1, HEAD_DIM),
            ]
        e += [
            (f"bo_{l}", 1, HIDDEN),
            (f"ln1_g_{l}", 1, HIDDEN), (f"ln1_b_{l}", 1, HIDDEN),
            (f"wi_{l}", HIDDEN, INTER), (f"bi_{l}", 1, INTER),
            (f"wf_{l}", INTER, HIDDEN), (f"bf_{l}", 1, HIDDEN),
            (f"ln2_g_{l}", 1, HIDDEN), (f"ln2_b_{l}", 1, HIDDEN),
        ]
    e += [
        ("mlm_w", HIDDEN, HIDDEN), ("mlm_b", 1, HIDDEN),
        ("mlm_ln_g", 1, HIDDEN), ("mlm_ln_b", 1, HIDDEN),
        ("wte_t", HIDDEN, VOCAB), ("dec_b", 1, VOCAB),
    ]
    return e


def _build_layout():
    offs, n = {}, 0
    for name, r, _c in _layout_entries():
        offs[name] = n
        n += r + ((-r) % 8)          # 8-sublane-aligned blocks
    return offs, n


_OFFS, _TABLE_ROWS = _build_layout()      # static Python ints (compile-time)


# ------------------------- single fused Pallas kernel ------------------------
def _bert_kernel(ids_ref, am_ref, tbl_ref, o_ref, *, b, s):
    f32 = jnp.float32
    t = b * s

    def blk(name, r, c):
        o = _OFFS[name]
        return tbl_ref[o:o + r, :c]

    def vec(name, c=HIDDEN):
        o = _OFFS[name]
        return tbl_ref[o:o + 1, :c]

    def layer_norm(x, gname, bname):
        mean = jnp.mean(x, axis=-1, keepdims=True)
        xc = x - mean
        var = jnp.mean(xc * xc, axis=-1, keepdims=True)
        return xc * jax.lax.rsqrt(var + EPS) * vec(gname) + vec(bname)

    def gelu(x):
        # TODO(synk): HF default hidden_act='gelu' is the exact erf form; Mosaic
        # has no erf lowering, so the tanh approximation (~1e-3 drift) is used.
        return 0.5 * x * (
            1.0 + jnp.tanh(0.7978845608028654 * (x + 0.044715 * x * x * x))
        )

    # ---- embeddings: one-hot(token | position) @ [wte ; wpe+wtt0] on the MXU ----
    # TODO(synk): token_type_ids are assumed all-zero (wtt[0] folded into wpe).
    ids = ids_ref[...]                                              # (T, 1) i32
    lane = jax.lax.broadcasted_iota(jnp.int32, (t, VOCAB + MAX_POS), 1)
    row = jax.lax.broadcasted_iota(jnp.int32, (t, VOCAB + MAX_POS), 0)
    if (s & (s - 1)) == 0:                                          # pos = row % s
        pos = jnp.bitwise_and(row, s - 1)
    else:
        pos = row % s
    # branches are mutually exclusive (ids < VOCAB <= lane for position lanes),
    # so the combined one-hot is a plain sum -- no select needed.
    onehot = (lane == ids).astype(f32) + ((lane - VOCAB) == pos).astype(f32)
    emb = jnp.dot(onehot, blk("emb_w", VOCAB + MAX_POS, HIDDEN),
                  preferred_element_type=f32)                       # (T, H)
    h = layer_norm(emb, "emb_ln_g", "emb_ln_b")

    # ---- (T, T) additive mask: padding + cross-sequence block-diagonal ----
    rowi = jax.lax.broadcasted_iota(jnp.int32, (t, t), 0)
    coli = jax.lax.broadcasted_iota(jnp.int32, (t, t), 1)
    if (s & (s - 1)) == 0:
        shift = s.bit_length() - 1
        same = (jnp.right_shift(rowi, shift) == jnp.right_shift(coli, shift))
    else:
        same = (rowi // s) == (coli // s)
    keep = same.astype(f32) * am_ref[...]          # (T,T) * (1,T) -> 1 = attend
    mask_add = (keep - 1.0) * 30000.0              # 0 or -30000 (exp -> exactly 0)

    # -------------------------------- encoder ---------------------------------
    for l in range(N_LAYERS):
        # self-attention: per-head weight blocks, everything stays 2-D (T, *)
        attn = vec(f"bo_{l}")                      # start from output-proj bias
        for hh in range(N_HEADS):
            tag = f"{l}_{hh}"
            q = jnp.dot(h, blk(f"wq_{tag}", HIDDEN, HEAD_DIM),
                        preferred_element_type=f32) + vec(f"bq_{tag}", HEAD_DIM)
            k = jnp.dot(h, blk(f"wk_{tag}", HIDDEN, HEAD_DIM),
                        preferred_element_type=f32) + vec(f"bk_{tag}", HEAD_DIM)
            v = jnp.dot(h, blk(f"wv_{tag}", HIDDEN, HEAD_DIM),
                        preferred_element_type=f32) + vec(f"bv_{tag}", HEAD_DIM)
            # scores: q @ k^T  (1/sqrt(head_dim) already folded into wq/bq)
            sc = jax.lax.dot_general(
                q, k, (((1,), (1,)), ((), ())),
                preferred_element_type=f32) + mask_add               # (T, T)
            sc = sc - jnp.max(sc, axis=-1, keepdims=True)
            p = jnp.exp(sc)
            p = p * pl.reciprocal(jnp.sum(p, axis=-1, keepdims=True), approx=True)
            ctx = jnp.dot(p, v, preferred_element_type=f32)          # (T, Dh)
            # per-head output projection (== concat(heads) @ Wo)
            attn = attn + jnp.dot(ctx, blk(f"wo_{tag}", HEAD_DIM, HIDDEN),
                                  preferred_element_type=f32)
        h = layer_norm(attn + h, f"ln1_g_{l}", f"ln1_b_{l}")

        # feed-forward: dense + GELU + dense + residual + LN
        inter = gelu(jnp.dot(h, blk(f"wi_{l}", HIDDEN, INTER),
                             preferred_element_type=f32) + vec(f"bi_{l}", INTER))
        ffn = jnp.dot(inter, blk(f"wf_{l}", INTER, HIDDEN),
                      preferred_element_type=f32) + vec(f"bf_{l}")
        h = layer_norm(ffn + h, f"ln2_g_{l}", f"ln2_b_{l}")

    # ---- MLM head: transform (dense + GELU + LN), weight-tied decoder ----
    tt = gelu(jnp.dot(h, blk("mlm_w", HIDDEN, HIDDEN),
                      preferred_element_type=f32) + vec("mlm_b"))
    tt = layer_norm(tt, "mlm_ln_g", "mlm_ln_b")
    logits = jnp.dot(tt, blk("wte_t", HIDDEN, VOCAB),
                     preferred_element_type=f32) + vec("dec_b", VOCAB)
    o_ref[...] = logits.astype(o_ref.dtype)


# ------------------------------ parameter setup -------------------------------
def init_params(key):
    """Random-init BERT-for-MLM parameters, packed into one (rows, 128) table."""
    def nrm(k, shape):
        return 0.02 * jax.random.normal(k, shape, dtype=jnp.float32)

    ks = iter(jax.random.split(key, 4 + 6 * N_LAYERS))
    wte = nrm(next(ks), (VOCAB, HIDDEN))
    wpe = nrm(next(ks), (MAX_POS, HIDDEN))
    wtt = nrm(next(ks), (2, HIDDEN))
    mlm_w = nrm(next(ks), (HIDDEN, HIDDEN))

    vals = {
        "emb_w": jnp.concatenate([wte, wpe + wtt[0:1]], axis=0),   # (144, H)
        "emb_ln_g": jnp.ones((1, HIDDEN)), "emb_ln_b": jnp.zeros((1, HIDDEN)),
        "mlm_w": mlm_w, "mlm_b": jnp.zeros((1, HIDDEN)),
        "mlm_ln_g": jnp.ones((1, HIDDEN)), "mlm_ln_b": jnp.zeros((1, HIDDEN)),
        "wte_t": wte.T,                                            # tied decoder
        "dec_b": jnp.zeros((1, VOCAB)),
    }

    inv = 1.0 / math.sqrt(HEAD_DIM)
    for l in range(N_LAYERS):
        wq = nrm(next(ks), (HIDDEN, HIDDEN)) * inv      # score scale folded into Q
        wk = nrm(next(ks), (HIDDEN, HIDDEN))
        wv = nrm(next(ks), (HIDDEN, HIDDEN))
        wo = nrm(next(ks), (HIDDEN, HIDDEN))
        bq = jnp.zeros((1, HIDDEN)) * inv               # (scale fold applies to bq)
        bk = jnp.zeros((1, HIDDEN))
        bv = jnp.zeros((1, HIDDEN))
        for hh in range(N_HEADS):
            c = slice(hh * HEAD_DIM, (hh + 1) * HEAD_DIM)
            tag = f"{l}_{hh}"
            vals[f"wq_{tag}"] = wq[:, c]
            vals[f"wk_{tag}"] = wk[:, c]
            vals[f"wv_{tag}"] = wv[:, c]
            vals[f"wo_{tag}"] = wo[c, :]
            vals[f"bq_{tag}"] = bq[:, c]
            vals[f"bk_{tag}"] = bk[:, c]
            vals[f"bv_{tag}"] = bv[:, c]
        vals[f"bo_{l}"] = jnp.zeros((1, HIDDEN))
        vals[f"ln1_g_{l}"] = jnp.ones((1, HIDDEN))
        vals[f"ln1_b_{l}"] = jnp.zeros((1, HIDDEN))
        vals[f"wi_{l}"] = nrm(next(ks), (HIDDEN, INTER))
        vals[f"bi_{l}"] = jnp.zeros((1, INTER))
        vals[f"wf_{l}"] = nrm(next(ks), (INTER, HIDDEN))
        vals[f"bf_{l}"] = jnp.zeros((1, HIDDEN))
        vals[f"ln2_g_{l}"] = jnp.ones((1, HIDDEN))
        vals[f"ln2_b_{l}"] = jnp.zeros((1, HIDDEN))

    tbl = np.zeros((_TABLE_ROWS, 128), np.float32)
    for name, r, c in _layout_entries():
        tbl[_OFFS[name]:_OFFS[name] + r, :c] = (
            np.asarray(vals[name], np.float32).reshape(r, c))
    return jnp.asarray(tbl)


# ------------------------------ full forward pass -----------------------------
def bert_mlm_forward(table, input_ids, attention_mask):
    """Equivalent of Bert_Model.forward -> outputs[0] (MLM logits)."""
    b, s = input_ids.shape
    assert s <= MAX_POS
    t = b * s
    ids = input_ids.reshape(t, 1).astype(jnp.int32)
    am = attention_mask.reshape(1, t).astype(jnp.float32)

    vmem = pl.BlockSpec(memory_space=pltpu.MemorySpace.VMEM)
    logits = pl.pallas_call(
        functools.partial(_bert_kernel, b=b, s=s),
        out_shape=jax.ShapeDtypeStruct((t, VOCAB), jnp.float32),
        in_specs=[vmem, vmem, vmem],
        out_specs=vmem,
    )(ids, am, table)
    return logits.reshape(b, s, VOCAB)


# ----------------------------------- main -------------------------------------
if __name__ == "__main__":
    key = jax.random.PRNGKey(0)
    pkey, ikey = jax.random.split(key)
    table = init_params(pkey)

    B, S = 2, 8
    input_ids = jax.random.randint(ikey, (B, S), 0, VOCAB, dtype=jnp.int32)
    attention_mask = jnp.array(
        [[1, 1, 1, 1, 1, 1, 0, 0],
         [1, 1, 1, 1, 1, 1, 1, 1]], dtype=jnp.int32
    )

    logits = jax.jit(bert_mlm_forward)(table, input_ids, attention_mask)
    jax.block_until_ready(logits)
    assert logits.shape == (B, S, VOCAB) and logits.dtype == jnp.float32
    print("KERNEL_OK")
</pallas_src>

<mosaic_0001>
module attributes {stable_mosaic.version = 11 : i64} {
  func.func @_bert_kernel(%arg0: memref<16x1xi32, #tpu.memory_space<vmem>>, %arg1: memref<1x16xf32, #tpu.memory_space<vmem>>, %arg2: memref<1584x128xf32, #tpu.memory_space<vmem>>, %arg3: memref<16x128xf32, #tpu.memory_space<vmem>>) attributes {dimension_semantics = [], scalar_prefetch = 0 : i64, scratch_operands = 0 : i64, tpu.core_type = #tpu.core_type<tc>} {
    %c0 = arith.constant 0 : index
    %c0_0 = arith.constant 0 : index
    %0 = vector.load %arg0[%c0, %c0_0] : memref<16x1xi32, #tpu.memory_space<vmem>>, vector<16x1xi32>
    %1 = tpu.iota {dimensions = array<i32: 1>} : vector<16x144xi32>
    %2 = tpu.iota {dimensions = array<i32: 0>} : vector<16x144xi32>
    %c7_i32 = arith.constant 7 : i32
    %3 = vector.broadcast %c7_i32 : i32 to vector<16x144xi32>
    %4 = arith.andi %2, %3 : vector<16x144xi32>
    %5 = vector.broadcast %0 : vector<16x1xi32> to vector<16x144xi32>
    %6 = arith.cmpi eq, %1, %5 : vector<16x144xi32>
    %7 = arith.extui %6 : vector<16x144xi1> to vector<16x144xi32>
    %8 = arith.sitofp %7 : vector<16x144xi32> to vector<16x144xf32>
    %c128_i32 = arith.constant 128 : i32
    %9 = vector.broadcast %c128_i32 : i32 to vector<16x144xi32>
    %10 = arith.subi %1, %9 : vector<16x144xi32>
    %11 = arith.cmpi eq, %10, %4 : vector<16x144xi32>
    %12 = arith.extui %11 : vector<16x144xi1> to vector<16x144xi32>
    %13 = arith.sitofp %12 : vector<16x144xi32> to vector<16x144xf32>
    %14 = arith.addf %8, %13 : vector<16x144xf32>
    %c0_1 = arith.constant 0 : index
    %c0_2 = arith.constant 0 : index
    %15 = vector.load %arg2[%c0_1, %c0_2] : memref<1584x128xf32, #tpu.memory_space<vmem>>, vector<144x32xf32>
    %cst = arith.constant dense<0.000000e+00> : vector<16x32xf32>
    %16 = tpu.matmul %14, %15, %cst {dimension_numbers = #tpu.dot_dimension_numbers<[1], [0], [0], [1], [0, 0, 1, 1], [], []>} : vector<16x144xf32>, vector<144x32xf32>, vector<16x32xf32> -> vector<16x32xf32>
    %cst_3 = arith.constant dense<0.000000e+00> : vector<16xf32>
    %17 = vector.multi_reduction <add>, %16, %cst_3 [1] : vector<16x32xf32> to vector<16xf32>
    %18 = vector.shape_cast %17 : vector<16xf32> to vector<16x1xf32>
    %cst_4 = arith.constant 3.200000e+01 : f32
    %19 = vector.broadcast %cst_4 : f32 to vector<16x1xf32>
    %20 = arith.divf %18, %19 : vector<16x1xf32>
    %21 = vector.broadcast %20 : vector<16x1xf32> to vector<16x32xf32>
    %22 = arith.subf %16, %21 : vector<16x32xf32>
    %23 = arith.mulf %22, %22 : vector<16x32xf32>
    %cst_5 = arith.constant dense<0.000000e+00> : vector<16xf32>
    %24 = vector.multi_reduction <add>, %23, %cst_5 [1] : vector<16x32xf32> to vector<16xf32>
    %25 = vector.shape_cast %24 : vector<16xf32> to vector<16x1xf32>
    %cst_6 = arith.constant 3.200000e+01 : f32
    %26 = vector.broadcast %cst_6 : f32 to vector<16x1xf32>
    %27 = arith.divf %25, %26 : vector<16x1xf32>
    %cst_7 = arith.constant 9.99999996E-13 : f32
    %28 = vector.broadcast %cst_7 : f32 to vector<16x1xf32>
    %29 = arith.addf %27, %28 : vector<16x1xf32>
    %30 = math.rsqrt %29 : vector<16x1xf32>
    %31 = vector.broadcast %30 : vector<16x1xf32> to vector<16x32xf32>
    %32 = arith.mulf %22, %31 : vector<16x32xf32>
    %c144 = arith.constant 144 : index
    %c0_8 = arith.constant 0 : index
    %33 = vector.load %arg2[%c144, %c0_8] : memref<1584x128xf32, #tpu.memory_space<vmem>>, vector<1x32xf32>
    %34 = vector.broadcast %33 : vector<1x32xf32> to vector<16x32xf32>
    %35 = arith.mulf %32, %34 : vector<16x32xf32>
    %c152 = arith.constant 152 : index
    %c0_9 = arith.constant 0 : index
    %36 = vector.load %arg2[%c152, %c0_9] : memref<1584x128xf32, #tpu.memory_space<vmem>>, vector<1x32xf32>
    %37 = vector.broadcast %36 : vector<1x32xf32> to vector<16x32xf32>
    %38 = arith.addf %35, %37 : vector<16x32xf32>
    %39 = tpu.iota {dimensions = array<i32: 0>} : vector<16x16xi32>
    %40 = tpu.iota {dimensions = array<i32: 1>} : vector<16x16xi32>
    %c3_i32 = arith.constant 3 : i32
    %41 = vector.broadcast %c3_i32 : i32 to vector<16x16xi32>
    %42 = arith.shrsi %39, %41 : vector<16x16xi32>
    %c3_i32_10 = arith.constant 3 : i32
    %43 = vector.broadcast %c3_i32_10 : i32 to vector<16x16xi32>
    %44 = arith.shrsi %40, %43 : vector<16x16xi32>
    %45 = arith.cmpi eq, %42, %44 : vector<16x16xi32>
    %46 = arith.extui %45 : vector<16x16xi1> to vector<16x16xi32>
    %47 = arith.sitofp %46 : vector<16x16xi32> to vector<16x16xf32>
    %c0_11 = arith.constant 0 : index
    %c0_12 = arith.constant 0 : index
    %48 = vector.load %arg1[%c0_11, %c0_12] : memref<1x16xf32, #tpu.memory_space<vmem>>, vector<1x16xf32>
    %49 = vector.broadcast %48 : vector<1x16xf32> to vector<16x16xf32>
    %50 = arith.mulf %47, %49 : vector<16x16xf32>
    %cst_13 = arith.constant 1.000000e+00 : f32
    %51 = vector.broadcast %cst_13 : f32 to vector<16x16xf32>
    %52 = arith.subf %50, %51 : vector<16x16xf32>
    %cst_14 = arith.constant 3.000000e+04 : f32
    %53 = vector.broadcast %cst_14 : f32 to vector<16x16xf32>
    %54 = arith.mulf %52, %53 : vector<16x16xf32>
    %c672 = arith.constant 672 : index
    %c0_15 = arith.constant 0 : index
    %55 = vector.load %arg2[%c672, %c0_15] : memref<1584x128xf32, #tpu.memory_space<vmem>>, vector<1x32xf32>
    %c160 = arith.constant 160 : index
    %c0_16 = arith.constant 0 : index
    %56 = vector.load %arg2[%c160, %c0_16] : memref<1584x128xf32, #tpu.memory_space<vmem>>, vector<32x8xf32>
    %cst_17 = arith.constant dense<0.000000e+00> : vector<16x8xf32>
    %57 = tpu.matmul %38, %56, %cst_17 {dimension_numbers = #tpu.dot_dimension_numbers<[1], [0], [0], [1], [0, 0, 1, 1], [], []>} : vector<16x32xf32>, vector<32x8xf32>, vector<16x8xf32> -> vector<16x8xf32>
    %c264 = arith.constant 264 : index
    %c0_18 = arith.constant 0 : index
    %58 = vector.load %arg2[%c264, %c0_18] : memref<1584x128xf32, #tpu.memory_space<vmem>>, vector<1x8xf32>
    %59 = vector.broadcast %58 : vector<1x8xf32> to vector<16x8xf32>
    %60 = arith.addf %57, %59 : vector<16x8xf32>
    %c192 = arith.constant 192 : index
    %c0_19 = arith.constant 0 : index
    %61 = vector.load %arg2[%c192, %c0_19] : memref<1584x128xf32, #tpu.memory_space<vmem>>, vector<32x8xf32>
    %cst_20 = arith.constant dense<0.000000e+00> : vector<16x8xf32>
    %62 = tpu.matmul %38, %61, %cst_20 {dimension_numbers = #tpu.dot_dimension_numbers<[1], [0], [0], [1], [0, 0, 1, 1], [], []>} : vector<16x32xf32>, vector<32x8xf32>, vector<16x8xf32> -> vector<16x8xf32>
    %c272 = arith.constant 272 : index
    %c0_21 = arith.constant 0 : index
    %63 = vector.load %arg2[%c272, %c0_21] : memref<1584x128xf32, #tpu.memory_space<vmem>>, vector<1x8xf32>
    %64 = vector.broadcast %63 : vector<1x8xf32> to vector<16x8xf32>
    %65 = arith.addf %62, %64 : vector<16x8xf32>
    %c224 = arith.constant 224 : index
    %c0_22 = arith.constant 0 : index
    %66 = vector.load %arg2[%c224, %c0_22] : memref<1584x128xf32, #tpu.memory_space<vmem>>, vector<32x8xf32>
    %cst_23 = arith.constant dense<0.000000e+00> : vector<16x8xf32>
    %67 = tpu.matmul %38, %66, %cst_23 {dimension_numbers = #tpu.dot_dimension_numbers<[1], [0], [0], [1], [0, 0, 1, 1], [], []>} : vector<16x32xf32>, vector<32x8xf32>, vector<16x8xf32> -> vector<16x8xf32>
    %c280 = arith.constant 280 : index
    %c0_24 = arith.constant 0 : index
    %68 = vector.load %arg2[%c280, %c0_24] : memref<1584x128xf32, #tpu.memory_space<vmem>>, vector<1x8xf32>
    %69 = vector.broadcast %68 : vector<1x8xf32> to vector<16x8xf32>
    %70 = arith.addf %67, %69 : vector<16x8xf32>
    %cst_25 = arith.constant dense<0.000000e+00> : vector<16x16xf32>
    %71 = tpu.matmul %60, %65, %cst_25 {dimension_numbers = #tpu.dot_dimension_numbers<[1], [1], [0], [0], [0, 0, 1, 0], [], []>} : vector<16x8xf32>, vector<16x8xf32>, vector<16x16xf32> -> vector<16x16xf32>
    %72 = arith.addf %71, %54 : vector<16x16xf32>
    %cst_26 = arith.constant dense<0xFF800000> : vector<16xf32>
    %73 = vector.multi_reduction <maximumf>, %72, %cst_26 [1] : vector<16x16xf32> to vector<16xf32>
    %74 = vector.shape_cast %73 : vector<16xf32> to vector<16x1xf32>
    %75 = vector.broadcast %74 : vector<16x1xf32> to vector<16x16xf32>
    %76 = arith.subf %72, %75 : vector<16x16xf32>
    %77 = math.exp %76 : vector<16x16xf32>
    %cst_27 = arith.constant dense<0.000000e+00> : vector<16xf32>
    %78 = vector.multi_reduction <add>, %77, %cst_27 [1] : vector<16x16xf32> to vector<16xf32>
    %79 = vector.shape_cast %78 : vector<16xf32> to vector<16x1xf32>
    %80 = tpu.reciprocal %79 {approx = true} : vector<16x1xf32> -> vector<16x1xf32>
    %81 = vector.broadcast %80 : vector<16x1xf32> to vector<16x16xf32>
    %82 = arith.mulf %77, %81 : vector<16x16xf32>
    %cst_28 = arith.constant dense<0.000000e+00> : vector<16x8xf32>
    %83 = tpu.matmul %82, %70, %cst_28 {dimension_numbers = #tpu.dot_dimension_numbers<[1], [0], [0], [1], [0, 0, 1, 1], [], []>} : vector<16x16xf32>, vector<16x8xf32>, vector<16x8xf32> -> vector<16x8xf32>
    %c256 = arith.constant 256 : index
    %c0_29 = arith.constant 0 : index
    %84 = vector.load %arg2[%c256, %c0_29] : memref<1584x128xf32, #tpu.memory_space<vmem>>, vector<8x32xf32>
    %cst_30 = arith.constant dense<0.000000e+00> : vector<16x32xf32>
    %85 = tpu.matmul %83, %84, %cst_30 {dimension_numbers = #tpu.dot_dimension_numbers<[1], [0], [0], [1], [0, 0, 1, 1], [], []>} : vector<16x8xf32>, vector<8x32xf32>, vector<16x32xf32> -> vector<16x32xf32>
    %86 = vector.broadcast %55 : vector<1x32xf32> to vector<16x32xf32>
    %87 = arith.addf %86, %85 : vector<16x32xf32>
    %c288 = arith.constant 288 : index
    %c0_31 = arith.constant 0 : index
    %88 = vector.load %arg2[%c288, %c0_31] : memref<1584x128xf32, #tpu.memory_space<vmem>>, vector<32x8xf32>
    %cst_32 = arith.constant dense<0.000000e+00> : vector<16x8xf32>
    %89 = tpu.matmul %38, %88, %cst_32 {dimension_numbers = #tpu.dot_dimension_numbers<[1], [0], [0], [1], [0, 0, 1, 1], [], []>} : vector<16x32xf32>, vector<32x8xf32>, vector<16x8xf32> -> vector<16x8xf32>
    %c392 = arith.constant 392 : index
    %c0_33 = arith.constant 0 : index
    %90 = vector.load %arg2[%c392, %c0_33] : memref<1584x128xf32, #tpu.memory_space<vmem>>, vector<1x8xf32>
    %91 = vector.broadcast %90 : vector<1x8xf32> to vector<16x8xf32>
    %92 = arith.addf %89, %91 : vector<16x8xf32>
    %c320 = arith.constant 320 : index
    %c0_34 = arith.constant 0 : index
    %93 = vector.load %arg2[%c320, %c0_34] : memref<1584x128xf32, #tpu.memory_space<vmem>>, vector<32x8xf32>
    %cst_35 = arith.constant dense<0.000000e+00> : vector<16x8xf32>
    %94 = tpu.matmul %38, %93, %cst_35 {dimension_numbers = #tpu.dot_dimension_numbers<[1], [0], [0], [1], [0, 0, 1, 1], [], []>} : vector<16x32xf32>, vector<32x8xf32>, vector<16x8xf32> -> vector<16x8xf32>
    %c400 = arith.constant 400 : index
    %c0_36 = arith.constant 0 : index
    %95 = vector.load %arg2[%c400, %c0_36] : memref<1584x128xf32, #tpu.memory_space<vmem>>, vector<1x8xf32>
    %96 = vector.broadcast %95 : vector<1x8xf32> to vector<16x8xf32>
    %97 = arith.addf %94, %96 : vector<16x8xf32>
    %c352 = arith.constant 352 : index
    %c0_37 = arith.constant 0 : index
    %98 = vector.load %arg2[%c352, %c0_37] : memref<1584x128xf32, #tpu.memory_space<vmem>>, vector<32x8xf32>
    %cst_38 = arith.constant dense<0.000000e+00> : vector<16x8xf32>
    %99 = tpu.matmul %38, %98, %cst_38 {dimension_numbers = #tpu.dot_dimension_numbers<[1], [0], [0], [1], [0, 0, 1, 1], [], []>} : vector<16x32xf32>, vector<32x8xf32>, vector<16x8xf32> -> vector<16x8xf32>
    %c408 = arith.constant 408 : index
    %c0_39 = arith.constant 0 : index
    %100 = vector.load %arg2[%c408, %c0_39] : memref<1584x128xf32, #tpu.memory_space<vmem>>, vector<1x8xf32>
    %101 = vector.broadcast %100 : vector<1x8xf32> to vector<16x8xf32>
    %102 = arith.addf %99, %101 : vector<16x8xf32>
    %cst_40 = arith.constant dense<0.000000e+00> : vector<16x16xf32>
    %103 = tpu.matmul %92, %97, %cst_40 {dimension_numbers = #tpu.dot_dimension_numbers<[1], [1], [0], [0], [0, 0, 1, 0], [], []>} : vector<16x8xf32>, vector<16x8xf32>, vector<16x16xf32> -> vector<16x16xf32>
    %104 = arith.addf %103, %54 : vector<16x16xf32>
    %cst_41 = arith.constant dense<0xFF800000> : vector<16xf32>
    %105 = vector.multi_reduction <maximumf>, %104, %cst_41 [1] : vector<16x16xf32> to vector<16xf32>
    %106 = vector.shape_cast %105 : vector<16xf32> to vector<16x1xf32>
    %107 = vector.broadcast %106 : vector<16x1xf32> to vector<16x16xf32>
    %108 = arith.subf %104, %107 : vector<16x16xf32>
    %109 = math.exp %108 : vector<16x16xf32>
    %cst_42 = arith.constant dense<0.000000e+00> : vector<16xf32>
    %110 = vector.multi_reduction <add>, %109, %cst_42 [1] : vector<16x16xf32> to vector<16xf32>
    %111 = vector.shape_cast %110 : vector<16xf32> to vector<16x1xf32>
    %112 = tpu.reciprocal %111 {approx = true} : vector<16x1xf32> -> vector<16x1xf32>
    %113 = vector.broadcast %112 : vector<16x1xf32> to vector<16x16xf32>
    %114 = arith.mulf %109, %113 : vector<16x16xf32>
    %cst_43 = arith.constant dense<0.000000e+00> : vector<16x8xf32>
    %115 = tpu.matmul %114, %102, %cst_43 {dimension_numbers = #tpu.dot_dimension_numbers<[1], [0], [0], [1], [0, 0, 1, 1], [], []>} : vector<16x16xf32>, vector<16x8xf32>, vector<16x8xf32> -> vector<16x8xf32>
    %c384 = arith.constant 384 : index
    %c0_44 = arith.constant 0 : index
    %116 = vector.load %arg2[%c384, %c0_44] : memref<1584x128xf32, #tpu.memory_space<vmem>>, vector<8x32xf32>
    %cst_45 = arith.constant dense<0.000000e+00> : vector<16x32xf32>
    %117 = tpu.matmul %115, %116, %cst_45 {dimension_numbers = #tpu.dot_dimension_numbers<[1], [0], [0], [1], [0, 0, 1, 1], [], []>} : vector<16x8xf32>, vector<8x32xf32>, vector<16x32xf32> -> vector<16x32xf32>
    %118 = arith.addf %87, %117 : vector<16x32xf32>
    %c416 = arith.constant 416 : index
    %c0_46 = arith.constant 0 : index
    %119 = vector.load %arg2[%c416, %c0_46] : memref<1584x128xf32, #tpu.memory_space<vmem>>, vector<32x8xf32>
    %cst_47 = arith.constant dense<0.000000e+00> : vector<16x8xf32>
    %120 = tpu.matmul %38, %119, %cst_47 {dimension_numbers = #tpu.dot_dimension_numbers<[1], [0], [0], [1], [0, 0, 1, 1], [], []>} : vector<16x32xf32>, vector<32x8xf32>, vector<16x8xf32> -> vector<16x8xf32>
    %c520 = arith.constant 520 : index
    %c0_48 = arith.constant 0 : index
    %121 = vector.load %arg2[%c520, %c0_48] : memref<1584x128xf32, #tpu.memory_space<vmem>>, vector<1x8xf32>
    %122 = vector.broadcast %121 : vector<1x8xf32> to vector<16x8xf32>
    %123 = arith.addf %120, %122 : vector<16x8xf32>
    %c448 = arith.constant 448 : index
    %c0_49 = arith.constant 0 : index
    %124 = vector.load %arg2[%c448, %c0_49] : memref<1584x128xf32, #tpu.memory_space<vmem>>, vector<32x8xf32>
    %cst_50 = arith.constant dense<0.000000e+00> : vector<16x8xf32>
    %125 = tpu.matmul %38, %124, %cst_50 {dimension_numbers = #tpu.dot_dimension_numbers<[1], [0], [0], [1], [0, 0, 1, 1], [], []>} : vector<16x32xf32>, vector<32x8xf32>, vector<16x8xf32> -> vector<16x8xf32>
    %c528 = arith.constant 528 : index
    %c0_51 = arith.constant 0 : index
    %126 = vector.load %arg2[%c528, %c0_51] : memref<1584x128xf32, #tpu.memory_space<vmem>>, vector<1x8xf32>
    %127 = vector.broadcast %126 : vector<1x8xf32> to vector<16x8xf32>
    %128 = arith.addf %125, %127 : vector<16x8xf32>
    %c480 = arith.constant 480 : index
    %c0_52 = arith.constant 0 : index
    %129 = vector.load %arg2[%c480, %c0_52] : memref<1584x128xf32, #tpu.memory_space<vmem>>, vector<32x8xf32>
    %cst_53 = arith.constant dense<0.000000e+00> : vector<16x8xf32>
    %130 = tpu.matmul %38, %129, %cst_53 {dimension_numbers = #tpu.dot_dimension_numbers<[1], [0], [0], [1], [0, 0, 1, 1], [], []>} : vector<16x32xf32>, vector<32x8xf32>, vector<16x8xf32> -> vector<16x8xf32>
    %c536 = arith.constant 536 : index
    %c0_54 = arith.constant 0 : index
    %131 = vector.load %arg2[%c536, %c0_54] : memref<1584x128xf32, #tpu.memory_space<vmem>>, vector<1x8xf32>
    %132 = vector.broadcast %131 : vector<1x8xf32> to vector<16x8xf32>
    %133 = arith.addf %130, %132 : vector<16x8xf32>
    %cst_55 = arith.constant dense<0.000000e+00> : vector<16x16xf32>
    %134 = tpu.matmul %123, %128, %cst_55 {dimension_numbers = #tpu.dot_dimension_numbers<[1], [1], [0], [0], [0, 0, 1, 0], [], []>} : vector<16x8xf32>, vector<16x8xf32>, vector<16x16xf32> -> vector<16x16xf32>
    %135 = arith.addf %134, %54 : vector<16x16xf32>
    %cst_56 = arith.constant dense<0xFF800000> : vector<16xf32>
    %136 = vector.multi_reduction <maximumf>, %135, %cst_56 [1] : vector<16x16xf32> to vector<16xf32>
    %137 = vector.shape_cast %136 : vector<16xf32> to vector<16x1xf32>
    %138 = vector.broadcast %137 : vector<16x1xf32> to vector<16x16xf32>
    %139 = arith.subf %135, %138 : vector<16x16xf32>
    %140 = math.exp %139 : vector<16x16xf32>
    %cst_57 = arith.constant dense<0.000000e+00> : vector<16xf32>
    %141 = vector.multi_reduction <add>, %140, %cst_57 [1] : vector<16x16xf32> to vector<16xf32>
    %142 = vector.shape_cast %141 : vector<16xf32> to vector<16x1xf32>
    %143 = tpu.reciprocal %142 {approx = true} : vector<16x1xf32> -> vector<16x1xf32>
    %144 = vector.broadcast %143 : vector<16x1xf32> to vector<16x16xf32>
    %145 = arith.mulf %140, %144 : vector<16x16xf32>
    %cst_58 = arith.constant dense<0.000000e+00> : vector<16x8xf32>
    %146 = tpu.matmul %145, %133, %cst_58 {dimension_numbers = #tpu.dot_dimension_numbers<[1], [0], [0], [1], [0, 0, 1, 1], [], []>} : vector<16x16xf32>, vector<16x8xf32>, vector<16x8xf32> -> vector<16x8xf32>
    %c512 = arith.constant 512 : index
    %c0_59 = arith.constant 0 : index
    %147 = vector.load %arg2[%c512, %c0_59] : memref<1584x128xf32, #tpu.memory_space<vmem>>, vector<8x32xf32>
    %cst_60 = arith.constant dense<0.000000e+00> : vector<16x32xf32>
    %148 = tpu.matmul %146, %147, %cst_60 {dimension_numbers = #tpu.dot_dimension_numbers<[1], [0], [0], [1], [0, 0, 1, 1], [], []>} : vector<16x8xf32>, vector<8x32xf32>, vector<16x32xf32> -> vector<16x32xf32>
    %149 = arith.addf %118, %148 : vector<16x32xf32>
    %c544 = arith.constant 544 : index
    %c0_61 = arith.constant 0 : index
    %150 = vector.load %arg2[%c544, %c0_61] : memref<1584x128xf32, #tpu.memory_space<vmem>>, vector<32x8xf32>
    %cst_62 = arith.constant dense<0.000000e+00> : vector<16x8xf32>
    %151 = tpu.matmul %38, %150, %cst_62 {dimension_numbers = #tpu.dot_dimension_numbers<[1], [0], [0], [1], [0, 0, 1, 1], [], []>} : vector<16x32xf32>, vector<32x8xf32>, vector<16x8xf32> -> vector<16x8xf32>
    %c648 = arith.constant 648 : index
    %c0_63 = arith.constant 0 : index
    %152 = vector.load %arg2[%c648, %c0_63] : memref<1584x128xf32, #tpu.memory_space<vmem>>, vector<1x8xf32>
    %153 = vector.broadcast %152 : vector<1x8xf32> to vector<16x8xf32>
    %154 = arith.addf %151, %153 : vector<16x8xf32>
    %c576 = arith.constant 576 : index
    %c0_64 = arith.constant 0 : index
    %155 = vector.load %arg2[%c576, %c0_64] : memref<1584x128xf32, #tpu.memory_space<vmem>>, vector<32x8xf32>
    %cst_65 = arith.constant dense<0.000000e+00> : vector<16x8xf32>
    %156 = tpu.matmul %38, %155, %cst_65 {dimension_numbers = #tpu.dot_dimension_numbers<[1], [0], [0], [1], [0, 0, 1, 1], [], []>} : vector<16x32xf32>, vector<32x8xf32>, vector<16x8xf32> -> vector<16x8xf32>
    %c656 = arith.constant 656 : index
    %c0_66 = arith.constant 0 : index
    %157 = vector.load %arg2[%c656, %c0_66] : memref<1584x128xf32, #tpu.memory_space<vmem>>, vector<1x8xf32>
    %158 = vector.broadcast %157 : vector<1x8xf32> to vector<16x8xf32>
    %159 = arith.addf %156, %158 : vector<16x8xf32>
    %c608 = arith.constant 608 : index
    %c0_67 = arith.constant 0 : index
    %160 = vector.load %arg2[%c608, %c0_67] : memref<1584x128xf32, #tpu.memory_space<vmem>>, vector<32x8xf32>
    %cst_68 = arith.constant dense<0.000000e+00> : vector<16x8xf32>
    %161 = tpu.matmul %38, %160, %cst_68 {dimension_numbers = #tpu.dot_dimension_numbers<[1], [0], [0], [1], [0, 0, 1, 1], [], []>} : vector<16x32xf32>, vector<32x8xf32>, vector<16x8xf32> -> vector<16x8xf32>
    %c664 = arith.constant 664 : index
    %c0_69 = arith.constant 0 : index
    %162 = vector.load %arg2[%c664, %c0_69] : memref<1584x128xf32, #tpu.memory_space<vmem>>, vector<1x8xf32>
    %163 = vector.broadcast %162 : vector<1x8xf32> to vector<16x8xf32>
    %164 = arith.addf %161, %163 : vector<16x8xf32>
    %cst_70 = arith.constant dense<0.000000e+00> : vector<16x16xf32>
    %165 = tpu.matmul %154, %159, %cst_70 {dimension_numbers = #tpu.dot_dimension_numbers<[1], [1], [0], [0], [0, 0, 1, 0], [], []>} : vector<16x8xf32>, vector<16x8xf32>, vector<16x16xf32> -> vector<16x16xf32>
    %166 = arith.addf %165, %54 : vector<16x16xf32>
    %cst_71 = arith.constant dense<0xFF800000> : vector<16xf32>
    %167 = vector.multi_reduction <maximumf>, %166, %cst_71 [1] : vector<16x16xf32> to vector<16xf32>
    %168 = vector.shape_cast %167 : vector<16xf32> to vector<16x1xf32>
    %169 = vector.broadcast %168 : vector<16x1xf32> to vector<16x16xf32>
    %170 = arith.subf %166, %169 : vector<16x16xf32>
    %171 = math.exp %170 : vector<16x16xf32>
    %cst_72 = arith.constant dense<0.000000e+00> : vector<16xf32>
    %172 = vector.multi_reduction <add>, %171, %cst_72 [1] : vector<16x16xf32> to vector<16xf32>
    %173 = vector.shape_cast %172 : vector<16xf32> to vector<16x1xf32>
    %174 = tpu.reciprocal %173 {approx = true} : vector<16x1xf32> -> vector<16x1xf32>
    %175 = vector.broadcast %174 : vector<16x1xf32> to vector<16x16xf32>
    %176 = arith.mulf %171, %175 : vector<16x16xf32>
    %cst_73 = arith.constant dense<0.000000e+00> : vector<16x8xf32>
    %177 = tpu.matmul %176, %164, %cst_73 {dimension_numbers = #tpu.dot_dimension_numbers<[1], [0], [0], [1], [0, 0, 1, 1], [], []>} : vector<16x16xf32>, vector<16x8xf32>, vector<16x8xf32> -> vector<16x8xf32>
    %c640 = arith.constant 640 : index
    %c0_74 = arith.constant 0 : index
    %178 = vector.load %arg2[%c640, %c0_74] : memref<1584x128xf32, #tpu.memory_space<vmem>>, vector<8x32xf32>
    %cst_75 = arith.constant dense<0.000000e+00> : vector<16x32xf32>
    %179 = tpu.matmul %177, %178, %cst_75 {dimension_numbers = #tpu.dot_dimension_numbers<[1], [0], [0], [1], [0, 0, 1, 1], [], []>} : vector<16x8xf32>, vector<8x32xf32>, vector<16x32xf32> -> vector<16x32xf32>
    %180 = arith.addf %149, %179 : vector<16x32xf32>
    %181 = arith.addf %180, %38 : vector<16x32xf32>
    %cst_76 = arith.constant dense<0.000000e+00> : vector<16xf32>
    %182 = vector.multi_reduction <add>, %181, %cst_76 [1] : vector<16x32xf32> to vector<16xf32>
    %183 = vector.shape_cast %182 : vector<16xf32> to vector<16x1xf32>
    %cst_77 = arith.constant 3.200000e+01 : f32
    %184 = vector.broadcast %cst_77 : f32 to vector<16x1xf32>
    %185 = arith.divf %183, %184 : vector<16x1xf32>
    %186 = vector.broadcast %185 : vector<16x1xf32> to vector<16x32xf32>
    %187 = arith.subf %181, %186 : vector<16x32xf32>
    %188 = arith.mulf %187, %187 : vector<16x32xf32>
    %cst_78 = arith.constant dense<0.000000e+00> : vector<16xf32>
    %189 = vector.multi_reduction <add>, %188, %cst_78 [1] : vector<16x32xf32> to vector<16xf32>
    %190 = vector.shape_cast %189 : vector<16xf32> to vector<16x1xf32>
    %cst_79 = arith.constant 3.200000e+01 : f32
    %191 = vector.broadcast %cst_79 : f32 to vector<16x1xf32>
    %192 = arith.divf %190, %191 : vector<16x1xf32>
    %cst_80 = arith.constant 9.99999996E-13 : f32
    %193 = vector.broadcast %cst_80 : f32 to vector<16x1xf32>
    %194 = arith.addf %192, %193 : vector<16x1xf32>
    %195 = math.rsqrt %194 : vector<16x1xf32>
    %196 = vector.broadcast %195 : vector<16x1xf32> to vector<16x32xf32>
    %197 = arith.mulf %187, %196 : vector<16x32xf32>
    %c680 = arith.constant 680 : index
    %c0_81 = arith.constant 0 : index
    %198 = vector.load %arg2[%c680, %c0_81] : memref<1584x128xf32, #tpu.memory_space<vmem>>, vector<1x32xf32>
    %199 = vector.broadcast %198 : vector<1x32xf32> to vector<16x32xf32>
    %200 = arith.mulf %197, %199 : vector<16x32xf32>
    %c688 = arith.constant 688 : index
    %c0_82 = arith.constant 0 : index
    %201 = vector.load %arg2[%c688, %c0_82] : memref<1584x128xf32, #tpu.memory_space<vmem>>, vector<1x32xf32>
    %202 = vector.broadcast %201 : vector<1x32xf32> to vector<16x32xf32>
    %203 = arith.addf %200, %202 : vector<16x32xf32>
    %c696 = arith.constant 696 : index
    %c0_83 = arith.constant 0 : index
    %204 = vector.load %arg2[%c696, %c0_83] : memref<1584x128xf32, #tpu.memory_space<vmem>>, vector<32x64xf32>
    %cst_84 = arith.constant dense<0.000000e+00> : vector<16x64xf32>
    %205 = tpu.matmul %203, %204, %cst_84 {dimension_numbers = #tpu.dot_dimension_numbers<[1], [0], [0], [1], [0, 0, 1, 1], [], []>} : vector<16x32xf32>, vector<32x64xf32>, vector<16x64xf32> -> vector<16x64xf32>
    %c728 = arith.constant 728 : index
    %c0_85 = arith.constant 0 : index
    %206 = vector.load %arg2[%c728, %c0_85] : memref<1584x128xf32, #tpu.memory_space<vmem>>, vector<1x64xf32>
    %207 = vector.broadcast %206 : vector<1x64xf32> to vector<16x64xf32>
    %208 = arith.addf %205, %207 : vector<16x64xf32>
    %cst_86 = arith.constant 5.000000e-01 : f32
    %209 = vector.broadcast %cst_86 : f32 to vector<16x64xf32>
    %210 = arith.mulf %209, %208 : vector<16x64xf32>
    %cst_87 = arith.constant 4.471500e-02 : f32
    %211 = vector.broadcast %cst_87 : f32 to vector<16x64xf32>
    %212 = arith.mulf %211, %208 : vector<16x64xf32>
    %213 = arith.mulf %212, %208 : vector<16x64xf32>
    %214 = arith.mulf %213, %208 : vector<16x64xf32>
    %215 = arith.addf %208, %214 : vector<16x64xf32>
    %cst_88 = arith.constant 0.797884583 : f32
    %216 = vector.broadcast %cst_88 : f32 to vector<16x64xf32>
    %217 = arith.mulf %216, %215 : vector<16x64xf32>
    %218 = math.tanh %217 : vector<16x64xf32>
    %cst_89 = arith.constant 1.000000e+00 : f32
    %219 = vector.broadcast %cst_89 : f32 to vector<16x64xf32>
    %220 = arith.addf %219, %218 : vector<16x64xf32>
    %221 = arith.mulf %210, %220 : vector<16x64xf32>
    %c736 = arith.constant 736 : index
    %c0_90 = arith.constant 0 : index
    %222 = vector.load %arg2[%c736, %c0_90] : memref<1584x128xf32, #tpu.memory_space<vmem>>, vector<64x32xf32>
    %cst_91 = arith.constant dense<0.000000e+00> : vector<16x32xf32>
    %223 = tpu.matmul %221, %222, %cst_91 {dimension_numbers = #tpu.dot_dimension_numbers<[1], [0], [0], [1], [0, 0, 1, 1], [], []>} : vector<16x64xf32>, vector<64x32xf32>, vector<16x32xf32> -> vector<16x32xf32>
    %c800 = arith.constant 800 : index
    %c0_92 = arith.constant 0 : index
    %224 = vector.load %arg2[%c800, %c0_92] : memref<1584x128xf32, #tpu.memory_space<vmem>>, vector<1x32xf32>
    %225 = vector.broadcast %224 : vector<1x32xf32> to vector<16x32xf32>
    %226 = arith.addf %223, %225 : vector<16x32xf32>
    %227 = arith.addf %226, %203 : vector<16x32xf32>
    %cst_93 = arith.constant dense<0.000000e+00> : vector<16xf32>
    %228 = vector.multi_reduction <add>, %227, %cst_93 [1] : vector<16x32xf32> to vector<16xf32>
    %229 = vector.shape_cast %228 : vector<16xf32> to vector<16x1xf32>
    %cst_94 = arith.constant 3.200000e+01 : f32
    %230 = vector.broadcast %cst_94 : f32 to vector<16x1xf32>
    %231 = arith.divf %229, %230 : vector<16x1xf32>
    %232 = vector.broadcast %231 : vector<16x1xf32> to vector<16x32xf32>
    %233 = arith.subf %227, %232 : vector<16x32xf32>
    %234 = arith.mulf %233, %233 : vector<16x32xf32>
    %cst_95 = arith.constant dense<0.000000e+00> : vector<16xf32>
    %235 = vector.multi_reduction <add>, %234, %cst_95 [1] : vector<16x32xf32> to vector<16xf32>
    %236 = vector.shape_cast %235 : vector<16xf32> to vector<16x1xf32>
    %cst_96 = arith.constant 3.200000e+01 : f32
    %237 = vector.broadcast %cst_96 : f32 to vector<16x1xf32>
    %238 = arith.divf %236, %237 : vector<16x1xf32>
    %cst_97 = arith.constant 9.99999996E-13 : f32
    %239 = vector.broadcast %cst_97 : f32 to vector<16x1xf32>
    %240 = arith.addf %238, %239 : vector<16x1xf32>
    %241 = math.rsqrt %240 : vector<16x1xf32>
    %242 = vector.broadcast %241 : vector<16x1xf32> to vector<16x32xf32>
    %243 = arith.mulf %233, %242 : vector<16x32xf32>
    %c808 = arith.constant 808 : index
    %c0_98 = arith.constant 0 : index
    %244 = vector.load %arg2[%c808, %c0_98] : memref<1584x128xf32, #tpu.memory_space<vmem>>, vector<1x32xf32>
    %245 = vector.broadcast %244 : vector<1x32xf32> to vector<16x32xf32>
    %246 = arith.mulf %243, %245 : vector<16x32xf32>
    %c816 = arith.constant 816 : index
    %c0_99 = arith.constant 0 : index
    %247 = vector.load %arg2[%c816, %c0_99] : memref<1584x128xf32, #tpu.memory_space<vmem>>, vector<1x32xf32>
    %248 = vector.broadcast %247 : vector<1x32xf32> to vector<16x32xf32>
    %249 = arith.addf %246, %248 : vector<16x32xf32>
    %c1336 = arith.constant 1336 : index
    %c0_100 = arith.constant 0 : index
    %250 = vector.load %arg2[%c1336, %c0_100] : memref<1584x128xf32, #tpu.memory_space<vmem>>, vector<1x32xf32>
    %c824 = arith.constant 824 : index
    %c0_101 = arith.constant 0 : index
    %251 = vector.load %arg2[%c824, %c0_101] : memref<1584x128xf32, #tpu.memory_space<vmem>>, vector<32x8xf32>
    %cst_102 = arith.constant dense<0.000000e+00> : vector<16x8xf32>
    %252 = tpu.matmul %249, %251, %cst_102 {dimension_numbers = #tpu.dot_dimension_numbers<[1], [0], [0], [1], [0, 0, 1, 1], [], []>} : vector<16x32xf32>, vector<32x8xf32>, vector<16x8xf32> -> vector<16x8xf32>
    %c928 = arith.constant 928 : index
    %c0_103 = arith.constant 0 : index
    %253 = vector.load %arg2[%c928, %c0_103] : memref<1584x128xf32, #tpu.memory_space<vmem>>, vector<1x8xf32>
    %254 = vector.broadcast %253 : vector<1x8xf32> to vector<16x8xf32>
    %255 = arith.addf %252, %254 : vector<16x8xf32>
    %c856 = arith.constant 856 : index
    %c0_104 = arith.constant 0 : index
    %256 = vector.load %arg2[%c856, %c0_104] : memref<1584x128xf32, #tpu.memory_space<vmem>>, vector<32x8xf32>
    %cst_105 = arith.constant dense<0.000000e+00> : vector<16x8xf32>
    %257 = tpu.matmul %249, %256, %cst_105 {dimension_numbers = #tpu.dot_dimension_numbers<[1], [0], [0], [1], [0, 0, 1, 1], [], []>} : vector<16x32xf32>, vector<32x8xf32>, vector<16x8xf32> -> vector<16x8xf32>
    %c936 = arith.constant 936 : index
    %c0_106 = arith.constant 0 : index
    %258 = vector.load %arg2[%c936, %c0_106] : memref<1584x128xf32, #tpu.memory_space<vmem>>, vector<1x8xf32>
    %259 = vector.broadcast %258 : vector<1x8xf32> to vector<16x8xf32>
    %260 = arith.addf %257, %259 : vector<16x8xf32>
    %c888 = arith.constant 888 : index
    %c0_107 = arith.constant 0 : index
    %261 = vector.load %arg2[%c888, %c0_107] : memref<1584x128xf32, #tpu.memory_space<vmem>>, vector<32x8xf32>
    %cst_108 = arith.constant dense<0.000000e+00> : vector<16x8xf32>
    %262 = tpu.matmul %249, %261, %cst_108 {dimension_numbers = #tpu.dot_dimension_numbers<[1], [0], [0], [1], [0, 0, 1, 1], [], []>} : vector<16x32xf32>, vector<32x8xf32>, vector<16x8xf32> -> vector<16x8xf32>
    %c944 = arith.constant 944 : index
    %c0_109 = arith.constant 0 : index
    %263 = vector.load %arg2[%c944, %c0_109] : memref<1584x128xf32, #tpu.memory_space<vmem>>, vector<1x8xf32>
    %264 = vector.broadcast %263 : vector<1x8xf32> to vector<16x8xf32>
    %265 = arith.addf %262, %264 : vector<16x8xf32>
    %cst_110 = arith.constant dense<0.000000e+00> : vector<16x16xf32>
    %266 = tpu.matmul %255, %260, %cst_110 {dimension_numbers = #tpu.dot_dimension_numbers<[1], [1], [0], [0], [0, 0, 1, 0], [], []>} : vector<16x8xf32>, vector<16x8xf32>, vector<16x16xf32> -> vector<16x16xf32>
    %267 = arith.addf %266, %54 : vector<16x16xf32>
    %cst_111 = arith.constant dense<0xFF800000> : vector<16xf32>
    %268 = vector.multi_reduction <maximumf>, %267, %cst_111 [1] : vector<16x16xf32> to vector<16xf32>
    %269 = vector.shape_cast %268 : vector<16xf32> to vector<16x1xf32>
    %270 = vector.broadcast %269 : vector<16x1xf32> to vector<16x16xf32>
    %271 = arith.subf %267, %270 : vector<16x16xf32>
    %272 = math.exp %271 : vector<16x16xf32>
    %cst_112 = arith.constant dense<0.000000e+00> : vector<16xf32>
    %273 = vector.multi_reduction <add>, %272, %cst_112 [1] : vector<16x16xf32> to vector<16xf32>
    %274 = vector.shape_cast %273 : vector<16xf32> to vector<16x1xf32>
    %275 = tpu.reciprocal %274 {approx = true} : vector<16x1xf32> -> vector<16x1xf32>
    %276 = vector.broadcast %275 : vector<16x1xf32> to vector<16x16xf32>
    %277 = arith.mulf %272, %276 : vector<16x16xf32>
    %cst_113 = arith.constant dense<0.000000e+00> : vector<16x8xf32>
    %278 = tpu.matmul %277, %265, %cst_113 {dimension_numbers = #tpu.dot_dimension_numbers<[1], [0], [0], [1], [0, 0, 1, 1], [], []>} : vector<16x16xf32>, vector<16x8xf32>, vector<16x8xf32> -> vector<16x8xf32>
    %c920 = arith.constant 920 : index
    %c0_114 = arith.constant 0 : index
    %279 = vector.load %arg2[%c920, %c0_114] : memref<1584x128xf32, #tpu.memory_space<vmem>>, vector<8x32xf32>
    %cst_115 = arith.constant dense<0.000000e+00> : vector<16x32xf32>
    %280 = tpu.matmul %278, %279, %cst_115 {dimension_numbers = #tpu.dot_dimension_numbers<[1], [0], [0], [1], [0, 0, 1, 1], [], []>} : vector<16x8xf32>, vector<8x32xf32>, vector<16x32xf32> -> vector<16x32xf32>
    %281 = vector.broadcast %250 : vector<1x32xf32> to vector<16x32xf32>
    %282 = arith.addf %281, %280 : vector<16x32xf32>
    %c952 = arith.constant 952 : index
    %c0_116 = arith.constant 0 : index
    %283 = vector.load %arg2[%c952, %c0_116] : memref<1584x128xf32, #tpu.memory_space<vmem>>, vector<32x8xf32>
    %cst_117 = arith.constant dense<0.000000e+00> : vector<16x8xf32>
    %284 = tpu.matmul %249, %283, %cst_117 {dimension_numbers = #tpu.dot_dimension_numbers<[1], [0], [0], [1], [0, 0, 1, 1], [], []>} : vector<16x32xf32>, vector<32x8xf32>, vector<16x8xf32> -> vector<16x8xf32>
    %c1056 = arith.constant 1056 : index
    %c0_118 = arith.constant 0 : index
    %285 = vector.load %arg2[%c1056, %c0_118] : memref<1584x128xf32, #tpu.memory_space<vmem>>, vector<1x8xf32>
    %286 = vector.broadcast %285 : vector<1x8xf32> to vector<16x8xf32>
    %287 = arith.addf %284, %286 : vector<16x8xf32>
    %c984 = arith.constant 984 : index
    %c0_119 = arith.constant 0 : index
    %288 = vector.load %arg2[%c984, %c0_119] : memref<1584x128xf32, #tpu.memory_space<vmem>>, vector<32x8xf32>
    %cst_120 = arith.constant dense<0.000000e+00> : vector<16x8xf32>
    %289 = tpu.matmul %249, %288, %cst_120 {dimension_numbers = #tpu.dot_dimension_numbers<[1], [0], [0], [1], [0, 0, 1, 1], [], []>} : vector<16x32xf32>, vector<32x8xf32>, vector<16x8xf32> -> vector<16x8xf32>
    %c1064 = arith.constant 1064 : index
    %c0_121 = arith.constant 0 : index
    %290 = vector.load %arg2[%c1064, %c0_121] : memref<1584x128xf32, #tpu.memory_space<vmem>>, vector<1x8xf32>
    %291 = vector.broadcast %290 : vector<1x8xf32> to vector<16x8xf32>
    %292 = arith.addf %289, %291 : vector<16x8xf32>
    %c1016 = arith.constant 1016 : index
    %c0_122 = arith.constant 0 : index
    %293 = vector.load %arg2[%c1016, %c0_122] : memref<1584x128xf32, #tpu.memory_space<vmem>>, vector<32x8xf32>
    %cst_123 = arith.constant dense<0.000000e+00> : vector<16x8xf32>
    %294 = tpu.matmul %249, %293, %cst_123 {dimension_numbers = #tpu.dot_dimension_numbers<[1], [0], [0], [1], [0, 0, 1, 1], [], []>} : vector<16x32xf32>, vector<32x8xf32>, vector<16x8xf32> -> vector<16x8xf32>
    %c1072 = arith.constant 1072 : index
    %c0_124 = arith.constant 0 : index
    %295 = vector.load %arg2[%c1072, %c0_124] : memref<1584x128xf32, #tpu.memory_space<vmem>>, vector<1x8xf32>
    %296 = vector.broadcast %295 : vector<1x8xf32> to vector<16x8xf32>
    %297 = arith.addf %294, %296 : vector<16x8xf32>
    %cst_125 = arith.constant dense<0.000000e+00> : vector<16x16xf32>
    %298 = tpu.matmul %287, %292, %cst_125 {dimension_numbers = #tpu.dot_dimension_numbers<[1], [1], [0], [0], [0, 0, 1, 0], [], []>} : vector<16x8xf32>, vector<16x8xf32>, vector<16x16xf32> -> vector<16x16xf32>
    %299 = arith.addf %298, %54 : vector<16x16xf32>
    %cst_126 = arith.constant dense<0xFF800000> : vector<16xf32>
    %300 = vector.multi_reduction <maximumf>, %299, %cst_126 [1] : vector<16x16xf32> to vector<16xf32>
    %301 = vector.shape_cast %300 : vector<16xf32> to vector<16x1xf32>
    %302 = vector.broadcast %301 : vector<16x1xf32> to vector<16x16xf32>
    %303 = arith.subf %299, %302 : vector<16x16xf32>
    %304 = math.exp %303 : vector<16x16xf32>
    %cst_127 = arith.constant dense<0.000000e+00> : vector<16xf32>
    %305 = vector.multi_reduction <add>, %304, %cst_127 [1] : vector<16x16xf32> to vector<16xf32>
    %306 = vector.shape_cast %305 : vector<16xf32> to vector<16x1xf32>
    %307 = tpu.reciprocal %306 {approx = true} : vector<16x1xf32> -> vector<16x1xf32>
    %308 = vector.broadcast %307 : vector<16x1xf32> to vector<16x16xf32>
    %309 = arith.mulf %304, %308 : vector<16x16xf32>
    %cst_128 = arith.constant dense<0.000000e+00> : vector<16x8xf32>
    %310 = tpu.matmul %309, %297, %cst_128 {dimension_numbers = #tpu.dot_dimension_numbers<[1], [0], [0], [1], [0, 0, 1, 1], [], []>} : vector<16x16xf32>, vector<16x8xf32>, vector<16x8xf32> -> vector<16x8xf32>
    %c1048 = arith.constant 1048 : index
    %c0_129 = arith.constant 0 : index
    %311 = vector.load %arg2[%c1048, %c0_129] : memref<1584x128xf32, #tpu.memory_space<vmem>>, vector<8x32xf32>
    %cst_130 = arith.constant dense<0.000000e+00> : vector<16x32xf32>
    %312 = tpu.matmul %310, %311, %cst_130 {dimension_numbers = #tpu.dot_dimension_numbers<[1], [0], [0], [1], [0, 0, 1, 1], [], []>} : vector<16x8xf32>, vector<8x32xf32>, vector<16x32xf32> -> vector<16x32xf32>
    %313 = arith.addf %282, %312 : vector<16x32xf32>
    %c1080 = arith.constant 1080 : index
    %c0_131 = arith.constant 0 : index
    %314 = vector.load %arg2[%c1080, %c0_131] : memref<1584x128xf32, #tpu.memory_space<vmem>>, vector<32x8xf32>
    %cst_132 = arith.constant dense<0.000000e+00> : vector<16x8xf32>
    %315 = tpu.matmul %249, %314, %cst_132 {dimension_numbers = #tpu.dot_dimension_numbers<[1], [0], [0], [1], [0, 0, 1, 1], [], []>} : vector<16x32xf32>, vector<32x8xf32>, vector<16x8xf32> -> vector<16x8xf32>
    %c1184 = arith.constant 1184 : index
    %c0_133 = arith.constant 0 : index
    %316 = vector.load %arg2[%c1184, %c0_133] : memref<1584x128xf32, #tpu.memory_space<vmem>>, vector<1x8xf32>
    %317 = vector.broadcast %316 : vector<1x8xf32> to vector<16x8xf32>
    %318 = arith.addf %315, %317 : vector<16x8xf32>
    %c1112 = arith.constant 1112 : index
    %c0_134 = arith.constant 0 : index
    %319 = vector.load %arg2[%c1112, %c0_134] : memref<1584x128xf32, #tpu.memory_space<vmem>>, vector<32x8xf32>
    %cst_135 = arith.constant dense<0.000000e+00> : vector<16x8xf32>
    %320 = tpu.matmul %249, %319, %cst_135 {dimension_numbers = #tpu.dot_dimension_numbers<[1], [0], [0], [1], [0, 0, 1, 1], [], []>} : vector<16x32xf32>, vector<32x8xf32>, vector<16x8xf32> -> vector<16x8xf32>
    %c1192 = arith.constant 1192 : index
    %c0_136 = arith.constant 0 : index
    %321 = vector.load %arg2[%c1192, %c0_136] : memref<1584x128xf32, #tpu.memory_space<vmem>>, vector<1x8xf32>
    %322 = vector.broadcast %321 : vector<1x8xf32> to vector<16x8xf32>
    %323 = arith.addf %320, %322 : vector<16x8xf32>
    %c1144 = arith.constant 1144 : index
    %c0_137 = arith.constant 0 : index
    %324 = vector.load %arg2[%c1144, %c0_137] : memref<1584x128xf32, #tpu.memory_space<vmem>>, vector<32x8xf32>
    %cst_138 = arith.constant dense<0.000000e+00> : vector<16x8xf32>
    %325 = tpu.matmul %249, %324, %cst_138 {dimension_numbers = #tpu.dot_dimension_numbers<[1], [0], [0], [1], [0, 0, 1, 1], [], []>} : vector<16x32xf32>, vector<32x8xf32>, vector<16x8xf32> -> vector<16x8xf32>
    %c1200 = arith.constant 1200 : index
    %c0_139 = arith.constant 0 : index
    %326 = vector.load %arg2[%c1200, %c0_139] : memref<1584x128xf32, #tpu.memory_space<vmem>>, vector<1x8xf32>
    %327 = vector.broadcast %326 : vector<1x8xf32> to vector<16x8xf32>
    %328 = arith.addf %325, %327 : vector<16x8xf32>
    %cst_140 = arith.constant dense<0.000000e+00> : vector<16x16xf32>
    %329 = tpu.matmul %318, %323, %cst_140 {dimension_numbers = #tpu.dot_dimension_numbers<[1], [1], [0], [0], [0, 0, 1, 0], [], []>} : vector<16x8xf32>, vector<16x8xf32>, vector<16x16xf32> -> vector<16x16xf32>
    %330 = arith.addf %329, %54 : vector<16x16xf32>
    %cst_141 = arith.constant dense<0xFF800000> : vector<16xf32>
    %331 = vector.multi_reduction <maximumf>, %330, %cst_141 [1] : vector<16x16xf32> to vector<16xf32>
    %332 = vector.shape_cast %331 : vector<16xf32> to vector<16x1xf32>
    %333 = vector.broadcast %332 : vector<16x1xf32> to vector<16x16xf32>
    %334 = arith.subf %330, %333 : vector<16x16xf32>
    %335 = math.exp %334 : vector<16x16xf32>
    %cst_142 = arith.constant dense<0.000000e+00> : vector<16xf32>
    %336 = vector.multi_reduction <add>, %335, %cst_142 [1] : vector<16x16xf32> to vector<16xf32>
    %337 = vector.shape_cast %336 : vector<16xf32> to vector<16x1xf32>
    %338 = tpu.reciprocal %337 {approx = true} : vector<16x1xf32> -> vector<16x1xf32>
    %339 = vector.broadcast %338 : vector<16x1xf32> to vector<16x16xf32>
    %340 = arith.mulf %335, %339 : vector<16x16xf32>
    %cst_143 = arith.constant dense<0.000000e+00> : vector<16x8xf32>
    %341 = tpu.matmul %340, %328, %cst_143 {dimension_numbers = #tpu.dot_dimension_numbers<[1], [0], [0], [1], [0, 0, 1, 1], [], []>} : vector<16x16xf32>, vector<16x8xf32>, vector<16x8xf32> -> vector<16x8xf32>
    %c1176 = arith.constant 1176 : index
    %c0_144 = arith.constant 0 : index
    %342 = vector.load %arg2[%c1176, %c0_144] : memref<1584x128xf32, #tpu.memory_space<vmem>>, vector<8x32xf32>
    %cst_145 = arith.constant dense<0.000000e+00> : vector<16x32xf32>
    %343 = tpu.matmul %341, %342, %cst_145 {dimension_numbers = #tpu.dot_dimension_numbers<[1], [0], [0], [1], [0, 0, 1, 1], [], []>} : vector<16x8xf32>, vector<8x32xf32>, vector<16x32xf32> -> vector<16x32xf32>
    %344 = arith.addf %313, %343 : vector<16x32xf32>
    %c1208 = arith.constant 1208 : index
    %c0_146 = arith.constant 0 : index
    %345 = vector.load %arg2[%c1208, %c0_146] : memref<1584x128xf32, #tpu.memory_space<vmem>>, vector<32x8xf32>
    %cst_147 = arith.constant dense<0.000000e+00> : vector<16x8xf32>
    %346 = tpu.matmul %249, %345, %cst_147 {dimension_numbers = #tpu.dot_dimension_numbers<[1], [0], [0], [1], [0, 0, 1, 1], [], []>} : vector<16x32xf32>, vector<32x8xf32>, vector<16x8xf32> -> vector<16x8xf32>
    %c1312 = arith.constant 1312 : index
    %c0_148 = arith.constant 0 : index
    %347 = vector.load %arg2[%c1312, %c0_148] : memref<1584x128xf32, #tpu.memory_space<vmem>>, vector<1x8xf32>
    %348 = vector.broadcast %347 : vector<1x8xf32> to vector<16x8xf32>
    %349 = arith.addf %346, %348 : vector<16x8xf32>
    %c1240 = arith.constant 1240 : index
    %c0_149 = arith.constant 0 : index
    %350 = vector.load %arg2[%c1240, %c0_149] : memref<1584x128xf32, #tpu.memory_space<vmem>>, vector<32x8xf32>
    %cst_150 = arith.constant dense<0.000000e+00> : vector<16x8xf32>
    %351 = tpu.matmul %249, %350, %cst_150 {dimension_numbers = #tpu.dot_dimension_numbers<[1], [0], [0], [1], [0, 0, 1, 1], [], []>} : vector<16x32xf32>, vector<32x8xf32>, vector<16x8xf32> -> vector<16x8xf32>
    %c1320 = arith.constant 1320 : index
    %c0_151 = arith.constant 0 : index
    %352 = vector.load %arg2[%c1320, %c0_151] : memref<1584x128xf32, #tpu.memory_space<vmem>>, vector<1x8xf32>
    %353 = vector.broadcast %352 : vector<1x8xf32> to vector<16x8xf32>
    %354 = arith.addf %351, %353 : vector<16x8xf32>
    %c1272 = arith.constant 1272 : index
    %c0_152 = arith.constant 0 : index
    %355 = vector.load %arg2[%c1272, %c0_152] : memref<1584x128xf32, #tpu.memory_space<vmem>>, vector<32x8xf32>
    %cst_153 = arith.constant dense<0.000000e+00> : vector<16x8xf32>
    %356 = tpu.matmul %249, %355, %cst_153 {dimension_numbers = #tpu.dot_dimension_numbers<[1], [0], [0], [1], [0, 0, 1, 1], [], []>} : vector<16x32xf32>, vector<32x8xf32>, vector<16x8xf32> -> vector<16x8xf32>
    %c1328 = arith.constant 1328 : index
    %c0_154 = arith.constant 0 : index
    %357 = vector.load %arg2[%c1328, %c0_154] : memref<1584x128xf32, #tpu.memory_space<vmem>>, vector<1x8xf32>
    %358 = vector.broadcast %357 : vector<1x8xf32> to vector<16x8xf32>
    %359 = arith.addf %356, %358 : vector<16x8xf32>
    %cst_155 = arith.constant dense<0.000000e+00> : vector<16x16xf32>
    %360 = tpu.matmul %349, %354, %cst_155 {dimension_numbers = #tpu.dot_dimension_numbers<[1], [1], [0], [0], [0, 0, 1, 0], [], []>} : vector<16x8xf32>, vector<16x8xf32>, vector<16x16xf32> -> vector<16x16xf32>
    %361 = arith.addf %360, %54 : vector<16x16xf32>
    %cst_156 = arith.constant dense<0xFF800000> : vector<16xf32>
    %362 = vector.multi_reduction <maximumf>, %361, %cst_156 [1] : vector<16x16xf32> to vector<16xf32>
    %363 = vector.shape_cast %362 : vector<16xf32> to vector<16x1xf32>
    %364 = vector.broadcast %363 : vector<16x1xf32> to vector<16x16xf32>
    %365 = arith.subf %361, %364 : vector<16x16xf32>
    %366 = math.exp %365 : vector<16x16xf32>
    %cst_157 = arith.constant dense<0.000000e+00> : vector<16xf32>
    %367 = vector.multi_reduction <add>, %366, %cst_157 [1] : vector<16x16xf32> to vector<16xf32>
    %368 = vector.shape_cast %367 : vector<16xf32> to vector<16x1xf32>
    %369 = tpu.reciprocal %368 {approx = true} : vector<16x1xf32> -> vector<16x1xf32>
    %370 = vector.broadcast %369 : vector<16x1xf32> to vector<16x16xf32>
    %371 = arith.mulf %366, %370 : vector<16x16xf32>
    %cst_158 = arith.constant dense<0.000000e+00> : vector<16x8xf32>
    %372 = tpu.matmul %371, %359, %cst_158 {dimension_numbers = #tpu.dot_dimension_numbers<[1], [0], [0], [1], [0, 0, 1, 1], [], []>} : vector<16x16xf32>, vector<16x8xf32>, vector<16x8xf32> -> vector<16x8xf32>
    %c1304 = arith.constant 1304 : index
    %c0_159 = arith.constant 0 : index
    %373 = vector.load %arg2[%c1304, %c0_159] : memref<1584x128xf32, #tpu.memory_space<vmem>>, vector<8x32xf32>
    %cst_160 = arith.constant dense<0.000000e+00> : vector<16x32xf32>
    %374 = tpu.matmul %372, %373, %cst_160 {dimension_numbers = #tpu.dot_dimension_numbers<[1], [0], [0], [1], [0, 0, 1, 1], [], []>} : vector<16x8xf32>, vector<8x32xf32>, vector<16x32xf32> -> vector<16x32xf32>
    %375 = arith.addf %344, %374 : vector<16x32xf32>
    %376 = arith.addf %375, %249 : vector<16x32xf32>
    %cst_161 = arith.constant dense<0.000000e+00> : vector<16xf32>
    %377 = vector.multi_reduction <add>, %376, %cst_161 [1] : vector<16x32xf32> to vector<16xf32>
    %378 = vector.shape_cast %377 : vector<16xf32> to vector<16x1xf32>
    %cst_162 = arith.constant 3.200000e+01 : f32
    %379 = vector.broadcast %cst_162 : f32 to vector<16x1xf32>
    %380 = arith.divf %378, %379 : vector<16x1xf32>
    %381 = vector.broadcast %380 : vector<16x1xf32> to vector<16x32xf32>
    %382 = arith.subf %376, %381 : vector<16x32xf32>
    %383 = arith.mulf %382, %382 : vector<16x32xf32>
    %cst_163 = arith.constant dense<0.000000e+00> : vector<16xf32>
    %384 = vector.multi_reduction <add>, %383, %cst_163 [1] : vector<16x32xf32> to vector<16xf32>
    %385 = vector.shape_cast %384 : vector<16xf32> to vector<16x1xf32>
    %cst_164 = arith.constant 3.200000e+01 : f32
    %386 = vector.broadcast %cst_164 : f32 to vector<16x1xf32>
    %387 = arith.divf %385, %386 : vector<16x1xf32>
    %cst_165 = arith.constant 9.99999996E-13 : f32
    %388 = vector.broadcast %cst_165 : f32 to vector<16x1xf32>
    %389 = arith.addf %387, %388 : vector<16x1xf32>
    %390 = math.rsqrt %389 : vector<16x1xf32>
    %391 = vector.broadcast %390 : vector<16x1xf32> to vector<16x32xf32>
    %392 = arith.mulf %382, %391 : vector<16x32xf32>
    %c1344 = arith.constant 1344 : index
    %c0_166 = arith.constant 0 : index
    %393 = vector.load %arg2[%c1344, %c0_166] : memref<1584x128xf32, #tpu.memory_space<vmem>>, vector<1x32xf32>
    %394 = vector.broadcast %393 : vector<1x32xf32> to vector<16x32xf32>
    %395 = arith.mulf %392, %394 : vector<16x32xf32>
    %c1352 = arith.constant 1352 : index
    %c0_167 = arith.constant 0 : index
    %396 = vector.load %arg2[%c1352, %c0_167] : memref<1584x128xf32, #tpu.memory_space<vmem>>, vector<1x32xf32>
    %397 = vector.broadcast %396 : vector<1x32xf32> to vector<16x32xf32>
    %398 = arith.addf %395, %397 : vector<16x32xf32>
    %c1360 = arith.constant 1360 : index
    %c0_168 = arith.constant 0 : index
    %399 = vector.load %arg2[%c1360, %c0_168] : memref<1584x128xf32, #tpu.memory_space<vmem>>, vector<32x64xf32>
    %cst_169 = arith.constant dense<0.000000e+00> : vector<16x64xf32>
    %400 = tpu.matmul %398, %399, %cst_169 {dimension_numbers = #tpu.dot_dimension_numbers<[1], [0], [0], [1], [0, 0, 1, 1], [], []>} : vector<16x32xf32>, vector<32x64xf32>, vector<16x64xf32> -> vector<16x64xf32>
    %c1392 = arith.constant 1392 : index
    %c0_170 = arith.constant 0 : index
    %401 = vector.load %arg2[%c1392, %c0_170] : memref<1584x128xf32, #tpu.memory_space<vmem>>, vector<1x64xf32>
    %402 = vector.broadcast %401 : vector<1x64xf32> to vector<16x64xf32>
    %403 = arith.addf %400, %402 : vector<16x64xf32>
    %cst_171 = arith.constant 5.000000e-01 : f32
    %404 = vector.broadcast %cst_171 : f32 to vector<16x64xf32>
    %405 = arith.mulf %404, %403 : vector<16x64xf32>
    %cst_172 = arith.constant 4.471500e-02 : f32
    %406 = vector.broadcast %cst_172 : f32 to vector<16x64xf32>
    %407 = arith.mulf %406, %403 : vector<16x64xf32>
    %408 = arith.mulf %407, %403 : vector<16x64xf32>
    %409 = arith.mulf %408, %403 : vector<16x64xf32>
    %410 = arith.addf %403, %409 : vector<16x64xf32>
    %cst_173 = arith.constant 0.797884583 : f32
    %411 = vector.broadcast %cst_173 : f32 to vector<16x64xf32>
    %412 = arith.mulf %411, %410 : vector<16x64xf32>
    %413 = math.tanh %412 : vector<16x64xf32>
    %cst_174 = arith.constant 1.000000e+00 : f32
    %414 = vector.broadcast %cst_174 : f32 to vector<16x64xf32>
    %415 = arith.addf %414, %413 : vector<16x64xf32>
    %416 = arith.mulf %405, %415 : vector<16x64xf32>
    %c1400 = arith.constant 1400 : index
    %c0_175 = arith.constant 0 : index
    %417 = vector.load %arg2[%c1400, %c0_175] : memref<1584x128xf32, #tpu.memory_space<vmem>>, vector<64x32xf32>
    %cst_176 = arith.constant dense<0.000000e+00> : vector<16x32xf32>
    %418 = tpu.matmul %416, %417, %cst_176 {dimension_numbers = #tpu.dot_dimension_numbers<[1], [0], [0], [1], [0, 0, 1, 1], [], []>} : vector<16x64xf32>, vector<64x32xf32>, vector<16x32xf32> -> vector<16x32xf32>
    %c1464 = arith.constant 1464 : index
    %c0_177 = arith.constant 0 : index
    %419 = vector.load %arg2[%c1464, %c0_177] : memref<1584x128xf32, #tpu.memory_space<vmem>>, vector<1x32xf32>
    %420 = vector.broadcast %419 : vector<1x32xf32> to vector<16x32xf32>
    %421 = arith.addf %418, %420 : vector<16x32xf32>
    %422 = arith.addf %421, %398 : vector<16x32xf32>
    %cst_178 = arith.constant dense<0.000000e+00> : vector<16xf32>
    %423 = vector.multi_reduction <add>, %422, %cst_178 [1] : vector<16x32xf32> to vector<16xf32>
    %424 = vector.shape_cast %423 : vector<16xf32> to vector<16x1xf32>
    %cst_179 = arith.constant 3.200000e+01 : f32
    %425 = vector.broadcast %cst_179 : f32 to vector<16x1xf32>
    %426 = arith.divf %424, %425 : vector<16x1xf32>
    %427 = vector.broadcast %426 : vector<16x1xf32> to vector<16x32xf32>
    %428 = arith.subf %422, %427 : vector<16x32xf32>
    %429 = arith.mulf %428, %428 : vector<16x32xf32>
    %cst_180 = arith.constant dense<0.000000e+00> : vector<16xf32>
    %430 = vector.multi_reduction <add>, %429, %cst_180 [1] : vector<16x32xf32> to vector<16xf32>
    %431 = vector.shape_cast %430 : vector<16xf32> to vector<16x1xf32>
    %cst_181 = arith.constant 3.200000e+01 : f32
    %432 = vector.broadcast %cst_181 : f32 to vector<16x1xf32>
    %433 = arith.divf %431, %432 : vector<16x1xf32>
    %cst_182 = arith.constant 9.99999996E-13 : f32
    %434 = vector.broadcast %cst_182 : f32 to vector<16x1xf32>
    %435 = arith.addf %433, %434 : vector<16x1xf32>
    %436 = math.rsqrt %435 : vector<16x1xf32>
    %437 = vector.broadcast %436 : vector<16x1xf32> to vector<16x32xf32>
    %438 = arith.mulf %428, %437 : vector<16x32xf32>
    %c1472 = arith.constant 1472 : index
    %c0_183 = arith.constant 0 : index
    %439 = vector.load %arg2[%c1472, %c0_183] : memref<1584x128xf32, #tpu.memory_space<vmem>>, vector<1x32xf32>
    %440 = vector.broadcast %439 : vector<1x32xf32> to vector<16x32xf32>
    %441 = arith.mulf %438, %440 : vector<16x32xf32>
    %c1480 = arith.constant 1480 : index
    %c0_184 = arith.constant 0 : index
    %442 = vector.load %arg2[%c1480, %c0_184] : memref<1584x128xf32, #tpu.memory_space<vmem>>, vector<1x32xf32>
    %443 = vector.broadcast %442 : vector<1x32xf32> to vector<16x32xf32>
    %444 = arith.addf %441, %443 : vector<16x32xf32>
    %c1488 = arith.constant 1488 : index
    %c0_185 = arith.constant 0 : index
    %445 = vector.load %arg2[%c1488, %c0_185] : memref<1584x128xf32, #tpu.memory_space<vmem>>, vector<32x32xf32>
    %cst_186 = arith.constant dense<0.000000e+00> : vector<16x32xf32>
    %446 = tpu.matmul %444, %445, %cst_186 {dimension_numbers = #tpu.dot_dimension_numbers<[1], [0], [0], [1], [0, 0, 1, 1], [], []>} : vector<16x32xf32>, vector<32x32xf32>, vector<16x32xf32> -> vector<16x32xf32>
    %c1520 = arith.constant 1520 : index
    %c0_187 = arith.constant 0 : index
    %447 = vector.load %arg2[%c1520, %c0_187] : memref<1584x128xf32, #tpu.memory_space<vmem>>, vector<1x32xf32>
    %448 = vector.broadcast %447 : vector<1x32xf32> to vector<16x32xf32>
    %449 = arith.addf %446, %448 : vector<16x32xf32>
    %cst_188 = arith.constant 5.000000e-01 : f32
    %450 = vector.broadcast %cst_188 : f32 to vector<16x32xf32>
    %451 = arith.mulf %450, %449 : vector<16x32xf32>
    %cst_189 = arith.constant 4.471500e-02 : f32
    %452 = vector.broadcast %cst_189 : f32 to vector<16x32xf32>
    %453 = arith.mulf %452, %449 : vector<16x32xf32>
    %454 = arith.mulf %453, %449 : vector<16x32xf32>
    %455 = arith.mulf %454, %449 : vector<16x32xf32>
    %456 = arith.addf %449, %455 : vector<16x32xf32>
    %cst_190 = arith.constant 0.797884583 : f32
    %457 = vector.broadcast %cst_190 : f32 to vector<16x32xf32>
    %458 = arith.mulf %457, %456 : vector<16x32xf32>
    %459 = math.tanh %458 : vector<16x32xf32>
    %cst_191 = arith.constant 1.000000e+00 : f32
    %460 = vector.broadcast %cst_191 : f32 to vector<16x32xf32>
    %461 = arith.addf %460, %459 : vector<16x32xf32>
    %462 = arith.mulf %451, %461 : vector<16x32xf32>
    %cst_192 = arith.constant dense<0.000000e+00> : vector<16xf32>
    %463 = vector.multi_reduction <add>, %462, %cst_192 [1] : vector<16x32xf32> to vector<16xf32>
    %464 = vector.shape_cast %463 : vector<16xf32> to vector<16x1xf32>
    %cst_193 = arith.constant 3.200000e+01 : f32
    %465 = vector.broadcast %cst_193 : f32 to vector<16x1xf32>
    %466 = arith.divf %464, %465 : vector<16x1xf32>
    %467 = vector.broadcast %466 : vector<16x1xf32> to vector<16x32xf32>
    %468 = arith.subf %462, %467 : vector<16x32xf32>
    %469 = arith.mulf %468, %468 : vector<16x32xf32>
    %cst_194 = arith.constant dense<0.000000e+00> : vector<16xf32>
    %470 = vector.multi_reduction <add>, %469, %cst_194 [1] : vector<16x32xf32> to vector<16xf32>
    %471 = vector.shape_cast %470 : vector<16xf32> to vector<16x1xf32>
    %cst_195 = arith.constant 3.200000e+01 : f32
    %472 = vector.broadcast %cst_195 : f32 to vector<16x1xf32>
    %473 = arith.divf %471, %472 : vector<16x1xf32>
    %cst_196 = arith.constant 9.99999996E-13 : f32
    %474 = vector.broadcast %cst_196 : f32 to vector<16x1xf32>
    %475 = arith.addf %473, %474 : vector<16x1xf32>
    %476 = math.rsqrt %475 : vector<16x1xf32>
    %477 = vector.broadcast %476 : vector<16x1xf32> to vector<16x32xf32>
    %478 = arith.mulf %468, %477 : vector<16x32xf32>
    %c1528 = arith.constant 1528 : index
    %c0_197 = arith.constant 0 : index
    %479 = vector.load %arg2[%c1528, %c0_197] : memref<1584x128xf32, #tpu.memory_space<vmem>>, vector<1x32xf32>
    %480 = vector.broadcast %479 : vector<1x32xf32> to vector<16x32xf32>
    %481 = arith.mulf %478, %480 : vector<16x32xf32>
    %c1536 = arith.constant 1536 : index
    %c0_198 = arith.constant 0 : index
    %482 = vector.load %arg2[%c1536, %c0_198] : memref<1584x128xf32, #tpu.memory_space<vmem>>, vector<1x32xf32>
    %483 = vector.broadcast %482 : vector<1x32xf32> to vector<16x32xf32>
    %484 = arith.addf %481, %483 : vector<16x32xf32>
    %c1544 = arith.constant 1544 : index
    %c0_199 = arith.constant 0 : index
    %485 = vector.load %arg2[%c1544, %c0_199] : memref<1584x128xf32, #tpu.memory_space<vmem>>, vector<32x128xf32>
    %cst_200 = arith.constant dense<0.000000e+00> : vector<16x128xf32>
    %486 = tpu.matmul %484, %485, %cst_200 {dimension_numbers = #tpu.dot_dimension_numbers<[1], [0], [0], [1], [0, 0, 1, 1], [], []>} : vector<16x32xf32>, vector<32x128xf32>, vector<16x128xf32> -> vector<16x128xf32>
    %c1576 = arith.constant 1576 : index
    %c0_201 = arith.constant 0 : index
    %487 = vector.load %arg2[%c1576, %c0_201] : memref<1584x128xf32, #tpu.memory_space<vmem>>, vector<1x128xf32>
    %488 = vector.broadcast %487 : vector<1x128xf32> to vector<16x128xf32>
    %489 = arith.addf %486, %488 : vector<16x128xf32>
    %c0_202 = arith.constant 0 : index
    %c0_203 = arith.constant 0 : index
    %490 = vector.load %arg3[%c0_202, %c0_203] : memref<16x128xf32, #tpu.memory_space<vmem>>, vector<16x128xf32>
    tpu.vector_store %arg3[%c0_202, %c0_203], %489 {strides = array<i32>} : memref<16x128xf32, #tpu.memory_space<vmem>>, vector<16x128xf32>,
    return
  }
}

</mosaic_0001>

<llo_original>
// kernel: bert_mlm_forward.1
$region0: #{bert_mlm_forward.1}
  #allocation0 [shape = 'u32[]', space=smem, size = 0x4, offset = 0x4, fixed_abs, tag = 'smem constant byte address 0x4 - core index']
  #allocation1 [shape = 'u32[144,128]{1,0:T(1,128)}', space=vmem, size = 0x12000, scoped, tag = 'internal scratch']
  %s0 = inlined_call_operand.vmem [shape: s32[16,1], index: 0, kind: input, shape index: {}]
  %s1 = inlined_call_operand.vmem [shape: f32[1,16], index: 1, kind: input, shape index: {}]
  %s2 = inlined_call_operand.hbm [shape: f32[1584,128], index: 2, kind: input, shape index: {}]
  %s3 = inlined_call_operand.hbm [shape: f32[16,128], index: 3, kind: output, shape index: {}]
  %s4 = sld [smem:[#allocation0]]
  $region26: #{bert_mlm_forward.1} parent=0
    _
  %s6 = ssub.s32 1, %s4
  %s7 = scalar_select 0, %s6, %s4
  $region1: #{bert_mlm_forward.1} parent=0
    #allocation2 [shape = 'u8[811008]{0}', space=vmem, size = 0xc6000, scoped, tag = 'input window, operand 2, single buffered']
    #allocation3 [shape = 's32[1]{0}', space=sflag, size = 0x4, scoped, tag = 'scoped memory for bert_mlm_forward.1']
    #allocation4 [shape = 's32[1]{0}', space=sflag, size = 0x4, scoped, tag = 'scoped memory for bert_mlm_forward.1']
    #allocation5 [shape = 'u8[8192]{0}', space=vmem, size = 0x2000, scoped, tag = 'output window, operand 0, single buffered']
    %8 = vsyncpa [#allocation3], 0
    %9 = vsyncpa [#allocation4], 0
    // Predicated region
    $region2: #{bert_mlm_forward.1} parent=1 // pred_check
      _
    $region3: #{bert_mlm_forward.1} parent=1 // pred_check_branch
      %11 = sbr.rel (0) target = $region5
    $region4: #{bert_mlm_forward.1} parent=1 // pred_region
      _
    $region5: #{bert_mlm_forward.1} parent=1 // pred_fallthru
      _
    // Predicated region
    $region6: #{bert_mlm_forward.1} parent=1 // pred_check
      _
    $region7: #{bert_mlm_forward.1} parent=1 // pred_check_branch
      %13 = sbr.rel (0) target = $region9
    $region8: #{bert_mlm_forward.1} parent=1 // pred_region
      _
    $region9: #{bert_mlm_forward.1} parent=1 // pred_fallthru
      _
    // Predicated region
    $region10: #{bert_mlm_forward.1} parent=1 // pred_check
      _
    $region11: #{bert_mlm_forward.1} parent=1 // pred_check_branch
      %15 = sbr.rel (0) target = $region13
    $region12: #{bert_mlm_forward.1} parent=1 // pred_region
      %s17 = ssub.s32 25344, 25344
      %18 = vsyncadd [#allocation3], %s17
      %s19 = sshll.u32 [#allocation2], 4
      %s20 = int_to_ptr.vmem [resolvable:$true] %s19
      %25 = dma.hbm_to_vmem [thread:$0]  %s2, 25344, %s20, [#allocation3], 128, 128, 8
    $region13: #{bert_mlm_forward.1} parent=1 // pred_fallthru
      _
    // Predicated region
    $region14: #{bert_mlm_forward.1} parent=1 // pred_check
      _
    $region15: #{bert_mlm_forward.1} parent=1 // pred_check_branch
      %27 = sbr.rel (0) target = $region17
    $region16: #{bert_mlm_forward.1} parent=1 // pred_region
      %28 = dma.done [#allocation3], 25344
    $region17: #{bert_mlm_forward.1} parent=1 // pred_fallthru
      _
    %v29 = vld [vmem:[%s0] sm:$0xff]
    %v30 = vld [vmem:[%s0 + $0x8] sm:$0xff]
    %v31 = vlaneseq
    %v32 = vand.u32 %v31, 127
    %v33 = vadd.s32 %v32, 128
    %v34 = vlaneseq
    %v35 = vshrl.u32 %v34, 7
    %v36 = vadd.s32 %v35, 8
    %v37 = vand.u32 %v35, 7
    %v38 = vand.u32 %v36, 7
    %39 = vset.pattern.permute.xlu0 0
    %40 = vperm.xlu0 %39, %v29
    %v41 = vpop.permute.xlu0 %40
    %42 = vset.pattern.permute.xlu0 0
    %43 = vperm.xlu0 %42, %v30
    %v44 = vpop.permute.xlu0 %43
    %vm45 = vcmp.eq.s32.totalorder %v32, %v41
    %vm46 = vcmp.eq.s32.totalorder %v33, %v41
    %vm47 = vcmp.eq.s32.totalorder %v32, %v44
    %vm48 = vcmp.eq.s32.totalorder %v33, %v44
    %v49 = vsel %vm45, 1, 0
    %v50 = vsel %vm46, 1, 0
    %v51 = vsel %vm47, 1, 0
    %v52 = vsel %vm48, 1, 0
    %v53 = vcvt.s32.f32 %v49
    %v54 = vcvt.s32.f32 %v50
    %v55 = vcvt.s32.f32 %v51
    %v56 = vcvt.s32.f32 %v52
    %v57 = vsub.s32 %v32, 128
    %vm58 = vcmp.eq.s32.totalorder %v57, %v37
    %vm59 = vcmp.eq.s32.totalorder %v32, %v37
    %vm60 = vcmp.eq.s32.totalorder %v57, %v38
    %vm61 = vcmp.eq.s32.totalorder %v32, %v38
    %v62 = vsel %vm58, 1, 0
    %v63 = vsel %vm59, 1, 0
    %v64 = vsel %vm60, 1, 0
    %v65 = vsel %vm61, 1, 0
    %v66 = vcvt.s32.f32 %v62
    %v67 = vcvt.s32.f32 %v63
    %v68 = vcvt.s32.f32 %v64
    %v69 = vcvt.s32.f32 %v65
    %v70 = vadd.f32 %v53, %v66
    %v71 = vadd.f32 %v54, %v67
    %v72 = vadd.f32 %v55, %v68
    %v73 = vadd.f32 %v56, %v69
    %v74 = vld [vmem:[#allocation2] sm:$0xff]
    %v75 = vld [vmem:[#allocation2 + $0x8] sm:$0xff]
    %v76 = vld [vmem:[#allocation2 + $0x10] sm:$0xff]
    %v77 = vld [vmem:[#allocation2 + $0x18] sm:$0xff]
    %v78 = vld [vmem:[#allocation2 + $0x20] sm:$0xff]
    %v79 = vld [vmem:[#allocation2 + $0x28] sm:$0xff]
    %v80 = vld [vmem:[#allocation2 + $0x30] sm:$0xff]
    %v81 = vld [vmem:[#allocation2 + $0x38] sm:$0xff]
    %v82 = vld [vmem:[#allocation2 + $0x40] sm:$0xff]
    %v83 = vld [vmem:[#allocation2 + $0x48] sm:$0xff]
    %v84 = vld [vmem:[#allocation2 + $0x50] sm:$0xff]
    %v85 = vld [vmem:[#allocation2 + $0x58] sm:$0xff]
    %v86 = vld [vmem:[#allocation2 + $0x60] sm:$0xff]
    %v87 = vld [vmem:[#allocation2 + $0x68] sm:$0xff]
    %v88 = vld [vmem:[#allocation2 + $0x70] sm:$0xff]
    %v89 = vld [vmem:[#allocation2 + $0x78] sm:$0xff]
    %v90 = vld [vmem:[#allocation2 + $0x80] sm:$0xff]
    %v91 = vld [vmem:[#allocation2 + $0x88] sm:$0xff]
    %vm92 = vcmask 130048
    %v94 = vsel %vm92, %v71, 0
    %v97 = vsel %vm92, %v73, 0
    %99 = vmatprep.subr.mxu0 0.0
    %100 = vmatpush1.msra.mxu0 %v74
    %101 = vmatprep.subr.mxu0 0.0
    %102 = vmatpush1.msra.mxu0 %v75
    %103 = vmatprep.subr.mxu0 0.0
    %104 = vmatpush1.msra.mxu0 %v76
    %105 = vmatprep.subr.mxu0 0.0
    %106 = vmatpush1.msra.mxu0 %v77
    %107 = vmatprep.subr.mxu0 0.0
    %108 = vmatpush1.msra.mxu0 %v78
    %109 = vmatprep.subr.mxu0 0.0
    %110 = vmatpush1.msra.mxu0 %v79
    %111 = vmatprep.subr.mxu0 0.0
    %112 = vmatpush1.msra.mxu0 %v80
    %113 = vmatprep.subr.mxu0 0.0
    %114 = vmatpush1.msra.mxu0 %v81
    %115 = vmatprep.subr.mxu0 0.0
    %116 = vmatpush1.msra.mxu0 %v82
    %117 = vmatprep.subr.mxu0 0.0
    %118 = vmatpush1.msra.mxu0 %v83
    %119 = vmatprep.subr.mxu0 0.0
    %120 = vmatpush1.msra.mxu0 %v84
    %121 = vmatprep.subr.mxu0 0.0
    %122 = vmatpush1.msra.mxu0 %v85
    %123 = vmatprep.subr.mxu0 0.0
    %124 = vmatpush1.msra.mxu0 %v86
    %125 = vmatprep.subr.mxu0 0.0
    %126 = vmatpush1.msra.mxu0 %v87
    %127 = vmatprep.subr.mxu0 0.0
    %128 = vmatpush1.msra.mxu0 %v88
    %129 = vmatprep.subr.mxu0 0.0
    %130 = vmatpush1.msra.mxu0 %v89
    %131 = vmatprep.subr.mxu0 0.0
    %132 = vmatpush1.msra.mxu0 %v90
    %133 = vmatprep.subr.mxu0 0.0
    %134 = vmatpush1.msra.mxu0 %v91
    %135 = vmatprep.subr.mxu0 0.0
    %136 = vmatpush1.msra.mxu0 0.0
    %137 = vmatprep.subr.mxu0 0.0
    %138 = vmatpush1.msra.mxu0 0.0
    %139 = vmatprep.subr.mxu0 0.0
    %140 = vmatpush1.msra.mxu0 0.0
    %141 = vmatprep.subr.mxu0 0.0
    %142 = vmatpush1.msra.mxu0 0.0
    %143 = vmatprep.subr.mxu0 0.0
    %144 = vmatpush1.msra.mxu0 0.0
    %145 = vmatprep.subr.mxu0 0.0
    %146 = vmatpush1.msra.mxu0 0.0
    %147 = vmatprep.subr.mxu0 0.0
    %148 = vmatpush1.msra.mxu0 0.0
    %149 = vmatprep.subr.mxu0 0.0
    %150 = vmatpush1.msra.mxu0 0.0
    %151 = vmatprep.subr.mxu0 0.0
    %152 = vmatpush1.msra.mxu0 0.0
    %153 = vmatprep.subr.mxu0 0.0
    %154 = vmatpush1.msra.mxu0 0.0
    %155 = vmatprep.subr.mxu0 0.0
    %156 = vmatpush1.msra.mxu0 0.0
    %157 = vmatprep.subr.mxu0 0.0
    %158 = vmatpush1.msra.mxu0 0.0
    %159 = vmatprep.subr.mxu0 0.0
    %160 = vmatpush1.msra.mxu0 0.0
    %161 = vmatprep.subr.mxu0 0.0
    %162 = vmatpush1.msra.mxu0 0.0
    %163 = vmatprep.mubr.f32.mxu0 %v94
    %164 = vmatmul.mubr.f32.gmra.mrb[0].mxu0 %v70
    %v165 = vpop.f32.mrb[0].mxu0
    %v166 = vadd.f32 0.0, %v165
    %v167 = vpop.f32.mrb[0].mxu0
    %168 = vmatprep.mubr.f32.mxu0 %v97
    %169 = vmatmul.mubr.f32.gmra.mrb[0].mxu0 %v72
    %v170 = vpop.f32.mrb[0].mxu0
    %v171 = vadd.f32 0.0, %v170
    %v172 = vpop.f32.mrb[0].mxu0
    %173 = vdwg.mxu0
    %vm174 = vcmask 261120
    %v175 = vsel %vm174, %v166, 0.0
    %176 = vadd.xlane.f32.xlu0 %v175
    %v177 = vpop.xlane.xlu0 %176
    %v178 = vsel %vm174, %v171, 0.0
    %179 = vadd.xlane.f32.xlu0 %v178
    %v180 = vpop.xlane.xlu0 %179
    %v181 = vrcp.pop 32.0
    %v182 = vmul.f32 %v177, %v181
    %v183 = vmul.f32 %v180, %v181
    %v184 = vsub.f32 %v166, %v182
    %v185 = vsub.f32 %v171, %v183
    %v186 = vmul.f32 %v184, %v184
    %v187 = vmul.f32 %v185, %v185
    %v188 = vsel %vm174, %v186, 0.0
    %189 = vadd.xlane.f32.xlu0 %v188
    %v190 = vpop.xlane.xlu0 %189
    %v191 = vsel %vm174, %v187, 0.0
    %192 = vadd.xlane.f32.xlu0 %v191
    %v193 = vpop.xlane.xlu0 %192
    %v194 = vmul.f32 %v190, %v181
    %v195 = vmul.f32 %v193, %v181
    %v196 = vadd.f32 %v194, 1e-12
    %v197 = vadd.f32 %v195, 1e-12
    %v198 = vrsqrt.pop %v196
    %v199 = vrsqrt.pop %v197
    %v200 = vmul.f32 %v184, %v198
    %v201 = vmul.f32 %v185, %v199
    %v202 = vld [vmem:[#allocation2 + $0x90] sm:$0x1]
    %v203 = vlaneseq
    %v204 = vshrl.u32 %v203, 7
    %v205 = vsub.s32 0, %v204
    %v206 = vrot.slane %v202, %v205
    %v207 = vmul.f32 %v200, %v206
    %v208 = vmul.f32 %v201, %v206
    %v209 = vld [vmem:[#allocation2 + $0x98] sm:$0x1]
    %v210 = vlaneseq
    %v211 = vshrl.u32 %v210, 7
    %v212 = vsub.s32 0, %v211
    %v213 = vrot.slane %v209, %v212
    %v214 = vadd.f32 %v207, %v213
    %v215 = vadd.f32 %v208, %v213
    %v216 = vshra.s32 %v35, 3
    %v217 = vshra.s32 %v36, 3
    %v218 = vshra.s32 %v32, 3
    %vm219 = vcmp.eq.s32.totalorder %v216, %v218
    %vm220 = vcmp.eq.s32.totalorder %v217, %v218
    %v221 = vsel %vm219, 1, 0
    %v222 = vsel %vm220, 1, 0
    %v223 = vcvt.s32.f32 %v221
    %v224 = vcvt.s32.f32 %v222
    %v225 = vld [vmem:[%s1] sm:$0x1]
    %v227 = vlaneseq
    %v228 = vshrl.u32 %v227, 7
    %v229 = vsub.s32 0, %v228
    %v230 = vrot.slane %v225, %v229
    %v232 = vmul.f32 %v223, %v230
    %v233 = vmul.f32 %v224, %v230
    %v234 = vsub.f32 %v232, 1.0
    %v235 = vsub.f32 %v233, 1.0
    %v236 = vmul.f32 %v234, 30000.0
    %v237 = vmul.f32 %v235, 30000.0
    %v238 = vld [vmem:[#allocation2 + $0x2a0] sm:$0x1]
    %v239 = vld [vmem:[#allocation2 + $0xa0] sm:$0xff]
    %v240 = vld [vmem:[#allocation2 + $0xa8] sm:$0xff]
    %v241 = vld [vmem:[#allocation2 + $0xb0] sm:$0xff]
    %v242 = vld [vmem:[#allocation2 + $0xb8] sm:$0xff]
    %v243 = vld [vmem:[#allocation2 + $0x108] sm:$0x1]
    %v244 = vlaneseq
    %v245 = vshrl.u32 %v244, 7
    %v246 = vsub.s32 0, %v245
    %v247 = vrot.slane %v243, %v246
    %v249 = vsel %vm174, %v214, 0
    %v252 = vsel %vm174, %v215, 0
    %254 = vmatprep.subr.mxu0 0.0
    %255 = vmatpush1.msra.mxu0 %v239
    %256 = vmatprep.subr.mxu0 0.0
    %257 = vmatpush1.msra.mxu0 %v240
    %258 = vmatprep.subr.mxu0 0.0
    %259 = vmatpush1.msra.mxu0 %v241
    %260 = vmatprep.subr.mxu0 0.0
    %261 = vmatpush1.msra.mxu0 %v242
    %262 = vmatprep.subr.mxu0 0.0
    %263 = vmatpush1.msra.mxu0 0.0
    %264 = vmatprep.subr.mxu0 0.0
    %265 = vmatpush1.msra.mxu0 0.0
    %266 = vmatprep.subr.mxu0 0.0
    %267 = vmatpush1.msra.mxu0 0.0
    %268 = vmatprep.subr.mxu0 0.0
    %269 = vmatpush1.msra.mxu0 0.0
    %270 = vmatprep.subr.mxu0 0.0
    %271 = vmatpush1.msra.mxu0 0.0
    %272 = vmatprep.subr.mxu0 0.0
    %273 = vmatpush1.msra.mxu0 0.0
    %274 = vmatprep.subr.mxu0 0.0
    %275 = vmatpush1.msra.mxu0 0.0
    %276 = vmatprep.subr.mxu0 0.0
    %277 = vmatpush1.msra.mxu0 0.0
    %278 = vmatprep.subr.mxu0 0.0
    %279 = vmatpush1.msra.mxu0 0.0
    %280 = vmatprep.subr.mxu0 0.0
    %281 = vmatpush1.msra.mxu0 0.0
    %282 = vmatprep.subr.mxu0 0.0
    %283 = vmatpush1.msra.mxu0 0.0
    %284 = vmatprep.subr.mxu0 0.0
    %285 = vmatpush1.msra.mxu0 0.0
    %286 = vmatprep.subr.mxu0 0.0
    %287 = vmatpush1.msra.mxu0 0.0
    %288 = vmatprep.subr.mxu0 0.0
    %289 = vmatpush1.msra.mxu0 0.0
    %290 = vmatprep.subr.mxu0 0.0
    %291 = vmatpush1.msra.mxu0 0.0
    %292 = vmatprep.subr.mxu0 0.0
    %293 = vmatpush1.msra.mxu0 0.0
    %294 = vmatprep.subr.mxu0 0.0
    %295 = vmatpush1.msra.mxu0 0.0
    %296 = vmatprep.subr.mxu0 0.0
    %297 = vmatpush1.msra.mxu0 0.0
    %298 = vmatprep.subr.mxu0 0.0
    %299 = vmatpush1.msra.mxu0 0.0
    %300 = vmatprep.subr.mxu0 0.0
    %301 = vmatpush1.msra.mxu0 0.0
    %302 = vmatprep.subr.mxu0 0.0
    %303 = vmatpush1.msra.mxu0 0.0
    %304 = vmatprep.subr.mxu0 0.0
    %305 = vmatpush1.msra.mxu0 0.0
    %306 = vmatprep.subr.mxu0 0.0
    %307 = vmatpush1.msra.mxu0 0.0
    %308 = vmatprep.subr.mxu0 0.0
    %309 = vmatpush1.msra.mxu0 0.0
    %310 = vmatprep.subr.mxu0 0.0
    %311 = vmatpush1.msra.mxu0 0.0
    %312 = vmatprep.subr.mxu0 0.0
    %313 = vmatpush1.msra.mxu0 0.0
    %314 = vmatprep.subr.mxu0 0.0
    %315 = vmatpush1.msra.mxu0 0.0
    %316 = vmatprep.subr.mxu0 0.0
    %317 = vmatpush1.msra.mxu0 0.0
    %318 = vmatprep.mubr.f32.mxu0 0.0
    %319 = vmatmul.mubr.f32.gmra.mrb[0].mxu0 %v249
    %v320 = vpop.f32.mrb[0].mxu0
    %v321 = vadd.f32 %v247, %v320
    %v322 = vpop.f32.mrb[0].mxu0
    %323 = vmatprep.mubr.f32.mxu0 0.0
    %324 = vmatmul.mubr.f32.gmra.mrb[0].mxu0 %v252
    %v325 = vpop.f32.mrb[0].mxu0
    %v326 = vadd.f32 %v247, %v325
    %v327 = vpop.f32.mrb[0].mxu0
    %328 = vdwg.mxu0
    %v329 = vld [vmem:[#allocation2 + $0xc0] sm:$0xff]
    %v330 = vld [vmem:[#allocation2 + $0xc8] sm:$0xff]
    %v331 = vld [vmem:[#allocation2 + $0xd0] sm:$0xff]
    %v332 = vld [vmem:[#allocation2 + $0xd8] sm:$0xff]
    %v333 = vld [vmem:[#allocation2 + $0x110] sm:$0x1]
    %v334 = vlaneseq
    %v335 = vshrl.u32 %v334, 7
    %v336 = vsub.s32 0, %v335
    %v337 = vrot.slane %v333, %v336
    %338 = vmatprep.subr.mxu0 0.0
    %339 = vmatpush1.msra.mxu0 %v329
    %340 = vmatprep.subr.mxu0 0.0
    %341 = vmatpush1.msra.mxu0 %v330
    %342 = vmatprep.subr.mxu0 0.0
    %343 = vmatpush1.msra.mxu0 %v331
    %344 = vmatprep.subr.mxu0 0.0
    %345 = vmatpush1.msra.mxu0 %v332
    %346 = vmatprep.subr.mxu0 0.0
    %347 = vmatpush1.msra.mxu0 0.0
    %348 = vmatprep.subr.mxu0 0.0
    %349 = vmatpush1.msra.mxu0 0.0
    %350 = vmatprep.subr.mxu0 0.0
    %351 = vmatpush1.msra.mxu0 0.0
    %352 = vmatprep.subr.mxu0 0.0
    %353 = vmatpush1.msra.mxu0 0.0
    %354 = vmatprep.subr.mxu0 0.0
    %355 = vmatpush1.msra.mxu0 0.0
    %356 = vmatprep.subr.mxu0 0.0
    %357 = vmatpush1.msra.mxu0 0.0
    %358 = vmatprep.subr.mxu0 0.0
    %359 = vmatpush1.msra.mxu0 0.0
    %360 = vmatprep.subr.mxu0 0.0
    %361 = vmatpush1.msra.mxu0 0.0
    %362 = vmatprep.subr.mxu0 0.0
    %363 = vmatpush1.msra.mxu0 0.0
    %364 = vmatprep.subr.mxu0 0.0
    %365 = vmatpush1.msra.mxu0 0.0
    %366 = vmatprep.subr.mxu0 0.0
    %367 = vmatpush1.msra.mxu0 0.0
    %368 = vmatprep.subr.mxu0 0.0
    %369 = vmatpush1.msra.mxu0 0.0
    %370 = vmatprep.subr.mxu0 0.0
    %371 = vmatpush1.msra.mxu0 0.0
    %372 = vmatprep.subr.mxu0 0.0
    %373 = vmatpush1.msra.mxu0 0.0
    %374 = vmatprep.subr.mxu0 0.0
    %375 = vmatpush1.msra.mxu0 0.0
    %376 = vmatprep.subr.mxu0 0.0
    %377 = vmatpush1.msra.mxu0 0.0
    %378 = vmatprep.subr.mxu0 0.0
    %379 = vmatpush1.msra.mxu0 0.0
    %380 = vmatprep.subr.mxu0 0.0
    %381 = vmatpush1.msra.mxu0 0.0
    %382 = vmatprep.subr.mxu0 0.0
    %383 = vmatpush1.msra.mxu0 0.0
    %384 = vmatprep.subr.mxu0 0.0
    %385 = vmatpush1.msra.mxu0 0.0
    %386 = vmatprep.subr.mxu0 0.0
    %387 = vmatpush1.msra.mxu0 0.0
    %388 = vmatprep.subr.mxu0 0.0
    %389 = vmatpush1.msra.mxu0 0.0
    %390 = vmatprep.subr.mxu0 0.0
    %391 = vmatpush1.msra.mxu0 0.0
    %392 = vmatprep.subr.mxu0 0.0
    %393 = vmatpush1.msra.mxu0 0.0
    %394 = vmatprep.subr.mxu0 0.0
    %395 = vmatpush1.msra.mxu0 0.0
    %396 = vmatprep.subr.mxu0 0.0
    %397 = vmatpush1.msra.mxu0 0.0
    %398 = vmatprep.subr.mxu0 0.0
    %399 = vmatpush1.msra.mxu0 0.0
    %400 = vmatprep.subr.mxu0 0.0
    %401 = vmatpush1.msra.mxu0 0.0
    %402 = vmatprep.mubr.f32.mxu0 0.0
    %403 = vmatmul.mubr.f32.gmra.mrb[0].mxu0 %v249
    %v404 = vpop.f32.mrb[0].mxu0
    %v405 = vadd.f32 %v337, %v404
    %v406 = vpop.f32.mrb[0].mxu0
    %407 = vmatprep.mubr.f32.mxu0 0.0
    %408 = vmatmul.mubr.f32.gmra.mrb[0].mxu0 %v252
    %v409 = vpop.f32.mrb[0].mxu0
    %v410 = vadd.f32 %v337, %v409
    %v411 = vpop.f32.mrb[0].mxu0
    %412 = vdwg.mxu0
    %v413 = vld [vmem:[#allocation2 + $0xe0] sm:$0xff]
    %v414 = vld [vmem:[#allocation2 + $0xe8] sm:$0xff]
    %v415 = vld [vmem:[#allocation2 + $0xf0] sm:$0xff]
    %v416 = vld [vmem:[#allocation2 + $0xf8] sm:$0xff]
    %v417 = vld [vmem:[#allocation2 + $0x118] sm:$0x1]
    %v418 = vlaneseq
    %v419 = vshrl.u32 %v418, 7
    %v420 = vsub.s32 0, %v419
    %v421 = vrot.slane %v417, %v420
    %422 = vmatprep.subr.mxu0 0.0
    %423 = vmatpush1.msra.mxu0 %v413
    %424 = vmatprep.subr.mxu0 0.0
    %425 = vmatpush1.msra.mxu0 %v414
    %426 = vmatprep.subr.mxu0 0.0
    %427 = vmatpush1.msra.mxu0 %v415
    %428 = vmatprep.subr.mxu0 0.0
    %429 = vmatpush1.msra.mxu0 %v416
    %430 = vmatprep.subr.mxu0 0.0
    %431 = vmatpush1.msra.mxu0 0.0
    %432 = vmatprep.subr.mxu0 0.0
    %433 = vmatpush1.msra.mxu0 0.0
    %434 = vmatprep.subr.mxu0 0.0
    %435 = vmatpush1.msra.mxu0 0.0
    %436 = vmatprep.subr.mxu0 0.0
    %437 = vmatpush1.msra.mxu0 0.0
    %438 = vmatprep.subr.mxu0 0.0
    %439 = vmatpush1.msra.mxu0 0.0
    %440 = vmatprep.subr.mxu0 0.0
    %441 = vmatpush1.msra.mxu0 0.0
    %442 = vmatprep.subr.mxu0 0.0
    %443 = vmatpush1.msra.mxu0 0.0
    %444 = vmatprep.subr.mxu0 0.0
    %445 = vmatpush1.msra.mxu0 0.0
    %446 = vmatprep.subr.mxu0 0.0
    %447 = vmatpush1.msra.mxu0 0.0
    %448 = vmatprep.subr.mxu0 0.0
    %449 = vmatpush1.msra.mxu0 0.0
    %450 = vmatprep.subr.mxu0 0.0
    %451 = vmatpush1.msra.mxu0 0.0
    %452 = vmatprep.subr.mxu0 0.0
    %453 = vmatpush1.msra.mxu0 0.0
    %454 = vmatprep.subr.mxu0 0.0
    %455 = vmatpush1.msra.mxu0 0.0
    %456 = vmatprep.subr.mxu0 0.0
    %457 = vmatpush1.msra.mxu0 0.0
    %458 = vmatprep.subr.mxu0 0.0
    %459 = vmatpush1.msra.mxu0 0.0
    %460 = vmatprep.subr.mxu0 0.0
    %461 = vmatpush1.msra.mxu0 0.0
    %462 = vmatprep.subr.mxu0 0.0
    %463 = vmatpush1.msra.mxu0 0.0
    %464 = vmatprep.subr.mxu0 0.0
    %465 = vmatpush1.msra.mxu0 0.0
    %466 = vmatprep.subr.mxu0 0.0
    %467 = vmatpush1.msra.mxu0 0.0
    %468 = vmatprep.subr.mxu0 0.0
    %469 = vmatpush1.msra.mxu0 0.0
    %470 = vmatprep.subr.mxu0 0.0
    %471 = vmatpush1.msra.mxu0 0.0
    %472 = vmatprep.subr.mxu0 0.0
    %473 = vmatpush1.msra.mxu0 0.0
    %474 = vmatprep.subr.mxu0 0.0
    %475 = vmatpush1.msra.mxu0 0.0
    %476 = vmatprep.subr.mxu0 0.0
    %477 = vmatpush1.msra.mxu0 0.0
    %478 = vmatprep.subr.mxu0 0.0
    %479 = vmatpush1.msra.mxu0 0.0
    %480 = vmatprep.subr.mxu0 0.0
    %481 = vmatpush1.msra.mxu0 0.0
    %482 = vmatprep.subr.mxu0 0.0
    %483 = vmatpush1.msra.mxu0 0.0
    %484 = vmatprep.subr.mxu0 0.0
    %485 = vmatpush1.msra.mxu0 0.0
    %486 = vmatprep.mubr.f32.mxu0 0.0
    %487 = vmatmul.mubr.f32.gmra.mrb[0].mxu0 %v249
    %v488 = vpop.f32.mrb[0].mxu0
    %v489 = vadd.f32 %v421, %v488
    %v490 = vpop.f32.mrb[0].mxu0
    %491 = vmatprep.mubr.f32.mxu0 0.0
    %492 = vmatmul.mubr.f32.gmra.mrb[0].mxu0 %v252
    %v493 = vpop.f32.mrb[0].mxu0
    %v494 = vadd.f32 %v421, %v493
    %v495 = vpop.f32.mrb[0].mxu0
    %496 = vdwg.mxu0
    %vm497 = vcmask 64512
    %v499 = vsel %vm497, %v321, 0
    %v502 = vsel %vm497, %v326, 0
    %v505 = vsel %vm497, %v405, 0
    %v508 = vsel %vm497, %v410, 0
    %510 = vmatprep.subr.mxu0 0.0
    %511 = vmatpush1.xpose.msra.mxu0 %v505
    %512 = vmatprep.subr.mxu0 0.0
    %513 = vmatpush1.xpose.msra.mxu0 %v508
    %514 = vmatprep.subr.mxu0 0.0
    %515 = vmatpush1.xpose.msra.mxu0 0.0
    %516 = vmatprep.subr.mxu0 0.0
    %517 = vmatpush1.xpose.msra.mxu0 0.0
    %518 = vmatprep.subr.mxu0 0.0
    %519 = vmatpush1.xpose.msra.mxu0 0.0
    %520 = vmatprep.subr.mxu0 0.0
    %521 = vmatpush1.xpose.msra.mxu0 0.0
    %522 = vmatprep.subr.mxu0 0.0
    %523 = vmatpush1.xpose.msra.mxu0 0.0
    %524 = vmatprep.subr.mxu0 0.0
    %525 = vmatpush1.xpose.msra.mxu0 0.0
    %526 = vmatprep.subr.mxu0 0.0
    %527 = vmatpush1.xpose.msra.mxu0 0.0
    %528 = vmatprep.subr.mxu0 0.0
    %529 = vmatpush1.xpose.msra.mxu0 0.0
    %530 = vmatprep.subr.mxu0 0.0
    %531 = vmatpush1.xpose.msra.mxu0 0.0
    %532 = vmatprep.subr.mxu0 0.0
    %533 = vmatpush1.xpose.msra.mxu0 0.0
    %534 = vmatprep.subr.mxu0 0.0
    %535 = vmatpush1.xpose.msra.mxu0 0.0
    %536 = vmatprep.subr.mxu0 0.0
    %537 = vmatpush1.xpose.msra.mxu0 0.0
    %538 = vmatprep.subr.mxu0 0.0
    %539 = vmatpush1.xpose.msra.mxu0 0.0
    %540 = vmatprep.subr.mxu0 0.0
    %541 = vmatpush1.xpose.msra.mxu0 0.0
    %542 = vmatprep.subr.mxu0 0.0
    %543 = vmatpush1.xpose.msra.mxu0 0.0
    %544 = vmatprep.subr.mxu0 0.0
    %545 = vmatpush1.xpose.msra.mxu0 0.0
    %546 = vmatprep.subr.mxu0 0.0
    %547 = vmatpush1.xpose.msra.mxu0 0.0
    %548 = vmatprep.subr.mxu0 0.0
    %549 = vmatpush1.xpose.msra.mxu0 0.0
    %550 = vmatprep.subr.mxu0 0.0
    %551 = vmatpush1.xpose.msra.mxu0 0.0
    %552 = vmatprep.subr.mxu0 0.0
    %553 = vmatpush1.xpose.msra.mxu0 0.0
    %554 = vmatprep.subr.mxu0 0.0
    %555 = vmatpush1.xpose.msra.mxu0 0.0
    %556 = vmatprep.subr.mxu0 0.0
    %557 = vmatpush1.xpose.msra.mxu0 0.0
    %558 = vmatprep.subr.mxu0 0.0
    %559 = vmatpush1.xpose.msra.mxu0 0.0
    %560 = vmatprep.subr.mxu0 0.0
    %561 = vmatpush1.xpose.msra.mxu0 0.0
    %562 = vmatprep.subr.mxu0 0.0
    %563 = vmatpush1.xpose.msra.mxu0 0.0
    %564 = vmatprep.subr.mxu0 0.0
    %565 = vmatpush1.xpose.msra.mxu0 0.0
    %566 = vmatprep.subr.mxu0 0.0
    %567 = vmatpush1.xpose.msra.mxu0 0.0
    %568 = vmatprep.subr.mxu0 0.0
    %569 = vmatpush1.xpose.msra.mxu0 0.0
    %570 = vmatprep.subr.mxu0 0.0
    %571 = vmatpush1.xpose.msra.mxu0 0.0
    %572 = vmatprep.subr.mxu0 0.0
    %573 = vmatpush1.xpose.msra.mxu0 0.0
    %574 = vmatprep.mubr.f32.mxu0 0.0
    %575 = vmatmul.mubr.f32.gmra.mrb[0].mxu0 %v499
    %v576 = vpop.f32.mrb[0].mxu0
    %v577 = vadd.f32 %v236, %v576
    %v578 = vpop.f32.mrb[0].mxu0
    %579 = vmatprep.mubr.f32.mxu0 0.0
    %580 = vmatmul.mubr.f32.gmra.mrb[0].mxu0 %v502
    %v581 = vpop.f32.mrb[0].mxu0
    %v582 = vadd.f32 %v237, %v581
    %v583 = vpop.f32.mrb[0].mxu0
    %584 = vdwg.mxu0
    %v585 = vsel %vm92, %v577, -inf
    %586 = vmax.xlane.f32.xlu0 %v585
    %v587 = vpop.xlane.xlu0 %586
    %v588 = vsel %vm92, %v582, -inf
    %589 = vmax.xlane.f32.xlu0 %v588
    %v590 = vpop.xlane.xlu0 %589
    %v591 = vsub.f32 %v577, %v587
    %v592 = vsub.f32 %v582, %v590
    %v593 = vmul.f32 %v591, 1.442695
    %v594 = vpow.pop %v593
    %v595 = vmul.f32 %v592, 1.442695
    %v596 = vpow.pop %v595
    %v597 = vsel %vm92, %v594, 0.0
    %598 = vadd.xlane.f32.xlu0 %v597
    %v599 = vpop.xlane.xlu0 %598
    %v600 = vsel %vm92, %v596, 0.0
    %601 = vadd.xlane.f32.xlu0 %v600
    %v602 = vpop.xlane.xlu0 %601
    %v603 = vrcp.pop %v599
    %v604 = vrcp.pop %v602
    %v605 = vmul.f32 %v594, %v603
    %v606 = vmul.f32 %v596, %v604
    %v608 = vsel %vm92, %v605, 0
    %v611 = vsel %vm92, %v606, 0
    %613 = vmatprep.subr.mxu0 0.0
    %614 = vmatpush1.msra.mxu0 %v489
    %615 = vmatprep.subr.mxu0 0.0
    %616 = vmatpush1.msra.mxu0 %v494
    %617 = vmatprep.subr.mxu0 0.0
    %618 = vmatpush1.msra.mxu0 0.0
    %619 = vmatprep.subr.mxu0 0.0
    %620 = vmatpush1.msra.mxu0 0.0
    %621 = vmatprep.subr.mxu0 0.0
    %622 = vmatpush1.msra.mxu0 0.0
    %623 = vmatprep.subr.mxu0 0.0
    %624 = vmatpush1.msra.mxu0 0.0
    %625 = vmatprep.subr.mxu0 0.0
    %626 = vmatpush1.msra.mxu0 0.0
    %627 = vmatprep.subr.mxu0 0.0
    %628 = vmatpush1.msra.mxu0 0.0
    %629 = vmatprep.subr.mxu0 0.0
    %630 = vmatpush1.msra.mxu0 0.0
    %631 = vmatprep.subr.mxu0 0.0
    %632 = vmatpush1.msra.mxu0 0.0
    %633 = vmatprep.subr.mxu0 0.0
    %634 = vmatpush1.msra.mxu0 0.0
    %635 = vmatprep.subr.mxu0 0.0
    %636 = vmatpush1.msra.mxu0 0.0
    %637 = vmatprep.subr.mxu0 0.0
    %638 = vmatpush1.msra.mxu0 0.0
    %639 = vmatprep.subr.mxu0 0.0
    %640 = vmatpush1.msra.mxu0 0.0
    %641 = vmatprep.subr.mxu0 0.0
    %642 = vmatpush1.msra.mxu0 0.0
    %643 = vmatprep.subr.mxu0 0.0
    %644 = vmatpush1.msra.mxu0 0.0
    %645 = vmatprep.subr.mxu0 0.0
    %646 = vmatpush1.msra.mxu0 0.0
    %647 = vmatprep.subr.mxu0 0.0
    %648 = vmatpush1.msra.mxu0 0.0
    %649 = vmatprep.subr.mxu0 0.0
    %650 = vmatpush1.msra.mxu0 0.0
    %651 = vmatprep.subr.mxu0 0.0
    %652 = vmatpush1.msra.mxu0 0.0
    %653 = vmatprep.subr.mxu0 0.0
    %654 = vmatpush1.msra.mxu0 0.0
    %655 = vmatprep.subr.mxu0 0.0
    %656 = vmatpush1.msra.mxu0 0.0
    %657 = vmatprep.subr.mxu0 0.0
    %658 = vmatpush1.msra.mxu0 0.0
    %659 = vmatprep.subr.mxu0 0.0
    %660 = vmatpush1.msra.mxu0 0.0
    %661 = vmatprep.subr.mxu0 0.0
    %662 = vmatpush1.msra.mxu0 0.0
    %663 = vmatprep.subr.mxu0 0.0
    %664 = vmatpush1.msra.mxu0 0.0
    %665 = vmatprep.subr.mxu0 0.0
    %666 = vmatpush1.msra.mxu0 0.0
    %667 = vmatprep.subr.mxu0 0.0
    %668 = vmatpush1.msra.mxu0 0.0
    %669 = vmatprep.subr.mxu0 0.0
    %670 = vmatpush1.msra.mxu0 0.0
    %671 = vmatprep.subr.mxu0 0.0
    %672 = vmatpush1.msra.mxu0 0.0
    %673 = vmatprep.subr.mxu0 0.0
    %674 = vmatpush1.msra.mxu0 0.0
    %675 = vmatprep.subr.mxu0 0.0
    %676 = vmatpush1.msra.mxu0 0.0
    %677 = vmatprep.mubr.f32.mxu0 0.0
    %678 = vmatmul.mubr.f32.gmra.mrb[0].mxu0 %v608
    %v679 = vpop.f32.mrb[0].mxu0
    %v680 = vadd.f32 0.0, %v679
    %v681 = vpop.f32.mrb[0].mxu0
    %682 = vmatprep.mubr.f32.mxu0 0.0
    %683 = vmatmul.mubr.f32.gmra.mrb[0].mxu0 %v611
    %v684 = vpop.f32.mrb[0].mxu0
    %v685 = vadd.f32 0.0, %v684
    %v686 = vpop.f32.mrb[0].mxu0
    %687 = vdwg.mxu0
    %v688 = vld [vmem:[#allocation2 + $0x100] sm:$0xff]
    %v690 = vsel %vm497, %v680, 0
    %v693 = vsel %vm497, %v685, 0
    %695 = vmatprep.subr.mxu0 0.0
    %696 = vmatpush1.msra.mxu0 %v688
    %697 = vmatprep.subr.mxu0 0.0
    %698 = vmatpush1.msra.mxu0 0.0
    %699 = vmatprep.subr.mxu0 0.0
    %700 = vmatpush1.msra.mxu0 0.0
    %701 = vmatprep.subr.mxu0 0.0
    %702 = vmatpush1.msra.mxu0 0.0
    %703 = vmatprep.subr.mxu0 0.0
    %704 = vmatpush1.msra.mxu0 0.0
    %705 = vmatprep.subr.mxu0 0.0
    %706 = vmatpush1.msra.mxu0 0.0
    %707 = vmatprep.subr.mxu0 0.0
    %708 = vmatpush1.msra.mxu0 0.0
    %709 = vmatprep.subr.mxu0 0.0
    %710 = vmatpush1.msra.mxu0 0.0
    %711 = vmatprep.subr.mxu0 0.0
    %712 = vmatpush1.msra.mxu0 0.0
    %713 = vmatprep.subr.mxu0 0.0
    %714 = vmatpush1.msra.mxu0 0.0
    %715 = vmatprep.subr.mxu0 0.0
    %716 = vmatpush1.msra.mxu0 0.0
    %717 = vmatprep.subr.mxu0 0.0
    %718 = vmatpush1.msra.mxu0 0.0
    %719 = vmatprep.subr.mxu0 0.0
    %720 = vmatpush1.msra.mxu0 0.0
    %721 = vmatprep.subr.mxu0 0.0
    %722 = vmatpush1.msra.mxu0 0.0
    %723 = vmatprep.subr.mxu0 0.0
    %724 = vmatpush1.msra.mxu0 0.0
    %725 = vmatprep.subr.mxu0 0.0
    %726 = vmatpush1.msra.mxu0 0.0
    %727 = vmatprep.subr.mxu0 0.0
    %728 = vmatpush1.msra.mxu0 0.0
    %729 = vmatprep.subr.mxu0 0.0
    %730 = vmatpush1.msra.mxu0 0.0
    %731 = vmatprep.subr.mxu0 0.0
    %732 = vmatpush1.msra.mxu0 0.0
    %733 = vmatprep.subr.mxu0 0.0
    %734 = vmatpush1.msra.mxu0 0.0
    %735 = vmatprep.subr.mxu0 0.0
    %736 = vmatpush1.msra.mxu0 0.0
    %737 = vmatprep.subr.mxu0 0.0
    %738 = vmatpush1.msra.mxu0 0.0
    %739 = vmatprep.subr.mxu0 0.0
    %740 = vmatpush1.msra.mxu0 0.0
    %741 = vmatprep.subr.mxu0 0.0
    %742 = vmatpush1.msra.mxu0 0.0
    %743 = vmatprep.subr.mxu0 0.0
    %744 = vmatpush1.msra.mxu0 0.0
    %745 = vmatprep.subr.mxu0 0.0
    %746 = vmatpush1.msra.mxu0 0.0
    %747 = vmatprep.subr.mxu0 0.0
    %748 = vmatpush1.msra.mxu0 0.0
    %749 = vmatprep.subr.mxu0 0.0
    %750 = vmatpush1.msra.mxu0 0.0
    %751 = vmatprep.subr.mxu0 0.0
    %752 = vmatpush1.msra.mxu0 0.0
    %753 = vmatprep.subr.mxu0 0.0
    %754 = vmatpush1.msra.mxu0 0.0
    %755 = vmatprep.subr.mxu0 0.0
    %756 = vmatpush1.msra.mxu0 0.0
    %757 = vmatprep.subr.mxu0 0.0
    %758 = vmatpush1.msra.mxu0 0.0
    %759 = vmatprep.mubr.f32.mxu0 0.0
    %760 = vmatmul.mubr.f32.gmra.mrb[0].mxu0 %v690
    %v761 = vpop.f32.mrb[0].mxu0
    %v762 = vadd.f32 0.0, %v761
    %v763 = vpop.f32.mrb[0].mxu0
    %764 = vmatprep.mubr.f32.mxu0 0.0
    %765 = vmatmul.mubr.f32.gmra.mrb[0].mxu0 %v693
    %v766 = vpop.f32.mrb[0].mxu0
    %v767 = vadd.f32 0.0, %v766
    %v768 = vpop.f32.mrb[0].mxu0
    %769 = vdwg.mxu0
    %v770 = vlaneseq
    %v771 = vshrl.u32 %v770, 7
    %v772 = vsub.s32 0, %v771
    %v773 = vrot.slane %v238, %v772
    %v774 = vadd.f32 %v773, %v762
    %v775 = vadd.f32 %v773, %v767
    %v776 = vld [vmem:[#allocation2 + $0x120] sm:$0xff]
    %v777 = vld [vmem:[#allocation2 + $0x128] sm:$0xff]
    %v778 = vld [vmem:[#allocation2 + $0x130] sm:$0xff]
    %v779 = vld [vmem:[#allocation2 + $0x138] sm:$0xff]
    %v780 = vld [vmem:[#allocation2 + $0x188] sm:$0x1]
    %v781 = vlaneseq
    %v782 = vshrl.u32 %v781, 7
    %v783 = vsub.s32 0, %v782
    %v784 = vrot.slane %v780, %v783
    %785 = vmatprep.subr.mxu0 0.0
    %786 = vmatpush1.msra.mxu0 %v776
    %787 = vmatprep.subr.mxu0 0.0
    %788 = vmatpush1.msra.mxu0 %v777
    %789 = vmatprep.subr.mxu0 0.0
    %790 = vmatpush1.msra.mxu0 %v778
    %791 = vmatprep.subr.mxu0 0.0
    %792 = vmatpush1.msra.mxu0 %v779
    %793 = vmatprep.subr.mxu0 0.0
    %794 = vmatpush1.msra.mxu0 0.0
    %795 = vmatprep.subr.mxu0 0.0
    %796 = vmatpush1.msra.mxu0 0.0
    %797 = vmatprep.subr.mxu0 0.0
    %798 = vmatpush1.msra.mxu0 0.0
    %799 = vmatprep.subr.mxu0 0.0
    %800 = vmatpush1.msra.mxu0 0.0
    %801 = vmatprep.subr.mxu0 0.0
    %802 = vmatpush1.msra.mxu0 0.0
    %803 = vmatprep.subr.mxu0 0.0
    %804 = vmatpush1.msra.mxu0 0.0
    %805 = vmatprep.subr.mxu0 0.0
    %806 = vmatpush1.msra.mxu0 0.0
    %807 = vmatprep.subr.mxu0 0.0
    %808 = vmatpush1.msra.mxu0 0.0
    %809 = vmatprep.subr.mxu0 0.0
    %810 = vmatpush1.msra.mxu0 0.0
    %811 = vmatprep.subr.mxu0 0.0
    %812 = vmatpush1.msra.mxu0 0.0
    %813 = vmatprep.subr.mxu0 0.0
    %814 = vmatpush1.msra.mxu0 0.0
    %815 = vmatprep.subr.mxu0 0.0
    %816 = vmatpush1.msra.mxu0 0.0
    %817 = vmatprep.subr.mxu0 0.0
    %818 = vmatpush1.msra.mxu0 0.0
    %819 = vmatprep.subr.mxu0 0.0
    %820 = vmatpush1.msra.mxu0 0.0
    %821 = vmatprep.subr.mxu0 0.0
    %822 = vmatpush1.msra.mxu0 0.0
    %823 = vmatprep.subr.mxu0 0.0
    %824 = vmatpush1.msra.mxu0 0.0
    %825 = vmatprep.subr.mxu0 0.0
    %826 = vmatpush1.msra.mxu0 0.0
    %827 = vmatprep.subr.mxu0 0.0
    %828 = vmatpush1.msra.mxu0 0.0
    %829 = vmatprep.subr.mxu0 0.0
    %830 = vmatpush1.msra.mxu0 0.0
    %831 = vmatprep.subr.mxu0 0.0
    %832 = vmatpush1.msra.mxu0 0.0
    %833 = vmatprep.subr.mxu0 0.0
    %834 = vmatpush1.msra.mxu0 0.0
    %835 = vmatprep.subr.mxu0 0.0
    %836 = vmatpush1.msra.mxu0 0.0
    %837 = vmatprep.subr.mxu0 0.0
    %838 = vmatpush1.msra.mxu0 0.0
    %839 = vmatprep.subr.mxu0 0.0
    %840 = vmatpush1.msra.mxu0 0.0
    %841 = vmatprep.subr.mxu0 0.0
    %842 = vmatpush1.msra.mxu0 0.0
    %843 = vmatprep.subr.mxu0 0.0
    %844 = vmatpush1.msra.mxu0 0.0
    %845 = vmatprep.subr.mxu0 0.0
    %846 = vmatpush1.msra.mxu0 0.0
    %847 = vmatprep.subr.mxu0 0.0
    %848 = vmatpush1.msra.mxu0 0.0
    %849 = vmatprep.mubr.f32.mxu0 0.0
    %850 = vmatmul.mubr.f32.gmra.mrb[0].mxu0 %v249
    %v851 = vpop.f32.mrb[0].mxu0
    %v852 = vadd.f32 %v784, %v851
    %v853 = vpop.f32.mrb[0].mxu0
    %854 = vmatprep.mubr.f32.mxu0 0.0
    %855 = vmatmul.mubr.f32.gmra.mrb[0].mxu0 %v252
    %v856 = vpop.f32.mrb[0].mxu0
    %v857 = vadd.f32 %v784, %v856
    %v858 = vpop.f32.mrb[0].mxu0
    %859 = vdwg.mxu0
    %v860 = vld [vmem:[#allocation2 + $0x140] sm:$0xff]
    %v861 = vld [vmem:[#allocation2 + $0x148] sm:$0xff]
    %v862 = vld [vmem:[#allocation2 + $0x150] sm:$0xff]
    %v863 = vld [vmem:[#allocation2 + $0x158] sm:$0xff]
    %v864 = vld [vmem:[#allocation2 + $0x190] sm:$0x1]
    %v865 = vlaneseq
    %v866 = vshrl.u32 %v865, 7
    %v867 = vsub.s32 0, %v866
    %v868 = vrot.slane %v864, %v867
    %869 = vmatprep.subr.mxu0 0.0
    %870 = vmatpush1.msra.mxu0 %v860
    %871 = vmatprep.subr.mxu0 0.0
    %872 = vmatpush1.msra.mxu0 %v861
    %873 = vmatprep.subr.mxu0 0.0
    %874 = vmatpush1.msra.mxu0 %v862
    %875 = vmatprep.subr.mxu0 0.0
    %876 = vmatpush1.msra.mxu0 %v863
    %877 = vmatprep.subr.mxu0 0.0
    %878 = vmatpush1.msra.mxu0 0.0
    %879 = vmatprep.subr.mxu0 0.0
    %880 = vmatpush1.msra.mxu0 0.0
    %881 = vmatprep.subr.mxu0 0.0
    %882 = vmatpush1.msra.mxu0 0.0
    %883 = vmatprep.subr.mxu0 0.0
    %884 = vmatpush1.msra.mxu0 0.0
    %885 = vmatprep.subr.mxu0 0.0
    %886 = vmatpush1.msra.mxu0 0.0
    %887 = vmatprep.subr.mxu0 0.0
    %888 = vmatpush1.msra.mxu0 0.0
    %889 = vmatprep.subr.mxu0 0.0
    %890 = vmatpush1.msra.mxu0 0.0
    %891 = vmatprep.subr.mxu0 0.0
    %892 = vmatpush1.msra.mxu0 0.0
    %893 = vmatprep.subr.mxu0 0.0
    %894 = vmatpush1.msra.mxu0 0.0
    %895 = vmatprep.subr.mxu0 0.0
    %896 = vmatpush1.msra.mxu0 0.0
    %897 = vmatprep.subr.mxu0 0.0
    %898 = vmatpush1.msra.mxu0 0.0
    %899 = vmatprep.subr.mxu0 0.0
    %900 = vmatpush1.msra.mxu0 0.0
    %901 = vmatprep.subr.mxu0 0.0
    %902 = vmatpush1.msra.mxu0 0.0
    %903 = vmatprep.subr.mxu0 0.0
    %904 = vmatpush1.msra.mxu0 0.0
    %905 = vmatprep.subr.mxu0 0.0
    %906 = vmatpush1.msra.mxu0 0.0
    %907 = vmatprep.subr.mxu0 0.0
    %908 = vmatpush1.msra.mxu0 0.0
    %909 = vmatprep.subr.mxu0 0.0
    %910 = vmatpush1.msra.mxu0 0.0
    %911 = vmatprep.subr.mxu0 0.0
    %912 = vmatpush1.msra.mxu0 0.0
    %913 = vmatprep.subr.mxu0 0.0
    %914 = vmatpush1.msra.mxu0 0.0
    %915 = vmatprep.subr.mxu0 0.0
    %916 = vmatpush1.msra.mxu0 0.0
    %917 = vmatprep.subr.mxu0 0.0
    %918 = vmatpush1.msra.mxu0 0.0
    %919 = vmatprep.subr.mxu0 0.0
    %920 = vmatpush1.msra.mxu0 0.0
    %921 = vmatprep.subr.mxu0 0.0
    %922 = vmatpush1.msra.mxu0 0.0
    %923 = vmatprep.subr.mxu0 0.0
    %924 = vmatpush1.msra.mxu0 0.0
    %925 = vmatprep.subr.mxu0 0.0
    %926 = vmatpush1.msra.mxu0 0.0
    %927 = vmatprep.subr.mxu0 0.0
    %928 = vmatpush1.msra.mxu0 0.0
    %929 = vmatprep.subr.mxu0 0.0
    %930 = vmatpush1.msra.mxu0 0.0
    %931 = vmatprep.subr.mxu0 0.0
    %932 = vmatpush1.msra.mxu0 0.0
    %933 = vmatprep.mubr.f32.mxu0 0.0
    %934 = vmatmul.mubr.f32.gmra.mrb[0].mxu0 %v249
    %v935 = vpop.f32.mrb[0].mxu0
    %v936 = vadd.f32 %v868, %v935
    %v937 = vpop.f32.mrb[0].mxu0
    %938 = vmatprep.mubr.f32.mxu0 0.0
    %939 = vmatmul.mubr.f32.gmra.mrb[0].mxu0 %v252
    %v940 = vpop.f32.mrb[0].mxu0
    %v941 = vadd.f32 %v868, %v940
    %v942 = vpop.f32.mrb[0].mxu0
    %943 = vdwg.mxu0
    %v944 = vld [vmem:[#allocation2 + $0x160] sm:$0xff]
    %v945 = vld [vmem:[#allocation2 + $0x168] sm:$0xff]
    %v946 = vld [vmem:[#allocation2 + $0x170] sm:$0xff]
    %v947 = vld [vmem:[#allocation2 + $0x178] sm:$0xff]
    %v948 = vld [vmem:[#allocation2 + $0x198] sm:$0x1]
    %v949 = vlaneseq
    %v950 = vshrl.u32 %v949, 7
    %v951 = vsub.s32 0, %v950
    %v952 = vrot.slane %v948, %v951
    %953 = vmatprep.subr.mxu0 0.0
    %954 = vmatpush1.msra.mxu0 %v944
    %955 = vmatprep.subr.mxu0 0.0
    %956 = vmatpush1.msra.mxu0 %v945
    %957 = vmatprep.subr.mxu0 0.0
    %958 = vmatpush1.msra.mxu0 %v946
    %959 = vmatprep.subr.mxu0 0.0
    %960 = vmatpush1.msra.mxu0 %v947
    %961 = vmatprep.subr.mxu0 0.0
    %962 = vmatpush1.msra.mxu0 0.0
    %963 = vmatprep.subr.mxu0 0.0
    %964 = vmatpush1.msra.mxu0 0.0
    %965 = vmatprep.subr.mxu0 0.0
    %966 = vmatpush1.msra.mxu0 0.0
    %967 = vmatprep.subr.mxu0 0.0
    %968 = vmatpush1.msra.mxu0 0.0
    %969 = vmatprep.subr.mxu0 0.0
    %970 = vmatpush1.msra.mxu0 0.0
    %971 = vmatprep.subr.mxu0 0.0
    %972 = vmatpush1.msra.mxu0 0.0
    %973 = vmatprep.subr.mxu0 0.0
    %974 = vmatpush1.msra.mxu0 0.0
    %975 = vmatprep.subr.mxu0 0.0
    %976 = vmatpush1.msra.mxu0 0.0
    %977 = vmatprep.subr.mxu0 0.0
    %978 = vmatpush1.msra.mxu0 0.0
    %979 = vmatprep.subr.mxu0 0.0
    %980 = vmatpush1.msra.mxu0 0.0
    %981 = vmatprep.subr.mxu0 0.0
    %982 = vmatpush1.msra.mxu0 0.0
    %983 = vmatprep.subr.mxu0 0.0
    %984 = vmatpush1.msra.mxu0 0.0
    %985 = vmatprep.subr.mxu0 0.0
    %986 = vmatpush1.msra.mxu0 0.0
    %987 = vmatprep.subr.mxu0 0.0
    %988 = vmatpush1.msra.mxu0 0.0
    %989 = vmatprep.subr.mxu0 0.0
    %990 = vmatpush1.msra.mxu0 0.0
    %991 = vmatprep.subr.mxu0 0.0
    %992 = vmatpush1.msra.mxu0 0.0
    %993 = vmatprep.subr.mxu0 0.0
    %994 = vmatpush1.msra.mxu0 0.0
    %995 = vmatprep.subr.mxu0 0.0
    %996 = vmatpush1.msra.mxu0 0.0
    %997 = vmatprep.subr.mxu0 0.0
    %998 = vmatpush1.msra.mxu0 0.0
    %999 = vmatprep.subr.mxu0 0.0
    %1000 = vmatpush1.msra.mxu0 0.0
    %1001 = vmatprep.subr.mxu0 0.0
    %1002 = vmatpush1.msra.mxu0 0.0
    %1003 = vmatprep.subr.mxu0 0.0
    %1004 = vmatpush1.msra.mxu0 0.0
    %1005 = vmatprep.subr.mxu0 0.0
    %1006 = vmatpush1.msra.mxu0 0.0
    %1007 = vmatprep.subr.mxu0 0.0
    %1008 = vmatpush1.msra.mxu0 0.0
    %1009 = vmatprep.subr.mxu0 0.0
    %1010 = vmatpush1.msra.mxu0 0.0
    %1011 = vmatprep.subr.mxu0 0.0
    %1012 = vmatpush1.msra.mxu0 0.0
    %1013 = vmatprep.subr.mxu0 0.0
    %1014 = vmatpush1.msra.mxu0 0.0
    %1015 = vmatprep.subr.mxu0 0.0
    %1016 = vmatpush1.msra.mxu0 0.0
    %1017 = vmatprep.mubr.f32.mxu0 0.0
    %1018 = vmatmul.mubr.f32.gmra.mrb[0].mxu0 %v249
    %v1019 = vpop.f32.mrb[0].mxu0
    %v1020 = vadd.f32 %v952, %v1019
    %v1021 = vpop.f32.mrb[0].mxu0
    %1022 = vmatprep.mubr.f32.mxu0 0.0
    %1023 = vmatmul.mubr.f32.gmra.mrb[0].mxu0 %v252
    %v1024 = vpop.f32.mrb[0].mxu0
    %v1025 = vadd.f32 %v952, %v1024
    %v1026 = vpop.f32.mrb[0].mxu0
    %1027 = vdwg.mxu0
    %v1029 = vsel %vm497, %v852, 0
    %v1032 = vsel %vm497, %v857, 0
    %v1035 = vsel %vm497, %v936, 0
    %v1038 = vsel %vm497, %v941, 0
    %1040 = vmatprep.subr.mxu0 0.0
    %1041 = vmatpush1.xpose.msra.mxu0 %v1035
    %1042 = vmatprep.subr.mxu0 0.0
    %1043 = vmatpush1.xpose.msra.mxu0 %v1038
    %1044 = vmatprep.subr.mxu0 0.0
    %1045 = vmatpush1.xpose.msra.mxu0 0.0
    %1046 = vmatprep.subr.mxu0 0.0
    %1047 = vmatpush1.xpose.msra.mxu0 0.0
    %1048 = vmatprep.subr.mxu0 0.0
    %1049 = vmatpush1.xpose.msra.mxu0 0.0
    %1050 = vmatprep.subr.mxu0 0.0
    %1051 = vmatpush1.xpose.msra.mxu0 0.0
    %1052 = vmatprep.subr.mxu0 0.0
    %1053 = vmatpush1.xpose.msra.mxu0 0.0
    %1054 = vmatprep.subr.mxu0 0.0
    %1055 = vmatpush1.xpose.msra.mxu0 0.0
    %1056 = vmatprep.subr.mxu0 0.0
    %1057 = vmatpush1.xpose.msra.mxu0 0.0
    %1058 = vmatprep.subr.mxu0 0.0
    %1059 = vmatpush1.xpose.msra.mxu0 0.0
    %1060 = vmatprep.subr.mxu0 0.0
    %1061 = vmatpush1.xpose.msra.mxu0 0.0
    %1062 = vmatprep.subr.mxu0 0.0
    %1063 = vmatpush1.xpose.msra.mxu0 0.0
    %1064 = vmatprep.subr.mxu0 0.0
    %1065 = vmatpush1.xpose.msra.mxu0 0.0
    %1066 = vmatprep.subr.mxu0 0.0
    %1067 = vmatpush1.xpose.msra.mxu0 0.0
    %1068 = vmatprep.subr.mxu0 0.0
    %1069 = vmatpush1.xpose.msra.mxu0 0.0
    %1070 = vmatprep.subr.mxu0 0.0
    %1071 = vmatpush1.xpose.msra.mxu0 0.0
    %1072 = vmatprep.subr.mxu0 0.0
    %1073 = vmatpush1.xpose.msra.mxu0 0.0
    %1074 = vmatprep.subr.mxu0 0.0
    %1075 = vmatpush1.xpose.msra.mxu0 0.0
    %1076 = vmatprep.subr.mxu0 0.0
    %1077 = vmatpush1.xpose.msra.mxu0 0.0
    %1078 = vmatprep.subr.mxu0 0.0
    %1079 = vmatpush1.xpose.msra.mxu0 0.0
    %1080 = vmatprep.subr.mxu0 0.0
    %1081 = vmatpush1.xpose.msra.mxu0 0.0
    %1082 = vmatprep.subr.mxu0 0.0
    %1083 = vmatpush1.xpose.msra.mxu0 0.0
    %1084 = vmatprep.subr.mxu0 0.0
    %1085 = vmatpush1.xpose.msra.mxu0 0.0
    %1086 = vmatprep.subr.mxu0 0.0
    %1087 = vmatpush1.xpose.msra.mxu0 0.0
    %1088 = vmatprep.subr.mxu0 0.0
    %1089 = vmatpush1.xpose.msra.mxu0 0.0
    %1090 = vmatprep.subr.mxu0 0.0
    %1091 = vmatpush1.xpose.msra.mxu0 0.0
    %1092 = vmatprep.subr.mxu0 0.0
    %1093 = vmatpush1.xpose.msra.mxu0 0.0
    %1094 = vmatprep.subr.mxu0 0.0
    %1095 = vmatpush1.xpose.msra.mxu0 0.0
    %1096 = vmatprep.subr.mxu0 0.0
    %1097 = vmatpush1.xpose.msra.mxu0 0.0
    %1098 = vmatprep.subr.mxu0 0.0
    %1099 = vmatpush1.xpose.msra.mxu0 0.0
    %1100 = vmatprep.subr.mxu0 0.0
    %1101 = vmatpush1.xpose.msra.mxu0 0.0
    %1102 = vmatprep.subr.mxu0 0.0
    %1103 = vmatpush1.xpose.msra.mxu0 0.0
    %1104 = vmatprep.mubr.f32.mxu0 0.0
    %1105 = vmatmul.mubr.f32.gmra.mrb[0].mxu0 %v1029
    %v1106 = vpop.f32.mrb[0].mxu0
    %v1107 = vadd.f32 %v236, %v1106
    %v1108 = vpop.f32.mrb[0].mxu0
    %1109 = vmatprep.mubr.f32.mxu0 0.0
    %1110 = vmatmul.mubr.f32.gmra.mrb[0].mxu0 %v1032
    %v1111 = vpop.f32.mrb[0].mxu0
    %v1112 = vadd.f32 %v237, %v1111
    %v1113 = vpop.f32.mrb[0].mxu0
    %1114 = vdwg.mxu0
    %v1115 = vsel %vm92, %v1107, -inf
    %1116 = vmax.xlane.f32.xlu0 %v1115
    %v1117 = vpop.xlane.xlu0 %1116
    %v1118 = vsel %vm92, %v1112, -inf
    %1119 = vmax.xlane.f32.xlu0 %v1118
    %v1120 = vpop.xlane.xlu0 %1119
    %v1121 = vsub.f32 %v1107, %v1117
    %v1122 = vsub.f32 %v1112, %v1120
    %v1123 = vmul.f32 %v1121, 1.442695
    %v1124 = vpow.pop %v1123
    %v1125 = vmul.f32 %v1122, 1.442695
    %v1126 = vpow.pop %v1125
    %v1127 = vsel %vm92, %v1124, 0.0
    %1128 = vadd.xlane.f32.xlu0 %v1127
    %v1129 = vpop.xlane.xlu0 %1128
    %v1130 = vsel %vm92, %v1126, 0.0
    %1131 = vadd.xlane.f32.xlu0 %v1130
    %v1132 = vpop.xlane.xlu0 %1131
    %v1133 = vrcp.pop %v1129
    %v1134 = vrcp.pop %v1132
    %v1135 = vmul.f32 %v1124, %v1133
    %v1136 = vmul.f32 %v1126, %v1134
    %v1138 = vsel %vm92, %v1135, 0
    %v1141 = vsel %vm92, %v1136, 0
    %1143 = vmatprep.subr.mxu0 0.0
    %1144 = vmatpush1.msra.mxu0 %v1020
    %1145 = vmatprep.subr.mxu0 0.0
    %1146 = vmatpush1.msra.mxu0 %v1025
    %1147 = vmatprep.subr.mxu0 0.0
    %1148 = vmatpush1.msra.mxu0 0.0
    %1149 = vmatprep.subr.mxu0 0.0
    %1150 = vmatpush1.msra.mxu0 0.0
    %1151 = vmatprep.subr.mxu0 0.0
    %1152 = vmatpush1.msra.mxu0 0.0
    %1153 = vmatprep.subr.mxu0 0.0
    %1154 = vmatpush1.msra.mxu0 0.0
    %1155 = vmatprep.subr.mxu0 0.0
    %1156 = vmatpush1.msra.mxu0 0.0
    %1157 = vmatprep.subr.mxu0 0.0
    %1158 = vmatpush1.msra.mxu0 0.0
    %1159 = vmatprep.subr.mxu0 0.0
    %1160 = vmatpush1.msra.mxu0 0.0
    %1161 = vmatprep.subr.mxu0 0.0
    %1162 = vmatpush1.msra.mxu0 0.0
    %1163 = vmatprep.subr.mxu0 0.0
    %1164 = vmatpush1.msra.mxu0 0.0
    %1165 = vmatprep.subr.mxu0 0.0
    %1166 = vmatpush1.msra.mxu0 0.0
    %1167 = vmatprep.subr.mxu0 0.0
    %1168 = vmatpush1.msra.mxu0 0.0
    %1169 = vmatprep.subr.mxu0 0.0
    %1170 = vmatpush1.msra.mxu0 0.0
    %1171 = vmatprep.subr.mxu0 0.0
    %1172 = vmatpush1.msra.mxu0 0.0
    %1173 = vmatprep.subr.mxu0 0.0
    %1174 = vmatpush1.msra.mxu0 0.0
    %1175 = vmatprep.subr.mxu0 0.0
    %1176 = vmatpush1.msra.mxu0 0.0
    %1177 = vmatprep.subr.mxu0 0.0
    %1178 = vmatpush1.msra.mxu0 0.0
    %1179 = vmatprep.subr.mxu0 0.0
    %1180 = vmatpush1.msra.mxu0 0.0
    %1181 = vmatprep.subr.mxu0 0.0
    %1182 = vmatpush1.msra.mxu0 0.0
    %1183 = vmatprep.subr.mxu0 0.0
    %1184 = vmatpush1.msra.mxu0 0.0
    %1185 = vmatprep.subr.mxu0 0.0
    %1186 = vmatpush1.msra.mxu0 0.0
    %1187 = vmatprep.subr.mxu0 0.0
    %1188 = vmatpush1.msra.mxu0 0.0
    %1189 = vmatprep.subr.mxu0 0.0
    %1190 = vmatpush1.msra.mxu0 0.0
    %1191 = vmatprep.subr.mxu0 0.0
    %1192 = vmatpush1.msra.mxu0 0.0
    %1193 = vmatprep.subr.mxu0 0.0
    %1194 = vmatpush1.msra.mxu0 0.0
    %1195 = vmatprep.subr.mxu0 0.0
    %1196 = vmatpush1.msra.mxu0 0.0
    %1197 = vmatprep.subr.mxu0 0.0
    %1198 = vmatpush1.msra.mxu0 0.0
    %1199 = vmatprep.subr.mxu0 0.0
    %1200 = vmatpush1.msra.mxu0 0.0
    %1201 = vmatprep.subr.mxu0 0.0
    %1202 = vmatpush1.msra.mxu0 0.0
    %1203 = vmatprep.subr.mxu0 0.0
    %1204 = vmatpush1.msra.mxu0 0.0
    %1205 = vmatprep.subr.mxu0 0.0
    %1206 = vmatpush1.msra.mxu0 0.0
    %1207 = vmatprep.mubr.f32.mxu0 0.0
    %1208 = vmatmul.mubr.f32.gmra.mrb[0].mxu0 %v1138
    %v1209 = vpop.f32.mrb[0].mxu0
    %v1210 = vadd.f32 0.0, %v1209
    %v1211 = vpop.f32.mrb[0].mxu0
    %1212 = vmatprep.mubr.f32.mxu0 0.0
    %1213 = vmatmul.mubr.f32.gmra.mrb[0].mxu0 %v1141
    %v1214 = vpop.f32.mrb[0].mxu0
    %v1215 = vadd.f32 0.0, %v1214
    %v1216 = vpop.f32.mrb[0].mxu0
    %1217 = vdwg.mxu0
    %v1218 = vld [vmem:[#allocation2 + $0x180] sm:$0xff]
    %v1220 = vsel %vm497, %v1210, 0
    %v1223 = vsel %vm497, %v1215, 0
    %1225 = vmatprep.subr.mxu0 0.0
    %1226 = vmatpush1.msra.mxu0 %v1218
    %1227 = vmatprep.subr.mxu0 0.0
    %1228 = vmatpush1.msra.mxu0 0.0
    %1229 = vmatprep.subr.mxu0 0.0
    %1230 = vmatpush1.msra.mxu0 0.0
    %1231 = vmatprep.subr.mxu0 0.0
    %1232 = vmatpush1.msra.mxu0 0.0
    %1233 = vmatprep.subr.mxu0 0.0
    %1234 = vmatpush1.msra.mxu0 0.0
    %1235 = vmatprep.subr.mxu0 0.0
    %1236 = vmatpush1.msra.mxu0 0.0
    %1237 = vmatprep.subr.mxu0 0.0
    %1238 = vmatpush1.msra.mxu0 0.0
    %1239 = vmatprep.subr.mxu0 0.0
    %1240 = vmatpush1.msra.mxu0 0.0
    %1241 = vmatprep.subr.mxu0 0.0
    %1242 = vmatpush1.msra.mxu0 0.0
    %1243 = vmatprep.subr.mxu0 0.0
    %1244 = vmatpush1.msra.mxu0 0.0
    %1245 = vmatprep.subr.mxu0 0.0
    %1246 = vmatpush1.msra.mxu0 0.0
    %1247 = vmatprep.subr.mxu0 0.0
    %1248 = vmatpush1.msra.mxu0 0.0
    %1249 = vmatprep.subr.mxu0 0.0
    %1250 = vmatpush1.msra.mxu0 0.0
    %1251 = vmatprep.subr.mxu0 0.0
    %1252 = vmatpush1.msra.mxu0 0.0
    %1253 = vmatprep.subr.mxu0 0.0
    %1254 = vmatpush1.msra.mxu0 0.0
    %1255 = vmatprep.subr.mxu0 0.0
    %1256 = vmatpush1.msra.mxu0 0.0
    %1257 = vmatprep.subr.mxu0 0.0
    %1258 = vmatpush1.msra.mxu0 0.0
    %1259 = vmatprep.subr.mxu0 0.0
    %1260 = vmatpush1.msra.mxu0 0.0
    %1261 = vmatprep.subr.mxu0 0.0
    %1262 = vmatpush1.msra.mxu0 0.0
    %1263 = vmatprep.subr.mxu0 0.0
    %1264 = vmatpush1.msra.mxu0 0.0
    %1265 = vmatprep.subr.mxu0 0.0
    %1266 = vmatpush1.msra.mxu0 0.0
    %1267 = vmatprep.subr.mxu0 0.0
    %1268 = vmatpush1.msra.mxu0 0.0
    %1269 = vmatprep.subr.mxu0 0.0
    %1270 = vmatpush1.msra.mxu0 0.0
    %1271 = vmatprep.subr.mxu0 0.0
    %1272 = vmatpush1.msra.mxu0 0.0
    %1273 = vmatprep.subr.mxu0 0.0
    %1274 = vmatpush1.msra.mxu0 0.0
    %1275 = vmatprep.subr.mxu0 0.0
    %1276 = vmatpush1.msra.mxu0 0.0
    %1277 = vmatprep.subr.mxu0 0.0
    %1278 = vmatpush1.msra.mxu0 0.0
    %1279 = vmatprep.subr.mxu0 0.0
    %1280 = vmatpush1.msra.mxu0 0.0
    %1281 = vmatprep.subr.mxu0 0.0
    %1282 = vmatpush1.msra.mxu0 0.0
    %1283 = vmatprep.subr.mxu0 0.0
    %1284 = vmatpush1.msra.mxu0 0.0
    %1285 = vmatprep.subr.mxu0 0.0
    %1286 = vmatpush1.msra.mxu0 0.0
    %1287 = vmatprep.subr.mxu0 0.0
    %1288 = vmatpush1.msra.mxu0 0.0
    %1289 = vmatprep.mubr.f32.mxu0 0.0
    %1290 = vmatmul.mubr.f32.gmra.mrb[0].mxu0 %v1220
    %v1291 = vpop.f32.mrb[0].mxu0
    %v1292 = vadd.f32 0.0, %v1291
    %v1293 = vpop.f32.mrb[0].mxu0
    %1294 = vmatprep.mubr.f32.mxu0 0.0
    %1295 = vmatmul.mubr.f32.gmra.mrb[0].mxu0 %v1223
    %v1296 = vpop.f32.mrb[0].mxu0
    %v1297 = vadd.f32 0.0, %v1296
    %v1298 = vpop.f32.mrb[0].mxu0
    %1299 = vdwg.mxu0
    %v1300 = vadd.f32 %v774, %v1292
    %v1301 = vadd.f32 %v775, %v1297
    %v1302 = vld [vmem:[#allocation2 + $0x1a0] sm:$0xff]
    %v1303 = vld [vmem:[#allocation2 + $0x1a8] sm:$0xff]
    %v1304 = vld [vmem:[#allocation2 + $0x1b0] sm:$0xff]
    %v1305 = vld [vmem:[#allocation2 + $0x1b8] sm:$0xff]
    %v1306 = vld [vmem:[#allocation2 + $0x208] sm:$0x1]
    %v1307 = vlaneseq
    %v1308 = vshrl.u32 %v1307, 7
    %v1309 = vsub.s32 0, %v1308
    %v1310 = vrot.slane %v1306, %v1309
    %1311 = vmatprep.subr.mxu0 0.0
    %1312 = vmatpush1.msra.mxu0 %v1302
    %1313 = vmatprep.subr.mxu0 0.0
    %1314 = vmatpush1.msra.mxu0 %v1303
    %1315 = vmatprep.subr.mxu0 0.0
    %1316 = vmatpush1.msra.mxu0 %v1304
    %1317 = vmatprep.subr.mxu0 0.0
    %1318 = vmatpush1.msra.mxu0 %v1305
    %1319 = vmatprep.subr.mxu0 0.0
    %1320 = vmatpush1.msra.mxu0 0.0
    %1321 = vmatprep.subr.mxu0 0.0
    %1322 = vmatpush1.msra.mxu0 0.0
    %1323 = vmatprep.subr.mxu0 0.0
    %1324 = vmatpush1.msra.mxu0 0.0
    %1325 = vmatprep.subr.mxu0 0.0
    %1326 = vmatpush1.msra.mxu0 0.0
    %1327 = vmatprep.subr.mxu0 0.0
    %1328 = vmatpush1.msra.mxu0 0.0
    %1329 = vmatprep.subr.mxu0 0.0
    %1330 = vmatpush1.msra.mxu0 0.0
    %1331 = vmatprep.subr.mxu0 0.0
    %1332 = vmatpush1.msra.mxu0 0.0
    %1333 = vmatprep.subr.mxu0 0.0
    %1334 = vmatpush1.msra.mxu0 0.0
    %1335 = vmatprep.subr.mxu0 0.0
    %1336 = vmatpush1.msra.mxu0 0.0
    %1337 = vmatprep.subr.mxu0 0.0
    %1338 = vmatpush1.msra.mxu0 0.0
    %1339 = vmatprep.subr.mxu0 0.0
    %1340 = vmatpush1.msra.mxu0 0.0
    %1341 = vmatprep.subr.mxu0 0.0
    %1342 = vmatpush1.msra.mxu0 0.0
    %1343 = vmatprep.subr.mxu0 0.0
    %1344 = vmatpush1.msra.mxu0 0.0
    %1345 = vmatprep.subr.mxu0 0.0
    %1346 = vmatpush1.msra.mxu0 0.0
    %1347 = vmatprep.subr.mxu0 0.0
    %1348 = vmatpush1.msra.mxu0 0.0
    %1349 = vmatprep.subr.mxu0 0.0
    %1350 = vmatpush1.msra.mxu0 0.0
    %1351 = vmatprep.subr.mxu0 0.0
    %1352 = vmatpush1.msra.mxu0 0.0
    %1353 = vmatprep.subr.mxu0 0.0
    %1354 = vmatpush1.msra.mxu0 0.0
    %1355 = vmatprep.subr.mxu0 0.0
    %1356 = vmatpush1.msra.mxu0 0.0
    %1357 = vmatprep.subr.mxu0 0.0
    %1358 = vmatpush1.msra.mxu0 0.0
    %1359 = vmatprep.subr.mxu0 0.0
    %1360 = vmatpush1.msra.mxu0 0.0
    %1361 = vmatprep.subr.mxu0 0.0
    %1362 = vmatpush1.msra.mxu0 0.0
    %1363 = vmatprep.subr.mxu0 0.0
    %1364 = vmatpush1.msra.mxu0 0.0
    %1365 = vmatprep.subr.mxu0 0.0
    %1366 = vmatpush1.msra.mxu0 0.0
    %1367 = vmatprep.subr.mxu0 0.0
    %1368 = vmatpush1.msra.mxu0 0.0
    %1369 = vmatprep.subr.mxu0 0.0
    %1370 = vmatpush1.msra.mxu0 0.0
    %1371 = vmatprep.subr.mxu0 0.0
    %1372 = vmatpush1.msra.mxu0 0.0
    %1373 = vmatprep.subr.mxu0 0.0
    %1374 = vmatpush1.msra.mxu0 0.0
    %1375 = vmatprep.mubr.f32.mxu0 0.0
    %1376 = vmatmul.mubr.f32.gmra.mrb[0].mxu0 %v249
    %v1377 = vpop.f32.mrb[0].mxu0
    %v1378 = vadd.f32 %v1310, %v1377
    %v1379 = vpop.f32.mrb[0].mxu0
    %1380 = vmatprep.mubr.f32.mxu0 0.0
    %1381 = vmatmul.mubr.f32.gmra.mrb[0].mxu0 %v252
    %v1382 = vpop.f32.mrb[0].mxu0
    %v1383 = vadd.f32 %v1310, %v1382
    %v1384 = vpop.f32.mrb[0].mxu0
    %1385 = vdwg.mxu0
    %v1386 = vld [vmem:[#allocation2 + $0x1c0] sm:$0xff]
    %v1387 = vld [vmem:[#allocation2 + $0x1c8] sm:$0xff]
    %v1388 = vld [vmem:[#allocation2 + $0x1d0] sm:$0xff]
    %v1389 = vld [vmem:[#allocation2 + $0x1d8] sm:$0xff]
    %v1390 = vld [vmem:[#allocation2 + $0x210] sm:$0x1]
    %v1391 = vlaneseq
    %v1392 = vshrl.u32 %v1391, 7
    %v1393 = vsub.s32 0, %v1392
    %v1394 = vrot.slane %v1390, %v1393
    %1395 = vmatprep.subr.mxu0 0.0
    %1396 = vmatpush1.msra.mxu0 %v1386
    %1397 = vmatprep.subr.mxu0 0.0
    %1398 = vmatpush1.msra.mxu0 %v1387
    %1399 = vmatprep.subr.mxu0 0.0
    %1400 = vmatpush1.msra.mxu0 %v1388
    %1401 = vmatprep.subr.mxu0 0.0
    %1402 = vmatpush1.msra.mxu0 %v1389
    %1403 = vmatprep.subr.mxu0 0.0
    %1404 = vmatpush1.msra.mxu0 0.0
    %1405 = vmatprep.subr.mxu0 0.0
    %1406 = vmatpush1.msra.mxu0 0.0
    %1407 = vmatprep.subr.mxu0 0.0
    %1408 = vmatpush1.msra.mxu0 0.0
    %1409 = vmatprep.subr.mxu0 0.0
    %1410 = vmatpush1.msra.mxu0 0.0
    %1411 = vmatprep.subr.mxu0 0.0
    %1412 = vmatpush1.msra.mxu0 0.0
    %1413 = vmatprep.subr.mxu0 0.0
    %1414 = vmatpush1.msra.mxu0 0.0
    %1415 = vmatprep.subr.mxu0 0.0
    %1416 = vmatpush1.msra.mxu0 0.0
    %1417 = vmatprep.subr.mxu0 0.0
    %1418 = vmatpush1.msra.mxu0 0.0
    %1419 = vmatprep.subr.mxu0 0.0
    %1420 = vmatpush1.msra.mxu0 0.0
    %1421 = vmatprep.subr.mxu0 0.0
    %1422 = vmatpush1.msra.mxu0 0.0
    %1423 = vmatprep.subr.mxu0 0.0
    %1424 = vmatpush1.msra.mxu0 0.0
    %1425 = vmatprep.subr.mxu0 0.0
    %1426 = vmatpush1.msra.mxu0 0.0
    %1427 = vmatprep.subr.mxu0 0.0
    %1428 = vmatpush1.msra.mxu0 0.0
    %1429 = vmatprep.subr.mxu0 0.0
    %1430 = vmatpush1.msra.mxu0 0.0
    %1431 = vmatprep.subr.mxu0 0.0
    %1432 = vmatpush1.msra.mxu0 0.0
    %1433 = vmatprep.subr.mxu0 0.0
    %1434 = vmatpush1.msra.mxu0 0.0
    %1435 = vmatprep.subr.mxu0 0.0
    %1436 = vmatpush1.msra.mxu0 0.0
    %1437 = vmatprep.subr.mxu0 0.0
    %1438 = vmatpush1.msra.mxu0 0.0
    %1439 = vmatprep.subr.mxu0 0.0
    %1440 = vmatpush1.msra.mxu0 0.0
    %1441 = vmatprep.subr.mxu0 0.0
    %1442 = vmatpush1.msra.mxu0 0.0
    %1443 = vmatprep.subr.mxu0 0.0
    %1444 = vmatpush1.msra.mxu0 0.0
    %1445 = vmatprep.subr.mxu0 0.0
    %1446 = vmatpush1.msra.mxu0 0.0
    %1447 = vmatprep.subr.mxu0 0.0
    %1448 = vmatpush1.msra.mxu0 0.0
    %1449 = vmatprep.subr.mxu0 0.0
    %1450 = vmatpush1.msra.mxu0 0.0
    %1451 = vmatprep.subr.mxu0 0.0
    %1452 = vmatpush1.msra.mxu0 0.0
    %1453 = vmatprep.subr.mxu0 0.0
    %1454 = vmatpush1.msra.mxu0 0.0
    %1455 = vmatprep.subr.mxu0 0.0
    %1456 = vmatpush1.msra.mxu0 0.0
    %1457 = vmatprep.subr.mxu0 0.0
    %1458 = vmatpush1.msra.mxu0 0.0
    %1459 = vmatprep.mubr.f32.mxu0 0.0
    %1460 = vmatmul.mubr.f32.gmra.mrb[0].mxu0 %v249
    %v1461 = vpop.f32.mrb[0].mxu0
    %v1462 = vadd.f32 %v1394, %v1461
    %v1463 = vpop.f32.mrb[0].mxu0
    %1464 = vmatprep.mubr.f32.mxu0 0.0
    %1465 = vmatmul.mubr.f32.gmra.mrb[0].mxu0 %v252
    %v1466 = vpop.f32.mrb[0].mxu0
    %v1467 = vadd.f32 %v1394, %v1466
    %v1468 = vpop.f32.mrb[0].mxu0
    %1469 = vdwg.mxu0
    %v1470 = vld [vmem:[#allocation2 + $0x1e0] sm:$0xff]
    %v1471 = vld [vmem:[#allocation2 + $0x1e8] sm:$0xff]
    %v1472 = vld [vmem:[#allocation2 + $0x1f0] sm:$0xff]
    %v1473 = vld [vmem:[#allocation2 + $0x1f8] sm:$0xff]
    %v1474 = vld [vmem:[#allocation2 + $0x218] sm:$0x1]
    %v1475 = vlaneseq
    %v1476 = vshrl.u32 %v1475, 7
    %v1477 = vsub.s32 0, %v1476
    %v1478 = vrot.slane %v1474, %v1477
    %1479 = vmatprep.subr.mxu0 0.0
    %1480 = vmatpush1.msra.mxu0 %v1470
    %1481 = vmatprep.subr.mxu0 0.0
    %1482 = vmatpush1.msra.mxu0 %v1471
    %1483 = vmatprep.subr.mxu0 0.0
    %1484 = vmatpush1.msra.mxu0 %v1472
    %1485 = vmatprep.subr.mxu0 0.0
    %1486 = vmatpush1.msra.mxu0 %v1473
    %1487 = vmatprep.subr.mxu0 0.0
    %1488 = vmatpush1.msra.mxu0 0.0
    %1489 = vmatprep.subr.mxu0 0.0
    %1490 = vmatpush1.msra.mxu0 0.0
    %1491 = vmatprep.subr.mxu0 0.0
    %1492 = vmatpush1.msra.mxu0 0.0
    %1493 = vmatprep.subr.mxu0 0.0
    %1494 = vmatpush1.msra.mxu0 0.0
    %1495 = vmatprep.subr.mxu0 0.0
    %1496 = vmatpush1.msra.mxu0 0.0
    %1497 = vmatprep.subr.mxu0 0.0
    %1498 = vmatpush1.msra.mxu0 0.0
    %1499 = vmatprep.subr.mxu0 0.0
    %1500 = vmatpush1.msra.mxu0 0.0
    %1501 = vmatprep.subr.mxu0 0.0
    %1502 = vmatpush1.msra.mxu0 0.0
    %1503 = vmatprep.subr.mxu0 0.0
    %1504 = vmatpush1.msra.mxu0 0.0
    %1505 = vmatprep.subr.mxu0 0.0
    %1506 = vmatpush1.msra.mxu0 0.0
    %1507 = vmatprep.subr.mxu0 0.0
    %1508 = vmatpush1.msra.mxu0 0.0
    %1509 = vmatprep.subr.mxu0 0.0
    %1510 = vmatpush1.msra.mxu0 0.0
    %1511 = vmatprep.subr.mxu0 0.0
    %1512 = vmatpush1.msra.mxu0 0.0
    %1513 = vmatprep.subr.mxu0 0.0
    %1514 = vmatpush1.msra.mxu0 0.0
    %1515 = vmatprep.subr.mxu0 0.0
    %1516 = vmatpush1.msra.mxu0 0.0
    %1517 = vmatprep.subr.mxu0 0.0
    %1518 = vmatpush1.msra.mxu0 0.0
    %1519 = vmatprep.subr.mxu0 0.0
    %1520 = vmatpush1.msra.mxu0 0.0
    %1521 = vmatprep.subr.mxu0 0.0
    %1522 = vmatpush1.msra.mxu0 0.0
    %1523 = vmatprep.subr.mxu0 0.0
    %1524 = vmatpush1.msra.mxu0 0.0
    %1525 = vmatprep.subr.mxu0 0.0
    %1526 = vmatpush1.msra.mxu0 0.0
    %1527 = vmatprep.subr.mxu0 0.0
    %1528 = vmatpush1.msra.mxu0 0.0
    %1529 = vmatprep.subr.mxu0 0.0
    %1530 = vmatpush1.msra.mxu0 0.0
    %1531 = vmatprep.subr.mxu0 0.0
    %1532 = vmatpush1.msra.mxu0 0.0
    %1533 = vmatprep.subr.mxu0 0.0
    %1534 = vmatpush1.msra.mxu0 0.0
    %1535 = vmatprep.subr.mxu0 0.0
    %1536 = vmatpush1.msra.mxu0 0.0
    %1537 = vmatprep.subr.mxu0 0.0
    %1538 = vmatpush1.msra.mxu0 0.0
    %1539 = vmatprep.subr.mxu0 0.0
    %1540 = vmatpush1.msra.mxu0 0.0
    %1541 = vmatprep.subr.mxu0 0.0
    %1542 = vmatpush1.msra.mxu0 0.0
    %1543 = vmatprep.mubr.f32.mxu0 0.0
    %1544 = vmatmul.mubr.f32.gmra.mrb[0].mxu0 %v249
    %v1545 = vpop.f32.mrb[0].mxu0
    %v1546 = vadd.f32 %v1478, %v1545
    %v1547 = vpop.f32.mrb[0].mxu0
    %1548 = vmatprep.mubr.f32.mxu0 0.0
    %1549 = vmatmul.mubr.f32.gmra.mrb[0].mxu0 %v252
    %v1550 = vpop.f32.mrb[0].mxu0
    %v1551 = vadd.f32 %v1478, %v1550
    %v1552 = vpop.f32.mrb[0].mxu0
    %1553 = vdwg.mxu0
    %v1555 = vsel %vm497, %v1378, 0
    %v1558 = vsel %vm497, %v1383, 0
    %v1561 = vsel %vm497, %v1462, 0
    %v1564 = vsel %vm497, %v1467, 0
    %1566 = vmatprep.subr.mxu0 0.0
    %1567 = vmatpush1.xpose.msra.mxu0 %v1561
    %1568 = vmatprep.subr.mxu0 0.0
    %1569 = vmatpush1.xpose.msra.mxu0 %v1564
    %1570 = vmatprep.subr.mxu0 0.0
    %1571 = vmatpush1.xpose.msra.mxu0 0.0
    %1572 = vmatprep.subr.mxu0 0.0
    %1573 = vmatpush1.xpose.msra.mxu0 0.0
    %1574 = vmatprep.subr.mxu0 0.0
    %1575 = vmatpush1.xpose.msra.mxu0 0.0
    %1576 = vmatprep.subr.mxu0 0.0
    %1577 = vmatpush1.xpose.msra.mxu0 0.0
    %1578 = vmatprep.subr.mxu0 0.0
    %1579 = vmatpush1.xpose.msra.mxu0 0.0
    %1580 = vmatprep.subr.mxu0 0.0
    %1581 = vmatpush1.xpose.msra.mxu0 0.0
    %1582 = vmatprep.subr.mxu0 0.0
    %1583 = vmatpush1.xpose.msra.mxu0 0.0
    %1584 = vmatprep.subr.mxu0 0.0
    %1585 = vmatpush1.xpose.msra.mxu0 0.0
    %1586 = vmatprep.subr.mxu0 0.0
    %1587 = vmatpush1.xpose.msra.mxu0 0.0
    %1588 = vmatprep.subr.mxu0 0.0
    %1589 = vmatpush1.xpose.msra.mxu0 0.0
    %1590 = vmatprep.subr.mxu0 0.0
    %1591 = vmatpush1.xpose.msra.mxu0 0.0
    %1592 = vmatprep.subr.mxu0 0.0
    %1593 = vmatpush1.xpose.msra.mxu0 0.0
    %1594 = vmatprep.subr.mxu0 0.0
    %1595 = vmatpush1.xpose.msra.mxu0 0.0
    %1596 = vmatprep.subr.mxu0 0.0
    %1597 = vmatpush1.xpose.msra.mxu0 0.0
    %1598 = vmatprep.subr.mxu0 0.0
    %1599 = vmatpush1.xpose.msra.mxu0 0.0
    %1600 = vmatprep.subr.mxu0 0.0
    %1601 = vmatpush1.xpose.msra.mxu0 0.0
    %1602 = vmatprep.subr.mxu0 0.0
    %1603 = vmatpush1.xpose.msra.mxu0 0.0
    %1604 = vmatprep.subr.mxu0 0.0
    %1605 = vmatpush1.xpose.msra.mxu0 0.0
    %1606 = vmatprep.subr.mxu0 0.0
    %1607 = vmatpush1.xpose.msra.mxu0 0.0
    %1608 = vmatprep.subr.mxu0 0.0
    %1609 = vmatpush1.xpose.msra.mxu0 0.0
    %1610 = vmatprep.subr.mxu0 0.0
    %1611 = vmatpush1.xpose.msra.mxu0 0.0
    %1612 = vmatprep.subr.mxu0 0.0
    %1613 = vmatpush1.xpose.msra.mxu0 0.0
    %1614 = vmatprep.subr.mxu0 0.0
    %1615 = vmatpush1.xpose.msra.mxu0 0.0
    %1616 = vmatprep.subr.mxu0 0.0
    %1617 = vmatpush1.xpose.msra.mxu0 0.0
    %1618 = vmatprep.subr.mxu0 0.0
    %1619 = vmatpush1.xpose.msra.mxu0 0.0
    %1620 = vmatprep.subr.mxu0 0.0
    %1621 = vmatpush1.xpose.msra.mxu0 0.0
    %1622 = vmatprep.subr.mxu0 0.0
    %1623 = vmatpush1.xpose.msra.mxu0 0.0
    %1624 = vmatprep.subr.mxu0 0.0
    %1625 = vmatpush1.xpose.msra.mxu0 0.0
    %1626 = vmatprep.subr.mxu0 0.0
    %1627 = vmatpush1.xpose.msra.mxu0 0.0
    %1628 = vmatprep.subr.mxu0 0.0
    %1629 = vmatpush1.xpose.msra.mxu0 0.0
    %1630 = vmatprep.mubr.f32.mxu0 0.0
    %1631 = vmatmul.mubr.f32.gmra.mrb[0].mxu0 %v1555
    %v1632 = vpop.f32.mrb[0].mxu0
    %v1633 = vadd.f32 %v236, %v1632
    %v1634 = vpop.f32.mrb[0].mxu0
    %1635 = vmatprep.mubr.f32.mxu0 0.0
    %1636 = vmatmul.mubr.f32.gmra.mrb[0].mxu0 %v1558
    %v1637 = vpop.f32.mrb[0].mxu0
    %v1638 = vadd.f32 %v237, %v1637
    %v1639 = vpop.f32.mrb[0].mxu0
    %1640 = vdwg.mxu0
    %v1641 = vsel %vm92, %v1633, -inf
    %1642 = vmax.xlane.f32.xlu0 %v1641
    %v1643 = vpop.xlane.xlu0 %1642
    %v1644 = vsel %vm92, %v1638, -inf
    %1645 = vmax.xlane.f32.xlu0 %v1644
    %v1646 = vpop.xlane.xlu0 %1645
    %v1647 = vsub.f32 %v1633, %v1643
    %v1648 = vsub.f32 %v1638, %v1646
    %v1649 = vmul.f32 %v1647, 1.442695
    %v1650 = vpow.pop %v1649
    %v1651 = vmul.f32 %v1648, 1.442695
    %v1652 = vpow.pop %v1651
    %v1653 = vsel %vm92, %v1650, 0.0
    %1654 = vadd.xlane.f32.xlu0 %v1653
    %v1655 = vpop.xlane.xlu0 %1654
    %v1656 = vsel %vm92, %v1652, 0.0
    %1657 = vadd.xlane.f32.xlu0 %v1656
    %v1658 = vpop.xlane.xlu0 %1657
    %v1659 = vrcp.pop %v1655
    %v1660 = vrcp.pop %v1658
    %v1661 = vmul.f32 %v1650, %v1659
    %v1662 = vmul.f32 %v1652, %v1660
    %v1664 = vsel %vm92, %v1661, 0
    %v1667 = vsel %vm92, %v1662, 0
    %1669 = vmatprep.subr.mxu0 0.0
    %1670 = vmatpush1.msra.mxu0 %v1546
    %1671 = vmatprep.subr.mxu0 0.0
    %1672 = vmatpush1.msra.mxu0 %v1551
    %1673 = vmatprep.subr.mxu0 0.0
    %1674 = vmatpush1.msra.mxu0 0.0
    %1675 = vmatprep.subr.mxu0 0.0
    %1676 = vmatpush1.msra.mxu0 0.0
    %1677 = vmatprep.subr.mxu0 0.0
    %1678 = vmatpush1.msra.mxu0 0.0
    %1679 = vmatprep.subr.mxu0 0.0
    %1680 = vmatpush1.msra.mxu0 0.0
    %1681 = vmatprep.subr.mxu0 0.0
    %1682 = vmatpush1.msra.mxu0 0.0
    %1683 = vmatprep.subr.mxu0 0.0
    %1684 = vmatpush1.msra.mxu0 0.0
    %1685 = vmatprep.subr.mxu0 0.0
    %1686 = vmatpush1.msra.mxu0 0.0
    %1687 = vmatprep.subr.mxu0 0.0
    %1688 = vmatpush1.msra.mxu0 0.0
    %1689 = vmatprep.subr.mxu0 0.0
    %1690 = vmatpush1.msra.mxu0 0.0
    %1691 = vmatprep.subr.mxu0 0.0
    %1692 = vmatpush1.msra.mxu0 0.0
    %1693 = vmatprep.subr.mxu0 0.0
    %1694 = vmatpush1.msra.mxu0 0.0
    %1695 = vmatprep.subr.mxu0 0.0
    %1696 = vmatpush1.msra.mxu0 0.0
    %1697 = vmatprep.subr.mxu0 0.0
    %1698 = vmatpush1.msra.mxu0 0.0
    %1699 = vmatprep.subr.mxu0 0.0
    %1700 = vmatpush1.msra.mxu0 0.0
    %1701 = vmatprep.subr.mxu0 0.0
    %1702 = vmatpush1.msra.mxu0 0.0
    %1703 = vmatprep.subr.mxu0 0.0
    %1704 = vmatpush1.msra.mxu0 0.0
    %1705 = vmatprep.subr.mxu0 0.0
    %1706 = vmatpush1.msra.mxu0 0.0
    %1707 = vmatprep.subr.mxu0 0.0
    %1708 = vmatpush1.msra.mxu0 0.0
    %1709 = vmatprep.subr.mxu0 0.0
    %1710 = vmatpush1.msra.mxu0 0.0
    %1711 = vmatprep.subr.mxu0 0.0
    %1712 = vmatpush1.msra.mxu0 0.0
    %1713 = vmatprep.subr.mxu0 0.0
    %1714 = vmatpush1.msra.mxu0 0.0
    %1715 = vmatprep.subr.mxu0 0.0
    %1716 = vmatpush1.msra.mxu0 0.0
    %1717 = vmatprep.subr.mxu0 0.0
    %1718 = vmatpush1.msra.mxu0 0.0
    %1719 = vmatprep.subr.mxu0 0.0
    %1720 = vmatpush1.msra.mxu0 0.0
    %1721 = vmatprep.subr.mxu0 0.0
    %1722 = vmatpush1.msra.mxu0 0.0
    %1723 = vmatprep.subr.mxu0 0.0
    %1724 = vmatpush1.msra.mxu0 0.0
    %1725 = vmatprep.subr.mxu0 0.0
    %1726 = vmatpush1.msra.mxu0 0.0
    %1727 = vmatprep.subr.mxu0 0.0
    %1728 = vmatpush1.msra.mxu0 0.0
    %1729 = vmatprep.subr.mxu0 0.0
    %1730 = vmatpush1.msra.mxu0 0.0
    %1731 = vmatprep.subr.mxu0 0.0
    %1732 = vmatpush1.msra.mxu0 0.0
    %1733 = vmatprep.mubr.f32.mxu0 0.0
    %1734 = vmatmul.mubr.f32.gmra.mrb[0].mxu0 %v1664
    %v1735 = vpop.f32.mrb[0].mxu0
    %v1736 = vadd.f32 0.0, %v1735
    %v1737 = vpop.f32.mrb[0].mxu0
    %1738 = vmatprep.mubr.f32.mxu0 0.0
    %1739 = vmatmul.mubr.f32.gmra.mrb[0].mxu0 %v1667
    %v1740 = vpop.f32.mrb[0].mxu0
    %v1741 = vadd.f32 0.0, %v1740
    %v1742 = vpop.f32.mrb[0].mxu0
    %1743 = vdwg.mxu0
    %v1744 = vld [vmem:[#allocation2 + $0x200] sm:$0xff]
    %v1746 = vsel %vm497, %v1736, 0
    %v1749 = vsel %vm497, %v1741, 0
    %1751 = vmatprep.subr.mxu0 0.0
    %1752 = vmatpush1.msra.mxu0 %v1744
    %1753 = vmatprep.subr.mxu0 0.0
    %1754 = vmatpush1.msra.mxu0 0.0
    %1755 = vmatprep.subr.mxu0 0.0
    %1756 = vmatpush1.msra.mxu0 0.0
    %1757 = vmatprep.subr.mxu0 0.0
    %1758 = vmatpush1.msra.mxu0 0.0
    %1759 = vmatprep.subr.mxu0 0.0
    %1760 = vmatpush1.msra.mxu0 0.0
    %1761 = vmatprep.subr.mxu0 0.0
    %1762 = vmatpush1.msra.mxu0 0.0
    %1763 = vmatprep.subr.mxu0 0.0
    %1764 = vmatpush1.msra.mxu0 0.0
    %1765 = vmatprep.subr.mxu0 0.0
    %1766 = vmatpush1.msra.mxu0 0.0
    %1767 = vmatprep.subr.mxu0 0.0
    %1768 = vmatpush1.msra.mxu0 0.0
    %1769 = vmatprep.subr.mxu0 0.0
    %1770 = vmatpush1.msra.mxu0 0.0
    %1771 = vmatprep.subr.mxu0 0.0
    %1772 = vmatpush1.msra.mxu0 0.0
    %1773 = vmatprep.subr.mxu0 0.0
    %1774 = vmatpush1.msra.mxu0 0.0
    %1775 = vmatprep.subr.mxu0 0.0
    %1776 = vmatpush1.msra.mxu0 0.0
    %1777 = vmatprep.subr.mxu0 0.0
    %1778 = vmatpush1.msra.mxu0 0.0
    %1779 = vmatprep.subr.mxu0 0.0
    %1780 = vmatpush1.msra.mxu0 0.0
    %1781 = vmatprep.subr.mxu0 0.0
    %1782 = vmatpush1.msra.mxu0 0.0
    %1783 = vmatprep.subr.mxu0 0.0
    %1784 = vmatpush1.msra.mxu0 0.0
    %1785 = vmatprep.subr.mxu0 0.0
    %1786 = vmatpush1.msra.mxu0 0.0
    %1787 = vmatprep.subr.mxu0 0.0
    %1788 = vmatpush1.msra.mxu0 0.0
    %1789 = vmatprep.subr.mxu0 0.0
    %1790 = vmatpush1.msra.mxu0 0.0
    %1791 = vmatprep.subr.mxu0 0.0
    %1792 = vmatpush1.msra.mxu0 0.0
    %1793 = vmatprep.subr.mxu0 0.0
    %1794 = vmatpush1.msra.mxu0 0.0
    %1795 = vmatprep.subr.mxu0 0.0
    %1796 = vmatpush1.msra.mxu0 0.0
    %1797 = vmatprep.subr.mxu0 0.0
    %1798 = vmatpush1.msra.mxu0 0.0
    %1799 = vmatprep.subr.mxu0 0.0
    %1800 = vmatpush1.msra.mxu0 0.0
    %1801 = vmatprep.subr.mxu0 0.0
    %1802 = vmatpush1.msra.mxu0 0.0
    %1803 = vmatprep.subr.mxu0 0.0
    %1804 = vmatpush1.msra.mxu0 0.0
    %1805 = vmatprep.subr.mxu0 0.0
    %1806 = vmatpush1.msra.mxu0 0.0
    %1807 = vmatprep.subr.mxu0 0.0
    %1808 = vmatpush1.msra.mxu0 0.0
    %1809 = vmatprep.subr.mxu0 0.0
    %1810 = vmatpush1.msra.mxu0 0.0
    %1811 = vmatprep.subr.mxu0 0.0
    %1812 = vmatpush1.msra.mxu0 0.0
    %1813 = vmatprep.subr.mxu0 0.0
    %1814 = vmatpush1.msra.mxu0 0.0
    %1815 = vmatprep.mubr.f32.mxu0 0.0
    %1816 = vmatmul.mubr.f32.gmra.mrb[0].mxu0 %v1746
    %v1817 = vpop.f32.mrb[0].mxu0
    %v1818 = vadd.f32 0.0, %v1817
    %v1819 = vpop.f32.mrb[0].mxu0
    %1820 = vmatprep.mubr.f32.mxu0 0.0
    %1821 = vmatmul.mubr.f32.gmra.mrb[0].mxu0 %v1749
    %v1822 = vpop.f32.mrb[0].mxu0
    %v1823 = vadd.f32 0.0, %v1822
    %v1824 = vpop.f32.mrb[0].mxu0
    %1825 = vdwg.mxu0
    %v1826 = vadd.f32 %v1300, %v1818
    %v1827 = vadd.f32 %v1301, %v1823
    %v1828 = vld [vmem:[#allocation2 + $0x220] sm:$0xff]
    %v1829 = vld [vmem:[#allocation2 + $0x228] sm:$0xff]
    %v1830 = vld [vmem:[#allocation2 + $0x230] sm:$0xff]
    %v1831 = vld [vmem:[#allocation2 + $0x238] sm:$0xff]
    %v1832 = vld [vmem:[#allocation2 + $0x288] sm:$0x1]
    %v1833 = vlaneseq
    %v1834 = vshrl.u32 %v1833, 7
    %v1835 = vsub.s32 0, %v1834
    %v1836 = vrot.slane %v1832, %v1835
    %1837 = vmatprep.subr.mxu0 0.0
    %1838 = vmatpush1.msra.mxu0 %v1828
    %1839 = vmatprep.subr.mxu0 0.0
    %1840 = vmatpush1.msra.mxu0 %v1829
    %1841 = vmatprep.subr.mxu0 0.0
    %1842 = vmatpush1.msra.mxu0 %v1830
    %1843 = vmatprep.subr.mxu0 0.0
    %1844 = vmatpush1.msra.mxu0 %v1831
    %1845 = vmatprep.subr.mxu0 0.0
    %1846 = vmatpush1.msra.mxu0 0.0
    %1847 = vmatprep.subr.mxu0 0.0
    %1848 = vmatpush1.msra.mxu0 0.0
    %1849 = vmatprep.subr.mxu0 0.0
    %1850 = vmatpush1.msra.mxu0 0.0
    %1851 = vmatprep.subr.mxu0 0.0
    %1852 = vmatpush1.msra.mxu0 0.0
    %1853 = vmatprep.subr.mxu0 0.0
    %1854 = vmatpush1.msra.mxu0 0.0
    %1855 = vmatprep.subr.mxu0 0.0
    %1856 = vmatpush1.msra.mxu0 0.0
    %1857 = vmatprep.subr.mxu0 0.0
    %1858 = vmatpush1.msra.mxu0 0.0
    %1859 = vmatprep.subr.mxu0 0.0
    %1860 = vmatpush1.msra.mxu0 0.0
    %1861 = vmatprep.subr.mxu0 0.0
    %1862 = vmatpush1.msra.mxu0 0.0
    %1863 = vmatprep.subr.mxu0 0.0
    %1864 = vmatpush1.msra.mxu0 0.0
    %1865 = vmatprep.subr.mxu0 0.0
    %1866 = vmatpush1.msra.mxu0 0.0
    %1867 = vmatprep.subr.mxu0 0.0
    %1868 = vmatpush1.msra.mxu0 0.0
    %1869 = vmatprep.subr.mxu0 0.0
    %1870 = vmatpush1.msra.mxu0 0.0
    %1871 = vmatprep.subr.mxu0 0.0
    %1872 = vmatpush1.msra.mxu0 0.0
    %1873 = vmatprep.subr.mxu0 0.0
    %1874 = vmatpush1.msra.mxu0 0.0
    %1875 = vmatprep.subr.mxu0 0.0
    %1876 = vmatpush1.msra.mxu0 0.0
    %1877 = vmatprep.subr.mxu0 0.0
    %1878 = vmatpush1.msra.mxu0 0.0
    %1879 = vmatprep.subr.mxu0 0.0
    %1880 = vmatpush1.msra.mxu0 0.0
    %1881 = vmatprep.subr.mxu0 0.0
    %1882 = vmatpush1.msra.mxu0 0.0
    %1883 = vmatprep.subr.mxu0 0.0
    %1884 = vmatpush1.msra.mxu0 0.0
    %1885 = vmatprep.subr.mxu0 0.0
    %1886 = vmatpush1.msra.mxu0 0.0
    %1887 = vmatprep.subr.mxu0 0.0
    %1888 = vmatpush1.msra.mxu0 0.0
    %1889 = vmatprep.subr.mxu0 0.0
    %1890 = vmatpush1.msra.mxu0 0.0
    %1891 = vmatprep.subr.mxu0 0.0
    %1892 = vmatpush1.msra.mxu0 0.0
    %1893 = vmatprep.subr.mxu0 0.0
    %1894 = vmatpush1.msra.mxu0 0.0
    %1895 = vmatprep.subr.mxu0 0.0
    %1896 = vmatpush1.msra.mxu0 0.0
    %1897 = vmatprep.subr.mxu0 0.0
    %1898 = vmatpush1.msra.mxu0 0.0
    %1899 = vmatprep.subr.mxu0 0.0
    %1900 = vmatpush1.msra.mxu0 0.0
    %1901 = vmatprep.mubr.f32.mxu0 0.0
    %1902 = vmatmul.mubr.f32.gmra.mrb[0].mxu0 %v249
    %v1903 = vpop.f32.mrb[0].mxu0
    %v1904 = vadd.f32 %v1836, %v1903
    %v1905 = vpop.f32.mrb[0].mxu0
    %1906 = vmatprep.mubr.f32.mxu0 0.0
    %1907 = vmatmul.mubr.f32.gmra.mrb[0].mxu0 %v252
    %v1908 = vpop.f32.mrb[0].mxu0
    %v1909 = vadd.f32 %v1836, %v1908
    %v1910 = vpop.f32.mrb[0].mxu0
    %1911 = vdwg.mxu0
    %v1912 = vld [vmem:[#allocation2 + $0x240] sm:$0xff]
    %v1913 = vld [vmem:[#allocation2 + $0x248] sm:$0xff]
    %v1914 = vld [vmem:[#allocation2 + $0x250] sm:$0xff]
    %v1915 = vld [vmem:[#allocation2 + $0x258] sm:$0xff]
    %v1916 = vld [vmem:[#allocation2 + $0x290] sm:$0x1]
    %v1917 = vlaneseq
    %v1918 = vshrl.u32 %v1917, 7
    %v1919 = vsub.s32 0, %v1918
    %v1920 = vrot.slane %v1916, %v1919
    %1921 = vmatprep.subr.mxu0 0.0
    %1922 = vmatpush1.msra.mxu0 %v1912
    %1923 = vmatprep.subr.mxu0 0.0
    %1924 = vmatpush1.msra.mxu0 %v1913
    %1925 = vmatprep.subr.mxu0 0.0
    %1926 = vmatpush1.msra.mxu0 %v1914
    %1927 = vmatprep.subr.mxu0 0.0
    %1928 = vmatpush1.msra.mxu0 %v1915
    %1929 = vmatprep.subr.mxu0 0.0
    %1930 = vmatpush1.msra.mxu0 0.0
    %1931 = vmatprep.subr.mxu0 0.0
    %1932 = vmatpush1.msra.mxu0 0.0
    %1933 = vmatprep.subr.mxu0 0.0
    %1934 = vmatpush1.msra.mxu0 0.0
    %1935 = vmatprep.subr.mxu0 0.0
    %1936 = vmatpush1.msra.mxu0 0.0
    %1937 = vmatprep.subr.mxu0 0.0
    %1938 = vmatpush1.msra.mxu0 0.0
    %1939 = vmatprep.subr.mxu0 0.0
    %1940 = vmatpush1.msra.mxu0 0.0
    %1941 = vmatprep.subr.mxu0 0.0
    %1942 = vmatpush1.msra.mxu0 0.0
    %1943 = vmatprep.subr.mxu0 0.0
    %1944 = vmatpush1.msra.mxu0 0.0
    %1945 = vmatprep.subr.mxu0 0.0
    %1946 = vmatpush1.msra.mxu0 0.0
    %1947 = vmatprep.subr.mxu0 0.0
    %1948 = vmatpush1.msra.mxu0 0.0
    %1949 = vmatprep.subr.mxu0 0.0
    %1950 = vmatpush1.msra.mxu0 0.0
    %1951 = vmatprep.subr.mxu0 0.0
    %1952 = vmatpush1.msra.mxu0 0.0
    %1953 = vmatprep.subr.mxu0 0.0
    %1954 = vmatpush1.msra.mxu0 0.0
    %1955 = vmatprep.subr.mxu0 0.0
    %1956 = vmatpush1.msra.mxu0 0.0
    %1957 = vmatprep.subr.mxu0 0.0
    %1958 = vmatpush1.msra.mxu0 0.0
    %1959 = vmatprep.subr.mxu0 0.0
    %1960 = vmatpush1.msra.mxu0 0.0
    %1961 = vmatprep.subr.mxu0 0.0
    %1962 = vmatpush1.msra.mxu0 0.0
    %1963 = vmatprep.subr.mxu0 0.0
    %1964 = vmatpush1.msra.mxu0 0.0
    %1965 = vmatprep.subr.mxu0 0.0
    %1966 = vmatpush1.msra.mxu0 0.0
    %1967 = vmatprep.subr.mxu0 0.0
    %1968 = vmatpush1.msra.mxu0 0.0
    %1969 = vmatprep.subr.mxu0 0.0
    %1970 = vmatpush1.msra.mxu0 0.0
    %1971 = vmatprep.subr.mxu0 0.0
    %1972 = vmatpush1.msra.mxu0 0.0
    %1973 = vmatprep.subr.mxu0 0.0
    %1974 = vmatpush1.msra.mxu0 0.0
    %1975 = vmatprep.subr.mxu0 0.0
    %1976 = vmatpush1.msra.mxu0 0.0
    %1977 = vmatprep.subr.mxu0 0.0
    %1978 = vmatpush1.msra.mxu0 0.0
    %1979 = vmatprep.subr.mxu0 0.0
    %1980 = vmatpush1.msra.mxu0 0.0
    %1981 = vmatprep.subr.mxu0 0.0
    %1982 = vmatpush1.msra.mxu0 0.0
    %1983 = vmatprep.subr.mxu0 0.0
    %1984 = vmatpush1.msra.mxu0 0.0
    %1985 = vmatprep.mubr.f32.mxu0 0.0
    %1986 = vmatmul.mubr.f32.gmra.mrb[0].mxu0 %v249
    %v1987 = vpop.f32.mrb[0].mxu0
    %v1988 = vadd.f32 %v1920, %v1987
    %v1989 = vpop.f32.mrb[0].mxu0
    %1990 = vmatprep.mubr.f32.mxu0 0.0
    %1991 = vmatmul.mubr.f32.gmra.mrb[0].mxu0 %v252
    %v1992 = vpop.f32.mrb[0].mxu0
    %v1993 = vadd.f32 %v1920, %v1992
    %v1994 = vpop.f32.mrb[0].mxu0
    %1995 = vdwg.mxu0
    %v1996 = vld [vmem:[#allocation2 + $0x260] sm:$0xff]
    %v1997 = vld [vmem:[#allocation2 + $0x268] sm:$0xff]
    %v1998 = vld [vmem:[#allocation2 + $0x270] sm:$0xff]
    %v1999 = vld [vmem:[#allocation2 + $0x278] sm:$0xff]
    %v2000 = vld [vmem:[#allocation2 + $0x298] sm:$0x1]
    %v2001 = vlaneseq
    %v2002 = vshrl.u32 %v2001, 7
    %v2003 = vsub.s32 0, %v2002
    %v2004 = vrot.slane %v2000, %v2003
    %2005 = vmatprep.subr.mxu0 0.0
    %2006 = vmatpush1.msra.mxu0 %v1996
    %2007 = vmatprep.subr.mxu0 0.0
    %2008 = vmatpush1.msra.mxu0 %v1997
    %2009 = vmatprep.subr.mxu0 0.0
    %2010 = vmatpush1.msra.mxu0 %v1998
    %2011 = vmatprep.subr.mxu0 0.0
    %2012 = vmatpush1.msra.mxu0 %v1999
    %2013 = vmatprep.subr.mxu0 0.0
    %2014 = vmatpush1.msra.mxu0 0.0
    %2015 = vmatprep.subr.mxu0 0.0
    %2016 = vmatpush1.msra.mxu0 0.0
    %2017 = vmatprep.subr.mxu0 0.0
    %2018 = vmatpush1.msra.mxu0 0.0
    %2019 = vmatprep.subr.mxu0 0.0
    %2020 = vmatpush1.msra.mxu0 0.0
    %2021 = vmatprep.subr.mxu0 0.0
    %2022 = vmatpush1.msra.mxu0 0.0
    %2023 = vmatprep.subr.mxu0 0.0
    %2024 = vmatpush1.msra.mxu0 0.0
    %2025 = vmatprep.subr.mxu0 0.0
    %2026 = vmatpush1.msra.mxu0 0.0
    %2027 = vmatprep.subr.mxu0 0.0
    %2028 = vmatpush1.msra.mxu0 0.0
    %2029 = vmatprep.subr.mxu0 0.0
    %2030 = vmatpush1.msra.mxu0 0.0
    %2031 = vmatprep.subr.mxu0 0.0
    %2032 = vmatpush1.msra.mxu0 0.0
    %2033 = vmatprep.subr.mxu0 0.0
    %2034 = vmatpush1.msra.mxu0 0.0
    %2035 = vmatprep.subr.mxu0 0.0
    %2036 = vmatpush1.msra.mxu0 0.0
    %2037 = vmatprep.subr.mxu0 0.0
    %2038 = vmatpush1.msra.mxu0 0.0
    %2039 = vmatprep.subr.mxu0 0.0
    %2040 = vmatpush1.msra.mxu0 0.0
    %2041 = vmatprep.subr.mxu0 0.0
    %2042 = vmatpush1.msra.mxu0 0.0
    %2043 = vmatprep.subr.mxu0 0.0
    %2044 = vmatpush1.msra.mxu0 0.0
    %2045 = vmatprep.subr.mxu0 0.0
    %2046 = vmatpush1.msra.mxu0 0.0
    %2047 = vmatprep.subr.mxu0 0.0
    %2048 = vmatpush1.msra.mxu0 0.0
    %2049 = vmatprep.subr.mxu0 0.0
    %2050 = vmatpush1.msra.mxu0 0.0
    %2051 = vmatprep.subr.mxu0 0.0
    %2052 = vmatpush1.msra.mxu0 0.0
    %2053 = vmatprep.subr.mxu0 0.0
    %2054 = vmatpush1.msra.mxu0 0.0
    %2055 = vmatprep.subr.mxu0 0.0
    %2056 = vmatpush1.msra.mxu0 0.0
    %2057 = vmatprep.subr.mxu0 0.0
    %2058 = vmatpush1.msra.mxu0 0.0
    %2059 = vmatprep.subr.mxu0 0.0
    %2060 = vmatpush1.msra.mxu0 0.0
    %2061 = vmatprep.subr.mxu0 0.0
    %2062 = vmatpush1.msra.mxu0 0.0
    %2063 = vmatprep.subr.mxu0 0.0
    %2064 = vmatpush1.msra.mxu0 0.0
    %2065 = vmatprep.subr.mxu0 0.0
    %2066 = vmatpush1.msra.mxu0 0.0
    %2067 = vmatprep.subr.mxu0 0.0
    %2068 = vmatpush1.msra.mxu0 0.0
    %2069 = vmatprep.mubr.f32.mxu0 0.0
    %2070 = vmatmul.mubr.f32.gmra.mrb[0].mxu0 %v249
    %v2071 = vpop.f32.mrb[0].mxu0
    %v2072 = vadd.f32 %v2004, %v2071
    %v2073 = vpop.f32.mrb[0].mxu0
    %2074 = vmatprep.mubr.f32.mxu0 0.0
    %2075 = vmatmul.mubr.f32.gmra.mrb[0].mxu0 %v252
    %v2076 = vpop.f32.mrb[0].mxu0
    %v2077 = vadd.f32 %v2004, %v2076
    %v2078 = vpop.f32.mrb[0].mxu0
    %2079 = vdwg.mxu0
    %v2081 = vsel %vm497, %v1904, 0
    %v2084 = vsel %vm497, %v1909, 0
    %v2087 = vsel %vm497, %v1988, 0
    %v2090 = vsel %vm497, %v1993, 0
    %2092 = vmatprep.subr.mxu0 0.0
    %2093 = vmatpush1.xpose.msra.mxu0 %v2087
    %2094 = vmatprep.subr.mxu0 0.0
    %2095 = vmatpush1.xpose.msra.mxu0 %v2090
    %2096 = vmatprep.subr.mxu0 0.0
    %2097 = vmatpush1.xpose.msra.mxu0 0.0
    %2098 = vmatprep.subr.mxu0 0.0
    %2099 = vmatpush1.xpose.msra.mxu0 0.0
    %2100 = vmatprep.subr.mxu0 0.0
    %2101 = vmatpush1.xpose.msra.mxu0 0.0
    %2102 = vmatprep.subr.mxu0 0.0
    %2103 = vmatpush1.xpose.msra.mxu0 0.0
    %2104 = vmatprep.subr.mxu0 0.0
    %2105 = vmatpush1.xpose.msra.mxu0 0.0
    %2106 = vmatprep.subr.mxu0 0.0
    %2107 = vmatpush1.xpose.msra.mxu0 0.0
    %2108 = vmatprep.subr.mxu0 0.0
    %2109 = vmatpush1.xpose.msra.mxu0 0.0
    %2110 = vmatprep.subr.mxu0 0.0
    %2111 = vmatpush1.xpose.msra.mxu0 0.0
    %2112 = vmatprep.subr.mxu0 0.0
    %2113 = vmatpush1.xpose.msra.mxu0 0.0
    %2114 = vmatprep.subr.mxu0 0.0
    %2115 = vmatpush1.xpose.msra.mxu0 0.0
    %2116 = vmatprep.subr.mxu0 0.0
    %2117 = vmatpush1.xpose.msra.mxu0 0.0
    %2118 = vmatprep.subr.mxu0 0.0
    %2119 = vmatpush1.xpose.msra.mxu0 0.0
    %2120 = vmatprep.subr.mxu0 0.0
    %2121 = vmatpush1.xpose.msra.mxu0 0.0
    %2122 = vmatprep.subr.mxu0 0.0
    %2123 = vmatpush1.xpose.msra.mxu0 0.0
    %2124 = vmatprep.subr.mxu0 0.0
    %2125 = vmatpush1.xpose.msra.mxu0 0.0
    %2126 = vmatprep.subr.mxu0 0.0
    %2127 = vmatpush1.xpose.msra.mxu0 0.0
    %2128 = vmatprep.subr.mxu0 0.0
    %2129 = vmatpush1.xpose.msra.mxu0 0.0
    %2130 = vmatprep.subr.mxu0 0.0
    %2131 = vmatpush1.xpose.msra.mxu0 0.0
    %2132 = vmatprep.subr.mxu0 0.0
    %2133 = vmatpush1.xpose.msra.mxu0 0.0
    %2134 = vmatprep.subr.mxu0 0.0
    %2135 = vmatpush1.xpose.msra.mxu0 0.0
    %2136 = vmatprep.subr.mxu0 0.0
    %2137 = vmatpush1.xpose.msra.mxu0 0.0
    %2138 = vmatprep.subr.mxu0 0.0
    %2139 = vmatpush1.xpose.msra.mxu0 0.0
    %2140 = vmatprep.subr.mxu0 0.0
    %2141 = vmatpush1.xpose.msra.mxu0 0.0
    %2142 = vmatprep.subr.mxu0 0.0
    %2143 = vmatpush1.xpose.msra.mxu0 0.0
    %2144 = vmatprep.subr.mxu0 0.0
    %2145 = vmatpush1.xpose.msra.mxu0 0.0
    %2146 = vmatprep.subr.mxu0 0.0
    %2147 = vmatpush1.xpose.msra.mxu0 0.0
    %2148 = vmatprep.subr.mxu0 0.0
    %2149 = vmatpush1.xpose.msra.mxu0 0.0
    %2150 = vmatprep.subr.mxu0 0.0
    %2151 = vmatpush1.xpose.msra.mxu0 0.0
    %2152 = vmatprep.subr.mxu0 0.0
    %2153 = vmatpush1.xpose.msra.mxu0 0.0
    %2154 = vmatprep.subr.mxu0 0.0
    %2155 = vmatpush1.xpose.msra.mxu0 0.0
    %2156 = vmatprep.mubr.f32.mxu0 0.0
    %2157 = vmatmul.mubr.f32.gmra.mrb[0].mxu0 %v2081
    %v2158 = vpop.f32.mrb[0].mxu0
    %v2159 = vadd.f32 %v236, %v2158
    %v2160 = vpop.f32.mrb[0].mxu0
    %2161 = vmatprep.mubr.f32.mxu0 0.0
    %2162 = vmatmul.mubr.f32.gmra.mrb[0].mxu0 %v2084
    %v2163 = vpop.f32.mrb[0].mxu0
    %v2164 = vadd.f32 %v237, %v2163
    %v2165 = vpop.f32.mrb[0].mxu0
    %2166 = vdwg.mxu0
    %v2167 = vsel %vm92, %v2159, -inf
    %2168 = vmax.xlane.f32.xlu0 %v2167
    %v2169 = vpop.xlane.xlu0 %2168
    %v2170 = vsel %vm92, %v2164, -inf
    %2171 = vmax.xlane.f32.xlu0 %v2170
    %v2172 = vpop.xlane.xlu0 %2171
    %v2173 = vsub.f32 %v2159, %v2169
    %v2174 = vsub.f32 %v2164, %v2172
    %v2175 = vmul.f32 %v2173, 1.442695
    %v2176 = vpow.pop %v2175
    %v2177 = vmul.f32 %v2174, 1.442695
    %v2178 = vpow.pop %v2177
    %v2179 = vsel %vm92, %v2176, 0.0
    %2180 = vadd.xlane.f32.xlu0 %v2179
    %v2181 = vpop.xlane.xlu0 %2180
    %v2182 = vsel %vm92, %v2178, 0.0
    %2183 = vadd.xlane.f32.xlu0 %v2182
    %v2184 = vpop.xlane.xlu0 %2183
    %v2185 = vrcp.pop %v2181
    %v2186 = vrcp.pop %v2184
    %v2187 = vmul.f32 %v2176, %v2185
    %v2188 = vmul.f32 %v2178, %v2186
    %v2190 = vsel %vm92, %v2187, 0
    %v2193 = vsel %vm92, %v2188, 0
    %2195 = vmatprep.subr.mxu0 0.0
    %2196 = vmatpush1.msra.mxu0 %v2072
    %2197 = vmatprep.subr.mxu0 0.0
    %2198 = vmatpush1.msra.mxu0 %v2077
    %2199 = vmatprep.subr.mxu0 0.0
    %2200 = vmatpush1.msra.mxu0 0.0
    %2201 = vmatprep.subr.mxu0 0.0
    %2202 = vmatpush1.msra.mxu0 0.0
    %2203 = vmatprep.subr.mxu0 0.0
    %2204 = vmatpush1.msra.mxu0 0.0
    %2205 = vmatprep.subr.mxu0 0.0
    %2206 = vmatpush1.msra.mxu0 0.0
    %2207 = vmatprep.subr.mxu0 0.0
    %2208 = vmatpush1.msra.mxu0 0.0
    %2209 = vmatprep.subr.mxu0 0.0
    %2210 = vmatpush1.msra.mxu0 0.0
    %2211 = vmatprep.subr.mxu0 0.0
    %2212 = vmatpush1.msra.mxu0 0.0
    %2213 = vmatprep.subr.mxu0 0.0
    %2214 = vmatpush1.msra.mxu0 0.0
    %2215 = vmatprep.subr.mxu0 0.0
    %2216 = vmatpush1.msra.mxu0 0.0
    %2217 = vmatprep.subr.mxu0 0.0
    %2218 = vmatpush1.msra.mxu0 0.0
    %2219 = vmatprep.subr.mxu0 0.0
    %2220 = vmatpush1.msra.mxu0 0.0
    %2221 = vmatprep.subr.mxu0 0.0
    %2222 = vmatpush1.msra.mxu0 0.0
    %2223 = vmatprep.subr.mxu0 0.0
    %2224 = vmatpush1.msra.mxu0 0.0
    %2225 = vmatprep.subr.mxu0 0.0
    %2226 = vmatpush1.msra.mxu0 0.0
    %2227 = vmatprep.subr.mxu0 0.0
    %2228 = vmatpush1.msra.mxu0 0.0
    %2229 = vmatprep.subr.mxu0 0.0
    %2230 = vmatpush1.msra.mxu0 0.0
    %2231 = vmatprep.subr.mxu0 0.0
    %2232 = vmatpush1.msra.mxu0 0.0
    %2233 = vmatprep.subr.mxu0 0.0
    %2234 = vmatpush1.msra.mxu0 0.0
    %2235 = vmatprep.subr.mxu0 0.0
    %2236 = vmatpush1.msra.mxu0 0.0
    %2237 = vmatprep.subr.mxu0 0.0
    %2238 = vmatpush1.msra.mxu0 0.0
    %2239 = vmatprep.subr.mxu0 0.0
    %2240 = vmatpush1.msra.mxu0 0.0
    %2241 = vmatprep.subr.mxu0 0.0
    %2242 = vmatpush1.msra.mxu0 0.0
    %2243 = vmatprep.subr.mxu0 0.0
    %2244 = vmatpush1.msra.mxu0 0.0
    %2245 = vmatprep.subr.mxu0 0.0
    %2246 = vmatpush1.msra.mxu0 0.0
    %2247 = vmatprep.subr.mxu0 0.0
    %2248 = vmatpush1.msra.mxu0 0.0
    %2249 = vmatprep.subr.mxu0 0.0
    %2250 = vmatpush1.msra.mxu0 0.0
    %2251 = vmatprep.subr.mxu0 0.0
    %2252 = vmatpush1.msra.mxu0 0.0
    %2253 = vmatprep.subr.mxu0 0.0
    %2254 = vmatpush1.msra.mxu0 0.0
    %2255 = vmatprep.subr.mxu0 0.0
    %2256 = vmatpush1.msra.mxu0 0.0
    %2257 = vmatprep.subr.mxu0 0.0
    %2258 = vmatpush1.msra.mxu0 0.0
    %2259 = vmatprep.mubr.f32.mxu0 0.0
    %2260 = vmatmul.mubr.f32.gmra.mrb[0].mxu0 %v2190
    %v2261 = vpop.f32.mrb[0].mxu0
    %v2262 = vadd.f32 0.0, %v2261
    %v2263 = vpop.f32.mrb[0].mxu0
    %2264 = vmatprep.mubr.f32.mxu0 0.0
    %2265 = vmatmul.mubr.f32.gmra.mrb[0].mxu0 %v2193
    %v2266 = vpop.f32.mrb[0].mxu0
    %v2267 = vadd.f32 0.0, %v2266
    %v2268 = vpop.f32.mrb[0].mxu0
    %2269 = vdwg.mxu0
    %v2270 = vld [vmem:[#allocation2 + $0x280] sm:$0xff]
    %v2272 = vsel %vm497, %v2262, 0
    %v2275 = vsel %vm497, %v2267, 0
    %2277 = vmatprep.subr.mxu0 0.0
    %2278 = vmatpush1.msra.mxu0 %v2270
    %2279 = vmatprep.subr.mxu0 0.0
    %2280 = vmatpush1.msra.mxu0 0.0
    %2281 = vmatprep.subr.mxu0 0.0
    %2282 = vmatpush1.msra.mxu0 0.0
    %2283 = vmatprep.subr.mxu0 0.0
    %2284 = vmatpush1.msra.mxu0 0.0
    %2285 = vmatprep.subr.mxu0 0.0
    %2286 = vmatpush1.msra.mxu0 0.0
    %2287 = vmatprep.subr.mxu0 0.0
    %2288 = vmatpush1.msra.mxu0 0.0
    %2289 = vmatprep.subr.mxu0 0.0
    %2290 = vmatpush1.msra.mxu0 0.0
    %2291 = vmatprep.subr.mxu0 0.0
    %2292 = vmatpush1.msra.mxu0 0.0
    %2293 = vmatprep.subr.mxu0 0.0
    %2294 = vmatpush1.msra.mxu0 0.0
    %2295 = vmatprep.subr.mxu0 0.0
    %2296 = vmatpush1.msra.mxu0 0.0
    %2297 = vmatprep.subr.mxu0 0.0
    %2298 = vmatpush1.msra.mxu0 0.0
    %2299 = vmatprep.subr.mxu0 0.0
    %2300 = vmatpush1.msra.mxu0 0.0
    %2301 = vmatprep.subr.mxu0 0.0
    %2302 = vmatpush1.msra.mxu0 0.0
    %2303 = vmatprep.subr.mxu0 0.0
    %2304 = vmatpush1.msra.mxu0 0.0
    %2305 = vmatprep.subr.mxu0 0.0
    %2306 = vmatpush1.msra.mxu0 0.0
    %2307 = vmatprep.subr.mxu0 0.0
    %2308 = vmatpush1.msra.mxu0 0.0
    %2309 = vmatprep.subr.mxu0 0.0
    %2310 = vmatpush1.msra.mxu0 0.0
    %2311 = vmatprep.subr.mxu0 0.0
    %2312 = vmatpush1.msra.mxu0 0.0
    %2313 = vmatprep.subr.mxu0 0.0
    %2314 = vmatpush1.msra.mxu0 0.0
    %2315 = vmatprep.subr.mxu0 0.0
    %2316 = vmatpush1.msra.mxu0 0.0
    %2317 = vmatprep.subr.mxu0 0.0
    %2318 = vmatpush1.msra.mxu0 0.0
    %2319 = vmatprep.subr.mxu0 0.0
    %2320 = vmatpush1.msra.mxu0 0.0
    %2321 = vmatprep.subr.mxu0 0.0
    %2322 = vmatpush1.msra.mxu0 0.0
    %2323 = vmatprep.subr.mxu0 0.0
    %2324 = vmatpush1.msra.mxu0 0.0
    %2325 = vmatprep.subr.mxu0 0.0
    %2326 = vmatpush1.msra.mxu0 0.0
    %2327 = vmatprep.subr.mxu0 0.0
    %2328 = vmatpush1.msra.mxu0 0.0
    %2329 = vmatprep.subr.mxu0 0.0
    %2330 = vmatpush1.msra.mxu0 0.0
    %2331 = vmatprep.subr.mxu0 0.0
    %2332 = vmatpush1.msra.mxu0 0.0
    %2333 = vmatprep.subr.mxu0 0.0
    %2334 = vmatpush1.msra.mxu0 0.0
    %2335 = vmatprep.subr.mxu0 0.0
    %2336 = vmatpush1.msra.mxu0 0.0
    %2337 = vmatprep.subr.mxu0 0.0
    %2338 = vmatpush1.msra.mxu0 0.0
    %2339 = vmatprep.subr.mxu0 0.0
    %2340 = vmatpush1.msra.mxu0 0.0
    %2341 = vmatprep.mubr.f32.mxu0 0.0
    %2342 = vmatmul.mubr.f32.gmra.mrb[0].mxu0 %v2272
    %v2343 = vpop.f32.mrb[0].mxu0
    %v2344 = vadd.f32 0.0, %v2343
    %v2345 = vpop.f32.mrb[0].mxu0
    %2346 = vmatprep.mubr.f32.mxu0 0.0
    %2347 = vmatmul.mubr.f32.gmra.mrb[0].mxu0 %v2275
    %v2348 = vpop.f32.mrb[0].mxu0
    %v2349 = vadd.f32 0.0, %v2348
    %v2350 = vpop.f32.mrb[0].mxu0
    %2351 = vdwg.mxu0
    %v2352 = vadd.f32 %v1826, %v2344
    %v2353 = vadd.f32 %v1827, %v2349
    %v2354 = vadd.f32 %v2352, %v214
    %v2355 = vadd.f32 %v2353, %v215
    %v2356 = vsel %vm174, %v2354, 0.0
    %2357 = vadd.xlane.f32.xlu0 %v2356
    %v2358 = vpop.xlane.xlu0 %2357
    %v2359 = vsel %vm174, %v2355, 0.0
    %2360 = vadd.xlane.f32.xlu0 %v2359
    %v2361 = vpop.xlane.xlu0 %2360
    %v2362 = vmul.f32 %v2358, %v181
    %v2363 = vmul.f32 %v2361, %v181
    %v2364 = vsub.f32 %v2354, %v2362
    %v2365 = vsub.f32 %v2355, %v2363
    %v2366 = vmul.f32 %v2364, %v2364
    %v2367 = vmul.f32 %v2365, %v2365
    %v2368 = vsel %vm174, %v2366, 0.0
    %2369 = vadd.xlane.f32.xlu0 %v2368
    %v2370 = vpop.xlane.xlu0 %2369
    %v2371 = vsel %vm174, %v2367, 0.0
    %2372 = vadd.xlane.f32.xlu0 %v2371
    %v2373 = vpop.xlane.xlu0 %2372
    %v2374 = vmul.f32 %v2370, %v181
    %v2375 = vmul.f32 %v2373, %v181
    %v2376 = vadd.f32 %v2374, 1e-12
    %v2377 = vadd.f32 %v2375, 1e-12
    %v2378 = vrsqrt.pop %v2376
    %v2379 = vrsqrt.pop %v2377
    %v2380 = vmul.f32 %v2364, %v2378
    %v2381 = vmul.f32 %v2365, %v2379
    %v2382 = vld [vmem:[#allocation2 + $0x2a8] sm:$0x1]
    %v2383 = vlaneseq
    %v2384 = vshrl.u32 %v2383, 7
    %v2385 = vsub.s32 0, %v2384
    %v2386 = vrot.slane %v2382, %v2385
    %v2387 = vmul.f32 %v2380, %v2386
    %v2388 = vmul.f32 %v2381, %v2386
    %v2389 = vld [vmem:[#allocation2 + $0x2b0] sm:$0x1]
    %v2390 = vlaneseq
    %v2391 = vshrl.u32 %v2390, 7
    %v2392 = vsub.s32 0, %v2391
    %v2393 = vrot.slane %v2389, %v2392
    %v2394 = vadd.f32 %v2387, %v2393
    %v2395 = vadd.f32 %v2388, %v2393
    %v2396 = vld [vmem:[#allocation2 + $0x2b8] sm:$0xff]
    %v2397 = vld [vmem:[#allocation2 + $0x2c0] sm:$0xff]
    %v2398 = vld [vmem:[#allocation2 + $0x2c8] sm:$0xff]
    %v2399 = vld [vmem:[#allocation2 + $0x2d0] sm:$0xff]
    %v2400 = vld [vmem:[#allocation2 + $0x2d8] sm:$0x1]
    %v2401 = vlaneseq
    %v2402 = vshrl.u32 %v2401, 7
    %v2403 = vsub.s32 0, %v2402
    %v2404 = vrot.slane %v2400, %v2403
    %v2406 = vsel %vm174, %v2394, 0
    %v2409 = vsel %vm174, %v2395, 0
    %2411 = vmatprep.subr.mxu0 0.0
    %2412 = vmatpush1.msra.mxu0 %v2396
    %2413 = vmatprep.subr.mxu0 0.0
    %2414 = vmatpush1.msra.mxu0 %v2397
    %2415 = vmatprep.subr.mxu0 0.0
    %2416 = vmatpush1.msra.mxu0 %v2398
    %2417 = vmatprep.subr.mxu0 0.0
    %2418 = vmatpush1.msra.mxu0 %v2399
    %2419 = vmatprep.subr.mxu0 0.0
    %2420 = vmatpush1.msra.mxu0 0.0
    %2421 = vmatprep.subr.mxu0 0.0
    %2422 = vmatpush1.msra.mxu0 0.0
    %2423 = vmatprep.subr.mxu0 0.0
    %2424 = vmatpush1.msra.mxu0 0.0
    %2425 = vmatprep.subr.mxu0 0.0
    %2426 = vmatpush1.msra.mxu0 0.0
    %2427 = vmatprep.subr.mxu0 0.0
    %2428 = vmatpush1.msra.mxu0 0.0
    %2429 = vmatprep.subr.mxu0 0.0
    %2430 = vmatpush1.msra.mxu0 0.0
    %2431 = vmatprep.subr.mxu0 0.0
    %2432 = vmatpush1.msra.mxu0 0.0
    %2433 = vmatprep.subr.mxu0 0.0
    %2434 = vmatpush1.msra.mxu0 0.0
    %2435 = vmatprep.subr.mxu0 0.0
    %2436 = vmatpush1.msra.mxu0 0.0
    %2437 = vmatprep.subr.mxu0 0.0
    %2438 = vmatpush1.msra.mxu0 0.0
    %2439 = vmatprep.subr.mxu0 0.0
    %2440 = vmatpush1.msra.mxu0 0.0
    %2441 = vmatprep.subr.mxu0 0.0
    %2442 = vmatpush1.msra.mxu0 0.0
    %2443 = vmatprep.subr.mxu0 0.0
    %2444 = vmatpush1.msra.mxu0 0.0
    %2445 = vmatprep.subr.mxu0 0.0
    %2446 = vmatpush1.msra.mxu0 0.0
    %2447 = vmatprep.subr.mxu0 0.0
    %2448 = vmatpush1.msra.mxu0 0.0
    %2449 = vmatprep.subr.mxu0 0.0
    %2450 = vmatpush1.msra.mxu0 0.0
    %2451 = vmatprep.subr.mxu0 0.0
    %2452 = vmatpush1.msra.mxu0 0.0
    %2453 = vmatprep.subr.mxu0 0.0
    %2454 = vmatpush1.msra.mxu0 0.0
    %2455 = vmatprep.subr.mxu0 0.0
    %2456 = vmatpush1.msra.mxu0 0.0
    %2457 = vmatprep.subr.mxu0 0.0
    %2458 = vmatpush1.msra.mxu0 0.0
    %2459 = vmatprep.subr.mxu0 0.0
    %2460 = vmatpush1.msra.mxu0 0.0
    %2461 = vmatprep.subr.mxu0 0.0
    %2462 = vmatpush1.msra.mxu0 0.0
    %2463 = vmatprep.subr.mxu0 0.0
    %2464 = vmatpush1.msra.mxu0 0.0
    %2465 = vmatprep.subr.mxu0 0.0
    %2466 = vmatpush1.msra.mxu0 0.0
    %2467 = vmatprep.subr.mxu0 0.0
    %2468 = vmatpush1.msra.mxu0 0.0
    %2469 = vmatprep.subr.mxu0 0.0
    %2470 = vmatpush1.msra.mxu0 0.0
    %2471 = vmatprep.subr.mxu0 0.0
    %2472 = vmatpush1.msra.mxu0 0.0
    %2473 = vmatprep.subr.mxu0 0.0
    %2474 = vmatpush1.msra.mxu0 0.0
    %2475 = vmatprep.mubr.f32.mxu0 0.0
    %2476 = vmatmul.mubr.f32.gmra.mrb[0].mxu0 %v2406
    %v2477 = vpop.f32.mrb[0].mxu0
    %v2478 = vadd.f32 %v2404, %v2477
    %v2479 = vpop.f32.mrb[0].mxu0
    %2480 = vmatprep.mubr.f32.mxu0 0.0
    %2481 = vmatmul.mubr.f32.gmra.mrb[0].mxu0 %v2409
    %v2482 = vpop.f32.mrb[0].mxu0
    %v2483 = vadd.f32 %v2404, %v2482
    %v2484 = vpop.f32.mrb[0].mxu0
    %2485 = vdwg.mxu0
    %v2486 = vmul.f32 %v2478, 0.5
    %v2487 = vmul.f32 %v2483, 0.5
    %v2488 = vmul.f32 %v2478, 0.044715
    %v2489 = vmul.f32 %v2483, 0.044715
    %v2490 = vmul.f32 %v2488, %v2478
    %v2491 = vmul.f32 %v2489, %v2483
    %v2492 = vmul.f32 %v2490, %v2478
    %v2493 = vmul.f32 %v2491, %v2483
    %v2494 = vadd.f32 %v2478, %v2492
    %v2495 = vadd.f32 %v2483, %v2493
    %v2496 = vmul.f32 %v2494, 0.7978846
    %v2497 = vmul.f32 %v2495, 0.7978846
    %v2498 = vtanh.pop %v2496
    %v2499 = vtanh.pop %v2497
    %v2500 = vadd.f32 %v2498, 1.0
    %v2501 = vadd.f32 %v2499, 1.0
    %v2502 = vmul.f32 %v2486, %v2500
    %v2503 = vmul.f32 %v2487, %v2501
    %v2504 = vld [vmem:[#allocation2 + $0x2e0] sm:$0xff]
    %v2505 = vld [vmem:[#allocation2 + $0x2e8] sm:$0xff]
    %v2506 = vld [vmem:[#allocation2 + $0x2f0] sm:$0xff]
    %v2507 = vld [vmem:[#allocation2 + $0x2f8] sm:$0xff]
    %v2508 = vld [vmem:[#allocation2 + $0x300] sm:$0xff]
    %v2509 = vld [vmem:[#allocation2 + $0x308] sm:$0xff]
    %v2510 = vld [vmem:[#allocation2 + $0x310] sm:$0xff]
    %v2511 = vld [vmem:[#allocation2 + $0x318] sm:$0xff]
    %v2512 = vld [vmem:[#allocation2 + $0x320] sm:$0x1]
    %v2513 = vlaneseq
    %v2514 = vshrl.u32 %v2513, 7
    %v2515 = vsub.s32 0, %v2514
    %v2516 = vrot.slane %v2512, %v2515
    %vm2517 = vcmask 523264
    %v2519 = vsel %vm2517, %v2502, 0
    %v2522 = vsel %vm2517, %v2503, 0
    %2524 = vmatprep.subr.mxu0 0.0
    %2525 = vmatpush1.msra.mxu0 %v2504
    %2526 = vmatprep.subr.mxu0 0.0
    %2527 = vmatpush1.msra.mxu0 %v2505
    %2528 = vmatprep.subr.mxu0 0.0
    %2529 = vmatpush1.msra.mxu0 %v2506
    %2530 = vmatprep.subr.mxu0 0.0
    %2531 = vmatpush1.msra.mxu0 %v2507
    %2532 = vmatprep.subr.mxu0 0.0
    %2533 = vmatpush1.msra.mxu0 %v2508
    %2534 = vmatprep.subr.mxu0 0.0
    %2535 = vmatpush1.msra.mxu0 %v2509
    %2536 = vmatprep.subr.mxu0 0.0
    %2537 = vmatpush1.msra.mxu0 %v2510
    %2538 = vmatprep.subr.mxu0 0.0
    %2539 = vmatpush1.msra.mxu0 %v2511
    %2540 = vmatprep.subr.mxu0 0.0
    %2541 = vmatpush1.msra.mxu0 0.0
    %2542 = vmatprep.subr.mxu0 0.0
    %2543 = vmatpush1.msra.mxu0 0.0
    %2544 = vmatprep.subr.mxu0 0.0
    %2545 = vmatpush1.msra.mxu0 0.0
    %2546 = vmatprep.subr.mxu0 0.0
    %2547 = vmatpush1.msra.mxu0 0.0
    %2548 = vmatprep.subr.mxu0 0.0
    %2549 = vmatpush1.msra.mxu0 0.0
    %2550 = vmatprep.subr.mxu0 0.0
    %2551 = vmatpush1.msra.mxu0 0.0
    %2552 = vmatprep.subr.mxu0 0.0
    %2553 = vmatpush1.msra.mxu0 0.0
    %2554 = vmatprep.subr.mxu0 0.0
    %2555 = vmatpush1.msra.mxu0 0.0
    %2556 = vmatprep.subr.mxu0 0.0
    %2557 = vmatpush1.msra.mxu0 0.0
    %2558 = vmatprep.subr.mxu0 0.0
    %2559 = vmatpush1.msra.mxu0 0.0
    %2560 = vmatprep.subr.mxu0 0.0
    %2561 = vmatpush1.msra.mxu0 0.0
    %2562 = vmatprep.subr.mxu0 0.0
    %2563 = vmatpush1.msra.mxu0 0.0
    %2564 = vmatprep.subr.mxu0 0.0
    %2565 = vmatpush1.msra.mxu0 0.0
    %2566 = vmatprep.subr.mxu0 0.0
    %2567 = vmatpush1.msra.mxu0 0.0
    %2568 = vmatprep.subr.mxu0 0.0
    %2569 = vmatpush1.msra.mxu0 0.0
    %2570 = vmatprep.subr.mxu0 0.0
    %2571 = vmatpush1.msra.mxu0 0.0
    %2572 = vmatprep.subr.mxu0 0.0
    %2573 = vmatpush1.msra.mxu0 0.0
    %2574 = vmatprep.subr.mxu0 0.0
    %2575 = vmatpush1.msra.mxu0 0.0
    %2576 = vmatprep.subr.mxu0 0.0
    %2577 = vmatpush1.msra.mxu0 0.0
    %2578 = vmatprep.subr.mxu0 0.0
    %2579 = vmatpush1.msra.mxu0 0.0
    %2580 = vmatprep.subr.mxu0 0.0
    %2581 = vmatpush1.msra.mxu0 0.0
    %2582 = vmatprep.subr.mxu0 0.0
    %2583 = vmatpush1.msra.mxu0 0.0
    %2584 = vmatprep.subr.mxu0 0.0
    %2585 = vmatpush1.msra.mxu0 0.0
    %2586 = vmatprep.subr.mxu0 0.0
    %2587 = vmatpush1.msra.mxu0 0.0
    %2588 = vmatprep.mubr.f32.mxu0 0.0
    %2589 = vmatmul.mubr.f32.gmra.mrb[0].mxu0 %v2519
    %v2590 = vpop.f32.mrb[0].mxu0
    %v2591 = vadd.f32 %v2516, %v2590
    %v2592 = vpop.f32.mrb[0].mxu0
    %2593 = vmatprep.mubr.f32.mxu0 0.0
    %2594 = vmatmul.mubr.f32.gmra.mrb[0].mxu0 %v2522
    %v2595 = vpop.f32.mrb[0].mxu0
    %v2596 = vadd.f32 %v2516, %v2595
    %v2597 = vpop.f32.mrb[0].mxu0
    %2598 = vdwg.mxu0
    %v2599 = vadd.f32 %v2591, %v2394
    %v2600 = vadd.f32 %v2596, %v2395
    %v2601 = vsel %vm174, %v2599, 0.0
    %2602 = vadd.xlane.f32.xlu0 %v2601
    %v2603 = vpop.xlane.xlu0 %2602
    %v2604 = vsel %vm174, %v2600, 0.0
    %2605 = vadd.xlane.f32.xlu0 %v2604
    %v2606 = vpop.xlane.xlu0 %2605
    %v2607 = vmul.f32 %v2603, %v181
    %v2608 = vmul.f32 %v2606, %v181
    %v2609 = vsub.f32 %v2599, %v2607
    %v2610 = vsub.f32 %v2600, %v2608
    %v2611 = vmul.f32 %v2609, %v2609
    %v2612 = vmul.f32 %v2610, %v2610
    %v2613 = vsel %vm174, %v2611, 0.0
    %2614 = vadd.xlane.f32.xlu0 %v2613
    %v2615 = vpop.xlane.xlu0 %2614
    %v2616 = vsel %vm174, %v2612, 0.0
    %2617 = vadd.xlane.f32.xlu0 %v2616
    %v2618 = vpop.xlane.xlu0 %2617
    %v2619 = vmul.f32 %v2615, %v181
    %v2620 = vmul.f32 %v2618, %v181
    %v2621 = vadd.f32 %v2619, 1e-12
    %v2622 = vadd.f32 %v2620, 1e-12
    %v2623 = vrsqrt.pop %v2621
    %v2624 = vrsqrt.pop %v2622
    %v2625 = vmul.f32 %v2609, %v2623
    %v2626 = vmul.f32 %v2610, %v2624
    %v2627 = vld [vmem:[#allocation2 + $0x328] sm:$0x1]
    %v2628 = vlaneseq
    %v2629 = vshrl.u32 %v2628, 7
    %v2630 = vsub.s32 0, %v2629
    %v2631 = vrot.slane %v2627, %v2630
    %v2632 = vmul.f32 %v2625, %v2631
    %v2633 = vmul.f32 %v2626, %v2631
    %v2634 = vld [vmem:[#allocation2 + $0x330] sm:$0x1]
    %v2635 = vlaneseq
    %v2636 = vshrl.u32 %v2635, 7
    %v2637 = vsub.s32 0, %v2636
    %v2638 = vrot.slane %v2634, %v2637
    %v2639 = vadd.f32 %v2632, %v2638
    %v2640 = vadd.f32 %v2633, %v2638
    %v2641 = vld [vmem:[#allocation2 + $0x538] sm:$0x1]
    %v2642 = vld [vmem:[#allocation2 + $0x338] sm:$0xff]
    %v2643 = vld [vmem:[#allocation2 + $0x340] sm:$0xff]
    %v2644 = vld [vmem:[#allocation2 + $0x348] sm:$0xff]
    %v2645 = vld [vmem:[#allocation2 + $0x350] sm:$0xff]
    %v2646 = vld [vmem:[#allocation2 + $0x3a0] sm:$0x1]
    %v2647 = vlaneseq
    %v2648 = vshrl.u32 %v2647, 7
    %v2649 = vsub.s32 0, %v2648
    %v2650 = vrot.slane %v2646, %v2649
    %v2652 = vsel %vm174, %v2639, 0
    %v2655 = vsel %vm174, %v2640, 0
    %2657 = vmatprep.subr.mxu0 0.0
    %2658 = vmatpush1.msra.mxu0 %v2642
    %2659 = vmatprep.subr.mxu0 0.0
    %2660 = vmatpush1.msra.mxu0 %v2643
    %2661 = vmatprep.subr.mxu0 0.0
    %2662 = vmatpush1.msra.mxu0 %v2644
    %2663 = vmatprep.subr.mxu0 0.0
    %2664 = vmatpush1.msra.mxu0 %v2645
    %2665 = vmatprep.subr.mxu0 0.0
    %2666 = vmatpush1.msra.mxu0 0.0
    %2667 = vmatprep.subr.mxu0 0.0
    %2668 = vmatpush1.msra.mxu0 0.0
    %2669 = vmatprep.subr.mxu0 0.0
    %2670 = vmatpush1.msra.mxu0 0.0
    %2671 = vmatprep.subr.mxu0 0.0
    %2672 = vmatpush1.msra.mxu0 0.0
    %2673 = vmatprep.subr.mxu0 0.0
    %2674 = vmatpush1.msra.mxu0 0.0
    %2675 = vmatprep.subr.mxu0 0.0
    %2676 = vmatpush1.msra.mxu0 0.0
    %2677 = vmatprep.subr.mxu0 0.0
    %2678 = vmatpush1.msra.mxu0 0.0
    %2679 = vmatprep.subr.mxu0 0.0
    %2680 = vmatpush1.msra.mxu0 0.0
    %2681 = vmatprep.subr.mxu0 0.0
    %2682 = vmatpush1.msra.mxu0 0.0
    %2683 = vmatprep.subr.mxu0 0.0
    %2684 = vmatpush1.msra.mxu0 0.0
    %2685 = vmatprep.subr.mxu0 0.0
    %2686 = vmatpush1.msra.mxu0 0.0
    %2687 = vmatprep.subr.mxu0 0.0
    %2688 = vmatpush1.msra.mxu0 0.0
    %2689 = vmatprep.subr.mxu0 0.0
    %2690 = vmatpush1.msra.mxu0 0.0
    %2691 = vmatprep.subr.mxu0 0.0
    %2692 = vmatpush1.msra.mxu0 0.0
    %2693 = vmatprep.subr.mxu0 0.0
    %2694 = vmatpush1.msra.mxu0 0.0
    %2695 = vmatprep.subr.mxu0 0.0
    %2696 = vmatpush1.msra.mxu0 0.0
    %2697 = vmatprep.subr.mxu0 0.0
    %2698 = vmatpush1.msra.mxu0 0.0
    %2699 = vmatprep.subr.mxu0 0.0
    %2700 = vmatpush1.msra.mxu0 0.0
    %2701 = vmatprep.subr.mxu0 0.0
    %2702 = vmatpush1.msra.mxu0 0.0
    %2703 = vmatprep.subr.mxu0 0.0
    %2704 = vmatpush1.msra.mxu0 0.0
    %2705 = vmatprep.subr.mxu0 0.0
    %2706 = vmatpush1.msra.mxu0 0.0
    %2707 = vmatprep.subr.mxu0 0.0
    %2708 = vmatpush1.msra.mxu0 0.0
    %2709 = vmatprep.subr.mxu0 0.0
    %2710 = vmatpush1.msra.mxu0 0.0
    %2711 = vmatprep.subr.mxu0 0.0
    %2712 = vmatpush1.msra.mxu0 0.0
    %2713 = vmatprep.subr.mxu0 0.0
    %2714 = vmatpush1.msra.mxu0 0.0
    %2715 = vmatprep.subr.mxu0 0.0
    %2716 = vmatpush1.msra.mxu0 0.0
    %2717 = vmatprep.subr.mxu0 0.0
    %2718 = vmatpush1.msra.mxu0 0.0
    %2719 = vmatprep.subr.mxu0 0.0
    %2720 = vmatpush1.msra.mxu0 0.0
    %2721 = vmatprep.mubr.f32.mxu0 0.0
    %2722 = vmatmul.mubr.f32.gmra.mrb[0].mxu0 %v2652
    %v2723 = vpop.f32.mrb[0].mxu0
    %v2724 = vadd.f32 %v2650, %v2723
    %v2725 = vpop.f32.mrb[0].mxu0
    %2726 = vmatprep.mubr.f32.mxu0 0.0
    %2727 = vmatmul.mubr.f32.gmra.mrb[0].mxu0 %v2655
    %v2728 = vpop.f32.mrb[0].mxu0
    %v2729 = vadd.f32 %v2650, %v2728
    %v2730 = vpop.f32.mrb[0].mxu0
    %2731 = vdwg.mxu0
    %v2732 = vld [vmem:[#allocation2 + $0x358] sm:$0xff]
    %v2733 = vld [vmem:[#allocation2 + $0x360] sm:$0xff]
    %v2734 = vld [vmem:[#allocation2 + $0x368] sm:$0xff]
    %v2735 = vld [vmem:[#allocation2 + $0x370] sm:$0xff]
    %v2736 = vld [vmem:[#allocation2 + $0x3a8] sm:$0x1]
    %v2737 = vlaneseq
    %v2738 = vshrl.u32 %v2737, 7
    %v2739 = vsub.s32 0, %v2738
    %v2740 = vrot.slane %v2736, %v2739
    %2741 = vmatprep.subr.mxu0 0.0
    %2742 = vmatpush1.msra.mxu0 %v2732
    %2743 = vmatprep.subr.mxu0 0.0
    %2744 = vmatpush1.msra.mxu0 %v2733
    %2745 = vmatprep.subr.mxu0 0.0
    %2746 = vmatpush1.msra.mxu0 %v2734
    %2747 = vmatprep.subr.mxu0 0.0
    %2748 = vmatpush1.msra.mxu0 %v2735
    %2749 = vmatprep.subr.mxu0 0.0
    %2750 = vmatpush1.msra.mxu0 0.0
    %2751 = vmatprep.subr.mxu0 0.0
    %2752 = vmatpush1.msra.mxu0 0.0
    %2753 = vmatprep.subr.mxu0 0.0
    %2754 = vmatpush1.msra.mxu0 0.0
    %2755 = vmatprep.subr.mxu0 0.0
    %2756 = vmatpush1.msra.mxu0 0.0
    %2757 = vmatprep.subr.mxu0 0.0
    %2758 = vmatpush1.msra.mxu0 0.0
    %2759 = vmatprep.subr.mxu0 0.0
    %2760 = vmatpush1.msra.mxu0 0.0
    %2761 = vmatprep.subr.mxu0 0.0
    %2762 = vmatpush1.msra.mxu0 0.0
    %2763 = vmatprep.subr.mxu0 0.0
    %2764 = vmatpush1.msra.mxu0 0.0
    %2765 = vmatprep.subr.mxu0 0.0
    %2766 = vmatpush1.msra.mxu0 0.0
    %2767 = vmatprep.subr.mxu0 0.0
    %2768 = vmatpush1.msra.mxu0 0.0
    %2769 = vmatprep.subr.mxu0 0.0
    %2770 = vmatpush1.msra.mxu0 0.0
    %2771 = vmatprep.subr.mxu0 0.0
    %2772 = vmatpush1.msra.mxu0 0.0
    %2773 = vmatprep.subr.mxu0 0.0
    %2774 = vmatpush1.msra.mxu0 0.0
    %2775 = vmatprep.subr.mxu0 0.0
    %2776 = vmatpush1.msra.mxu0 0.0
    %2777 = vmatprep.subr.mxu0 0.0
    %2778 = vmatpush1.msra.mxu0 0.0
    %2779 = vmatprep.subr.mxu0 0.0
    %2780 = vmatpush1.msra.mxu0 0.0
    %2781 = vmatprep.subr.mxu0 0.0
    %2782 = vmatpush1.msra.mxu0 0.0
    %2783 = vmatprep.subr.mxu0 0.0
    %2784 = vmatpush1.msra.mxu0 0.0
    %2785 = vmatprep.subr.mxu0 0.0
    %2786 = vmatpush1.msra.mxu0 0.0
    %2787 = vmatprep.subr.mxu0 0.0
    %2788 = vmatpush1.msra.mxu0 0.0
    %2789 = vmatprep.subr.mxu0 0.0
    %2790 = vmatpush1.msra.mxu0 0.0
    %2791 = vmatprep.subr.mxu0 0.0
    %2792 = vmatpush1.msra.mxu0 0.0
    %2793 = vmatprep.subr.mxu0 0.0
    %2794 = vmatpush1.msra.mxu0 0.0
    %2795 = vmatprep.subr.mxu0 0.0
    %2796 = vmatpush1.msra.mxu0 0.0
    %2797 = vmatprep.subr.mxu0 0.0
    %2798 = vmatpush1.msra.mxu0 0.0
    %2799 = vmatprep.subr.mxu0 0.0
    %2800 = vmatpush1.msra.mxu0 0.0
    %2801 = vmatprep.subr.mxu0 0.0
    %2802 = vmatpush1.msra.mxu0 0.0
    %2803 = vmatprep.subr.mxu0 0.0
    %2804 = vmatpush1.msra.mxu0 0.0
    %2805 = vmatprep.mubr.f32.mxu0 0.0
    %2806 = vmatmul.mubr.f32.gmra.mrb[0].mxu0 %v2652
    %v2807 = vpop.f32.mrb[0].mxu0
    %v2808 = vadd.f32 %v2740, %v2807
    %v2809 = vpop.f32.mrb[0].mxu0
    %2810 = vmatprep.mubr.f32.mxu0 0.0
    %2811 = vmatmul.mubr.f32.gmra.mrb[0].mxu0 %v2655
    %v2812 = vpop.f32.mrb[0].mxu0
    %v2813 = vadd.f32 %v2740, %v2812
    %v2814 = vpop.f32.mrb[0].mxu0
    %2815 = vdwg.mxu0
    %v2816 = vld [vmem:[#allocation2 + $0x378] sm:$0xff]
    %v2817 = vld [vmem:[#allocation2 + $0x380] sm:$0xff]
    %v2818 = vld [vmem:[#allocation2 + $0x388] sm:$0xff]
    %v2819 = vld [vmem:[#allocation2 + $0x390] sm:$0xff]
    %v2820 = vld [vmem:[#allocation2 + $0x3b0] sm:$0x1]
    %v2821 = vlaneseq
    %v2822 = vshrl.u32 %v2821, 7
    %v2823 = vsub.s32 0, %v2822
    %v2824 = vrot.slane %v2820, %v2823
    %2825 = vmatprep.subr.mxu0 0.0
    %2826 = vmatpush1.msra.mxu0 %v2816
    %2827 = vmatprep.subr.mxu0 0.0
    %2828 = vmatpush1.msra.mxu0 %v2817
    %2829 = vmatprep.subr.mxu0 0.0
    %2830 = vmatpush1.msra.mxu0 %v2818
    %2831 = vmatprep.subr.mxu0 0.0
    %2832 = vmatpush1.msra.mxu0 %v2819
    %2833 = vmatprep.subr.mxu0 0.0
    %2834 = vmatpush1.msra.mxu0 0.0
    %2835 = vmatprep.subr.mxu0 0.0
    %2836 = vmatpush1.msra.mxu0 0.0
    %2837 = vmatprep.subr.mxu0 0.0
    %2838 = vmatpush1.msra.mxu0 0.0
    %2839 = vmatprep.subr.mxu0 0.0
    %2840 = vmatpush1.msra.mxu0 0.0
    %2841 = vmatprep.subr.mxu0 0.0
    %2842 = vmatpush1.msra.mxu0 0.0
    %2843 = vmatprep.subr.mxu0 0.0
    %2844 = vmatpush1.msra.mxu0 0.0
    %2845 = vmatprep.subr.mxu0 0.0
    %2846 = vmatpush1.msra.mxu0 0.0
    %2847 = vmatprep.subr.mxu0 0.0
    %2848 = vmatpush1.msra.mxu0 0.0
    %2849 = vmatprep.subr.mxu0 0.0
    %2850 = vmatpush1.msra.mxu0 0.0
    %2851 = vmatprep.subr.mxu0 0.0
    %2852 = vmatpush1.msra.mxu0 0.0
    %2853 = vmatprep.subr.mxu0 0.0
    %2854 = vmatpush1.msra.mxu0 0.0
    %2855 = vmatprep.subr.mxu0 0.0
    %2856 = vmatpush1.msra.mxu0 0.0
    %2857 = vmatprep.subr.mxu0 0.0
    %2858 = vmatpush1.msra.mxu0 0.0
    %2859 = vmatprep.subr.mxu0 0.0
    %2860 = vmatpush1.msra.mxu0 0.0
    %2861 = vmatprep.subr.mxu0 0.0
    %2862 = vmatpush1.msra.mxu0 0.0
    %2863 = vmatprep.subr.mxu0 0.0
    %2864 = vmatpush1.msra.mxu0 0.0
    %2865 = vmatprep.subr.mxu0 0.0
    %2866 = vmatpush1.msra.mxu0 0.0
    %2867 = vmatprep.subr.mxu0 0.0
    %2868 = vmatpush1.msra.mxu0 0.0
    %2869 = vmatprep.subr.mxu0 0.0
    %2870 = vmatpush1.msra.mxu0 0.0
    %2871 = vmatprep.subr.mxu0 0.0
    %2872 = vmatpush1.msra.mxu0 0.0
    %2873 = vmatprep.subr.mxu0 0.0
    %2874 = vmatpush1.msra.mxu0 0.0
    %2875 = vmatprep.subr.mxu0 0.0
    %2876 = vmatpush1.msra.mxu0 0.0
    %2877 = vmatprep.subr.mxu0 0.0
    %2878 = vmatpush1.msra.mxu0 0.0
    %2879 = vmatprep.subr.mxu0 0.0
    %2880 = vmatpush1.msra.mxu0 0.0
    %2881 = vmatprep.subr.mxu0 0.0
    %2882 = vmatpush1.msra.mxu0 0.0
    %2883 = vmatprep.subr.mxu0 0.0
    %2884 = vmatpush1.msra.mxu0 0.0
    %2885 = vmatprep.subr.mxu0 0.0
    %2886 = vmatpush1.msra.mxu0 0.0
    %2887 = vmatprep.subr.mxu0 0.0
    %2888 = vmatpush1.msra.mxu0 0.0
    %2889 = vmatprep.mubr.f32.mxu0 0.0
    %2890 = vmatmul.mubr.f32.gmra.mrb[0].mxu0 %v2652
    %v2891 = vpop.f32.mrb[0].mxu0
    %v2892 = vadd.f32 %v2824, %v2891
    %v2893 = vpop.f32.mrb[0].mxu0
    %2894 = vmatprep.mubr.f32.mxu0 0.0
    %2895 = vmatmul.mubr.f32.gmra.mrb[0].mxu0 %v2655
    %v2896 = vpop.f32.mrb[0].mxu0
    %v2897 = vadd.f32 %v2824, %v2896
    %v2898 = vpop.f32.mrb[0].mxu0
    %2899 = vdwg.mxu0
    %v2901 = vsel %vm497, %v2724, 0
    %v2904 = vsel %vm497, %v2729, 0
    %v2907 = vsel %vm497, %v2808, 0
    %v2910 = vsel %vm497, %v2813, 0
    %2912 = vmatprep.subr.mxu0 0.0
    %2913 = vmatpush1.xpose.msra.mxu0 %v2907
    %2914 = vmatprep.subr.mxu0 0.0
    %2915 = vmatpush1.xpose.msra.mxu0 %v2910
    %2916 = vmatprep.subr.mxu0 0.0
    %2917 = vmatpush1.xpose.msra.mxu0 0.0
    %2918 = vmatprep.subr.mxu0 0.0
    %2919 = vmatpush1.xpose.msra.mxu0 0.0
    %2920 = vmatprep.subr.mxu0 0.0
    %2921 = vmatpush1.xpose.msra.mxu0 0.0
    %2922 = vmatprep.subr.mxu0 0.0
    %2923 = vmatpush1.xpose.msra.mxu0 0.0
    %2924 = vmatprep.subr.mxu0 0.0
    %2925 = vmatpush1.xpose.msra.mxu0 0.0
    %2926 = vmatprep.subr.mxu0 0.0
    %2927 = vmatpush1.xpose.msra.mxu0 0.0
    %2928 = vmatprep.subr.mxu0 0.0
    %2929 = vmatpush1.xpose.msra.mxu0 0.0
    %2930 = vmatprep.subr.mxu0 0.0
    %2931 = vmatpush1.xpose.msra.mxu0 0.0
    %2932 = vmatprep.subr.mxu0 0.0
    %2933 = vmatpush1.xpose.msra.mxu0 0.0
    %2934 = vmatprep.subr.mxu0 0.0
    %2935 = vmatpush1.xpose.msra.mxu0 0.0
    %2936 = vmatprep.subr.mxu0 0.0
    %2937 = vmatpush1.xpose.msra.mxu0 0.0
    %2938 = vmatprep.subr.mxu0 0.0
    %2939 = vmatpush1.xpose.msra.mxu0 0.0
    %2940 = vmatprep.subr.mxu0 0.0
    %2941 = vmatpush1.xpose.msra.mxu0 0.0
    %2942 = vmatprep.subr.mxu0 0.0
    %2943 = vmatpush1.xpose.msra.mxu0 0.0
    %2944 = vmatprep.subr.mxu0 0.0
    %2945 = vmatpush1.xpose.msra.mxu0 0.0
    %2946 = vmatprep.subr.mxu0 0.0
    %2947 = vmatpush1.xpose.msra.mxu0 0.0
    %2948 = vmatprep.subr.mxu0 0.0
    %2949 = vmatpush1.xpose.msra.mxu0 0.0
    %2950 = vmatprep.subr.mxu0 0.0
    %2951 = vmatpush1.xpose.msra.mxu0 0.0
    %2952 = vmatprep.subr.mxu0 0.0
    %2953 = vmatpush1.xpose.msra.mxu0 0.0
    %2954 = vmatprep.subr.mxu0 0.0
    %2955 = vmatpush1.xpose.msra.mxu0 0.0
    %2956 = vmatprep.subr.mxu0 0.0
    %2957 = vmatpush1.xpose.msra.mxu0 0.0
    %2958 = vmatprep.subr.mxu0 0.0
    %2959 = vmatpush1.xpose.msra.mxu0 0.0
    %2960 = vmatprep.subr.mxu0 0.0
    %2961 = vmatpush1.xpose.msra.mxu0 0.0
    %2962 = vmatprep.subr.mxu0 0.0
    %2963 = vmatpush1.xpose.msra.mxu0 0.0
    %2964 = vmatprep.subr.mxu0 0.0
    %2965 = vmatpush1.xpose.msra.mxu0 0.0
    %2966 = vmatprep.subr.mxu0 0.0
    %2967 = vmatpush1.xpose.msra.mxu0 0.0
    %2968 = vmatprep.subr.mxu0 0.0
    %2969 = vmatpush1.xpose.msra.mxu0 0.0
    %2970 = vmatprep.subr.mxu0 0.0
    %2971 = vmatpush1.xpose.msra.mxu0 0.0
    %2972 = vmatprep.subr.mxu0 0.0
    %2973 = vmatpush1.xpose.msra.mxu0 0.0
    %2974 = vmatprep.subr.mxu0 0.0
    %2975 = vmatpush1.xpose.msra.mxu0 0.0
    %2976 = vmatprep.mubr.f32.mxu0 0.0
    %2977 = vmatmul.mubr.f32.gmra.mrb[0].mxu0 %v2901
    %v2978 = vpop.f32.mrb[0].mxu0
    %v2979 = vadd.f32 %v236, %v2978
    %v2980 = vpop.f32.mrb[0].mxu0
    %2981 = vmatprep.mubr.f32.mxu0 0.0
    %2982 = vmatmul.mubr.f32.gmra.mrb[0].mxu0 %v2904
    %v2983 = vpop.f32.mrb[0].mxu0
    %v2984 = vadd.f32 %v237, %v2983
    %v2985 = vpop.f32.mrb[0].mxu0
    %2986 = vdwg.mxu0
    %v2987 = vsel %vm92, %v2979, -inf
    %2988 = vmax.xlane.f32.xlu0 %v2987
    %v2989 = vpop.xlane.xlu0 %2988
    %v2990 = vsel %vm92, %v2984, -inf
    %2991 = vmax.xlane.f32.xlu0 %v2990
    %v2992 = vpop.xlane.xlu0 %2991
    %v2993 = vsub.f32 %v2979, %v2989
    %v2994 = vsub.f32 %v2984, %v2992
    %v2995 = vmul.f32 %v2993, 1.442695
    %v2996 = vpow.pop %v2995
    %v2997 = vmul.f32 %v2994, 1.442695
    %v2998 = vpow.pop %v2997
    %v2999 = vsel %vm92, %v2996, 0.0
    %3000 = vadd.xlane.f32.xlu0 %v2999
    %v3001 = vpop.xlane.xlu0 %3000
    %v3002 = vsel %vm92, %v2998, 0.0
    %3003 = vadd.xlane.f32.xlu0 %v3002
    %v3004 = vpop.xlane.xlu0 %3003
    %v3005 = vrcp.pop %v3001
    %v3006 = vrcp.pop %v3004
    %v3007 = vmul.f32 %v2996, %v3005
    %v3008 = vmul.f32 %v2998, %v3006
    %v3010 = vsel %vm92, %v3007, 0
    %v3013 = vsel %vm92, %v3008, 0
    %3015 = vmatprep.subr.mxu0 0.0
    %3016 = vmatpush1.msra.mxu0 %v2892
    %3017 = vmatprep.subr.mxu0 0.0
    %3018 = vmatpush1.msra.mxu0 %v2897
    %3019 = vmatprep.subr.mxu0 0.0
    %3020 = vmatpush1.msra.mxu0 0.0
    %3021 = vmatprep.subr.mxu0 0.0
    %3022 = vmatpush1.msra.mxu0 0.0
    %3023 = vmatprep.subr.mxu0 0.0
    %3024 = vmatpush1.msra.mxu0 0.0
    %3025 = vmatprep.subr.mxu0 0.0
    %3026 = vmatpush1.msra.mxu0 0.0
    %3027 = vmatprep.subr.mxu0 0.0
    %3028 = vmatpush1.msra.mxu0 0.0
    %3029 = vmatprep.subr.mxu0 0.0
    %3030 = vmatpush1.msra.mxu0 0.0
    %3031 = vmatprep.subr.mxu0 0.0
    %3032 = vmatpush1.msra.mxu0 0.0
    %3033 = vmatprep.subr.mxu0 0.0
    %3034 = vmatpush1.msra.mxu0 0.0
    %3035 = vmatprep.subr.mxu0 0.0
    %3036 = vmatpush1.msra.mxu0 0.0
    %3037 = vmatprep.subr.mxu0 0.0
    %3038 = vmatpush1.msra.mxu0 0.0
    %3039 = vmatprep.subr.mxu0 0.0
    %3040 = vmatpush1.msra.mxu0 0.0
    %3041 = vmatprep.subr.mxu0 0.0
    %3042 = vmatpush1.msra.mxu0 0.0
    %3043 = vmatprep.subr.mxu0 0.0
    %3044 = vmatpush1.msra.mxu0 0.0
    %3045 = vmatprep.subr.mxu0 0.0
    %3046 = vmatpush1.msra.mxu0 0.0
    %3047 = vmatprep.subr.mxu0 0.0
    %3048 = vmatpush1.msra.mxu0 0.0
    %3049 = vmatprep.subr.mxu0 0.0
    %3050 = vmatpush1.msra.mxu0 0.0
    %3051 = vmatprep.subr.mxu0 0.0
    %3052 = vmatpush1.msra.mxu0 0.0
    %3053 = vmatprep.subr.mxu0 0.0
    %3054 = vmatpush1.msra.mxu0 0.0
    %3055 = vmatprep.subr.mxu0 0.0
    %3056 = vmatpush1.msra.mxu0 0.0
    %3057 = vmatprep.subr.mxu0 0.0
    %3058 = vmatpush1.msra.mxu0 0.0
    %3059 = vmatprep.subr.mxu0 0.0
    %3060 = vmatpush1.msra.mxu0 0.0
    %3061 = vmatprep.subr.mxu0 0.0
    %3062 = vmatpush1.msra.mxu0 0.0
    %3063 = vmatprep.subr.mxu0 0.0
    %3064 = vmatpush1.msra.mxu0 0.0
    %3065 = vmatprep.subr.mxu0 0.0
    %3066 = vmatpush1.msra.mxu0 0.0
    %3067 = vmatprep.subr.mxu0 0.0
    %3068 = vmatpush1.msra.mxu0 0.0
    %3069 = vmatprep.subr.mxu0 0.0
    %3070 = vmatpush1.msra.mxu0 0.0
    %3071 = vmatprep.subr.mxu0 0.0
    %3072 = vmatpush1.msra.mxu0 0.0
    %3073 = vmatprep.subr.mxu0 0.0
    %3074 = vmatpush1.msra.mxu0 0.0
    %3075 = vmatprep.subr.mxu0 0.0
    %3076 = vmatpush1.msra.mxu0 0.0
    %3077 = vmatprep.subr.mxu0 0.0
    %3078 = vmatpush1.msra.mxu0 0.0
    %3079 = vmatprep.mubr.f32.mxu0 0.0
    %3080 = vmatmul.mubr.f32.gmra.mrb[0].mxu0 %v3010
    %v3081 = vpop.f32.mrb[0].mxu0
    %v3082 = vadd.f32 0.0, %v3081
    %v3083 = vpop.f32.mrb[0].mxu0
    %3084 = vmatprep.mubr.f32.mxu0 0.0
    %3085 = vmatmul.mubr.f32.gmra.mrb[0].mxu0 %v3013
    %v3086 = vpop.f32.mrb[0].mxu0
    %v3087 = vadd.f32 0.0, %v3086
    %v3088 = vpop.f32.mrb[0].mxu0
    %3089 = vdwg.mxu0
    %v3090 = vld [vmem:[#allocation2 + $0x398] sm:$0xff]
    %v3092 = vsel %vm497, %v3082, 0
    %v3095 = vsel %vm497, %v3087, 0
    %3097 = vmatprep.subr.mxu0 0.0
    %3098 = vmatpush1.msra.mxu0 %v3090
    %3099 = vmatprep.subr.mxu0 0.0
    %3100 = vmatpush1.msra.mxu0 0.0
    %3101 = vmatprep.subr.mxu0 0.0
    %3102 = vmatpush1.msra.mxu0 0.0
    %3103 = vmatprep.subr.mxu0 0.0
    %3104 = vmatpush1.msra.mxu0 0.0
    %3105 = vmatprep.subr.mxu0 0.0
    %3106 = vmatpush1.msra.mxu0 0.0
    %3107 = vmatprep.subr.mxu0 0.0
    %3108 = vmatpush1.msra.mxu0 0.0
    %3109 = vmatprep.subr.mxu0 0.0
    %3110 = vmatpush1.msra.mxu0 0.0
    %3111 = vmatprep.subr.mxu0 0.0
    %3112 = vmatpush1.msra.mxu0 0.0
    %3113 = vmatprep.subr.mxu0 0.0
    %3114 = vmatpush1.msra.mxu0 0.0
    %3115 = vmatprep.subr.mxu0 0.0
    %3116 = vmatpush1.msra.mxu0 0.0
    %3117 = vmatprep.subr.mxu0 0.0
    %3118 = vmatpush1.msra.mxu0 0.0
    %3119 = vmatprep.subr.mxu0 0.0
    %3120 = vmatpush1.msra.mxu0 0.0
    %3121 = vmatprep.subr.mxu0 0.0
    %3122 = vmatpush1.msra.mxu0 0.0
    %3123 = vmatprep.subr.mxu0 0.0
    %3124 = vmatpush1.msra.mxu0 0.0
    %3125 = vmatprep.subr.mxu0 0.0
    %3126 = vmatpush1.msra.mxu0 0.0
    %3127 = vmatprep.subr.mxu0 0.0
    %3128 = vmatpush1.msra.mxu0 0.0
    %3129 = vmatprep.subr.mxu0 0.0
    %3130 = vmatpush1.msra.mxu0 0.0
    %3131 = vmatprep.subr.mxu0 0.0
    %3132 = vmatpush1.msra.mxu0 0.0
    %3133 = vmatprep.subr.mxu0 0.0
    %3134 = vmatpush1.msra.mxu0 0.0
    %3135 = vmatprep.subr.mxu0 0.0
    %3136 = vmatpush1.msra.mxu0 0.0
    %3137 = vmatprep.subr.mxu0 0.0
    %3138 = vmatpush1.msra.mxu0 0.0
    %3139 = vmatprep.subr.mxu0 0.0
    %3140 = vmatpush1.msra.mxu0 0.0
    %3141 = vmatprep.subr.mxu0 0.0
    %3142 = vmatpush1.msra.mxu0 0.0
    %3143 = vmatprep.subr.mxu0 0.0
    %3144 = vmatpush1.msra.mxu0 0.0
    %3145 = vmatprep.subr.mxu0 0.0
    %3146 = vmatpush1.msra.mxu0 0.0
    %3147 = vmatprep.subr.mxu0 0.0
    %3148 = vmatpush1.msra.mxu0 0.0
    %3149 = vmatprep.subr.mxu0 0.0
    %3150 = vmatpush1.msra.mxu0 0.0
    %3151 = vmatprep.subr.mxu0 0.0
    %3152 = vmatpush1.msra.mxu0 0.0
    %3153 = vmatprep.subr.mxu0 0.0
    %3154 = vmatpush1.msra.mxu0 0.0
    %3155 = vmatprep.subr.mxu0 0.0
    %3156 = vmatpush1.msra.mxu0 0.0
    %3157 = vmatprep.subr.mxu0 0.0
    %3158 = vmatpush1.msra.mxu0 0.0
    %3159 = vmatprep.subr.mxu0 0.0
    %3160 = vmatpush1.msra.mxu0 0.0
    %3161 = vmatprep.mubr.f32.mxu0 0.0
    %3162 = vmatmul.mubr.f32.gmra.mrb[0].mxu0 %v3092
    %v3163 = vpop.f32.mrb[0].mxu0
    %v3164 = vadd.f32 0.0, %v3163
    %v3165 = vpop.f32.mrb[0].mxu0
    %3166 = vmatprep.mubr.f32.mxu0 0.0
    %3167 = vmatmul.mubr.f32.gmra.mrb[0].mxu0 %v3095
    %v3168 = vpop.f32.mrb[0].mxu0
    %v3169 = vadd.f32 0.0, %v3168
    %v3170 = vpop.f32.mrb[0].mxu0
    %3171 = vdwg.mxu0
    %v3172 = vlaneseq
    %v3173 = vshrl.u32 %v3172, 7
    %v3174 = vsub.s32 0, %v3173
    %v3175 = vrot.slane %v2641, %v3174
    %v3176 = vadd.f32 %v3175, %v3164
    %v3177 = vadd.f32 %v3175, %v3169
    %v3178 = vld [vmem:[#allocation2 + $0x3b8] sm:$0xff]
    %v3179 = vld [vmem:[#allocation2 + $0x3c0] sm:$0xff]
    %v3180 = vld [vmem:[#allocation2 + $0x3c8] sm:$0xff]
    %v3181 = vld [vmem:[#allocation2 + $0x3d0] sm:$0xff]
    %v3182 = vld [vmem:[#allocation2 + $0x420] sm:$0x1]
    %v3183 = vlaneseq
    %v3184 = vshrl.u32 %v3183, 7
    %v3185 = vsub.s32 0, %v3184
    %v3186 = vrot.slane %v3182, %v3185
    %3187 = vmatprep.subr.mxu0 0.0
    %3188 = vmatpush1.msra.mxu0 %v3178
    %3189 = vmatprep.subr.mxu0 0.0
    %3190 = vmatpush1.msra.mxu0 %v3179
    %3191 = vmatprep.subr.mxu0 0.0
    %3192 = vmatpush1.msra.mxu0 %v3180
    %3193 = vmatprep.subr.mxu0 0.0
    %3194 = vmatpush1.msra.mxu0 %v3181
    %3195 = vmatprep.subr.mxu0 0.0
    %3196 = vmatpush1.msra.mxu0 0.0
    %3197 = vmatprep.subr.mxu0 0.0
    %3198 = vmatpush1.msra.mxu0 0.0
    %3199 = vmatprep.subr.mxu0 0.0
    %3200 = vmatpush1.msra.mxu0 0.0
    %3201 = vmatprep.subr.mxu0 0.0
    %3202 = vmatpush1.msra.mxu0 0.0
    %3203 = vmatprep.subr.mxu0 0.0
    %3204 = vmatpush1.msra.mxu0 0.0
    %3205 = vmatprep.subr.mxu0 0.0
    %3206 = vmatpush1.msra.mxu0 0.0
    %3207 = vmatprep.subr.mxu0 0.0
    %3208 = vmatpush1.msra.mxu0 0.0
    %3209 = vmatprep.subr.mxu0 0.0
    %3210 = vmatpush1.msra.mxu0 0.0
    %3211 = vmatprep.subr.mxu0 0.0
    %3212 = vmatpush1.msra.mxu0 0.0
    %3213 = vmatprep.subr.mxu0 0.0
    %3214 = vmatpush1.msra.mxu0 0.0
    %3215 = vmatprep.subr.mxu0 0.0
    %3216 = vmatpush1.msra.mxu0 0.0
    %3217 = vmatprep.subr.mxu0 0.0
    %3218 = vmatpush1.msra.mxu0 0.0
    %3219 = vmatprep.subr.mxu0 0.0
    %3220 = vmatpush1.msra.mxu0 0.0
    %3221 = vmatprep.subr.mxu0 0.0
    %3222 = vmatpush1.msra.mxu0 0.0
    %3223 = vmatprep.subr.mxu0 0.0
    %3224 = vmatpush1.msra.mxu0 0.0
    %3225 = vmatprep.subr.mxu0 0.0
    %3226 = vmatpush1.msra.mxu0 0.0
    %3227 = vmatprep.subr.mxu0 0.0
    %3228 = vmatpush1.msra.mxu0 0.0
    %3229 = vmatprep.subr.mxu0 0.0
    %3230 = vmatpush1.msra.mxu0 0.0
    %3231 = vmatprep.subr.mxu0 0.0
    %3232 = vmatpush1.msra.mxu0 0.0
    %3233 = vmatprep.subr.mxu0 0.0
    %3234 = vmatpush1.msra.mxu0 0.0
    %3235 = vmatprep.subr.mxu0 0.0
    %3236 = vmatpush1.msra.mxu0 0.0
    %3237 = vmatprep.subr.mxu0 0.0
    %3238 = vmatpush1.msra.mxu0 0.0
    %3239 = vmatprep.subr.mxu0 0.0
    %3240 = vmatpush1.msra.mxu0 0.0
    %3241 = vmatprep.subr.mxu0 0.0
    %3242 = vmatpush1.msra.mxu0 0.0
    %3243 = vmatprep.subr.mxu0 0.0
    %3244 = vmatpush1.msra.mxu0 0.0
    %3245 = vmatprep.subr.mxu0 0.0
    %3246 = vmatpush1.msra.mxu0 0.0
    %3247 = vmatprep.subr.mxu0 0.0
    %3248 = vmatpush1.msra.mxu0 0.0
    %3249 = vmatprep.subr.mxu0 0.0
    %3250 = vmatpush1.msra.mxu0 0.0
    %3251 = vmatprep.mubr.f32.mxu0 0.0
    %3252 = vmatmul.mubr.f32.gmra.mrb[0].mxu0 %v2652
    %v3253 = vpop.f32.mrb[0].mxu0
    %v3254 = vadd.f32 %v3186, %v3253
    %v3255 = vpop.f32.mrb[0].mxu0
    %3256 = vmatprep.mubr.f32.mxu0 0.0
    %3257 = vmatmul.mubr.f32.gmra.mrb[0].mxu0 %v2655
    %v3258 = vpop.f32.mrb[0].mxu0
    %v3259 = vadd.f32 %v3186, %v3258
    %v3260 = vpop.f32.mrb[0].mxu0
    %3261 = vdwg.mxu0
    %v3262 = vld [vmem:[#allocation2 + $0x3d8] sm:$0xff]
    %v3263 = vld [vmem:[#allocation2 + $0x3e0] sm:$0xff]
    %v3264 = vld [vmem:[#allocation2 + $0x3e8] sm:$0xff]
    %v3265 = vld [vmem:[#allocation2 + $0x3f0] sm:$0xff]
    %v3266 = vld [vmem:[#allocation2 + $0x428] sm:$0x1]
    %v3267 = vlaneseq
    %v3268 = vshrl.u32 %v3267, 7
    %v3269 = vsub.s32 0, %v3268
    %v3270 = vrot.slane %v3266, %v3269
    %3271 = vmatprep.subr.mxu0 0.0
    %3272 = vmatpush1.msra.mxu0 %v3262
    %3273 = vmatprep.subr.mxu0 0.0
    %3274 = vmatpush1.msra.mxu0 %v3263
    %3275 = vmatprep.subr.mxu0 0.0
    %3276 = vmatpush1.msra.mxu0 %v3264
    %3277 = vmatprep.subr.mxu0 0.0
    %3278 = vmatpush1.msra.mxu0 %v3265
    %3279 = vmatprep.subr.mxu0 0.0
    %3280 = vmatpush1.msra.mxu0 0.0
    %3281 = vmatprep.subr.mxu0 0.0
    %3282 = vmatpush1.msra.mxu0 0.0
    %3283 = vmatprep.subr.mxu0 0.0
    %3284 = vmatpush1.msra.mxu0 0.0
    %3285 = vmatprep.subr.mxu0 0.0
    %3286 = vmatpush1.msra.mxu0 0.0
    %3287 = vmatprep.subr.mxu0 0.0
    %3288 = vmatpush1.msra.mxu0 0.0
    %3289 = vmatprep.subr.mxu0 0.0
    %3290 = vmatpush1.msra.mxu0 0.0
    %3291 = vmatprep.subr.mxu0 0.0
    %3292 = vmatpush1.msra.mxu0 0.0
    %3293 = vmatprep.subr.mxu0 0.0
    %3294 = vmatpush1.msra.mxu0 0.0
    %3295 = vmatprep.subr.mxu0 0.0
    %3296 = vmatpush1.msra.mxu0 0.0
    %3297 = vmatprep.subr.mxu0 0.0
    %3298 = vmatpush1.msra.mxu0 0.0
    %3299 = vmatprep.subr.mxu0 0.0
    %3300 = vmatpush1.msra.mxu0 0.0
    %3301 = vmatprep.subr.mxu0 0.0
    %3302 = vmatpush1.msra.mxu0 0.0
    %3303 = vmatprep.subr.mxu0 0.0
    %3304 = vmatpush1.msra.mxu0 0.0
    %3305 = vmatprep.subr.mxu0 0.0
    %3306 = vmatpush1.msra.mxu0 0.0
    %3307 = vmatprep.subr.mxu0 0.0
    %3308 = vmatpush1.msra.mxu0 0.0
    %3309 = vmatprep.subr.mxu0 0.0
    %3310 = vmatpush1.msra.mxu0 0.0
    %3311 = vmatprep.subr.mxu0 0.0
    %3312 = vmatpush1.msra.mxu0 0.0
    %3313 = vmatprep.subr.mxu0 0.0
    %3314 = vmatpush1.msra.mxu0 0.0
    %3315 = vmatprep.subr.mxu0 0.0
    %3316 = vmatpush1.msra.mxu0 0.0
    %3317 = vmatprep.subr.mxu0 0.0
    %3318 = vmatpush1.msra.mxu0 0.0
    %3319 = vmatprep.subr.mxu0 0.0
    %3320 = vmatpush1.msra.mxu0 0.0
    %3321 = vmatprep.subr.mxu0 0.0
    %3322 = vmatpush1.msra.mxu0 0.0
    %3323 = vmatprep.subr.mxu0 0.0
    %3324 = vmatpush1.msra.mxu0 0.0
    %3325 = vmatprep.subr.mxu0 0.0
    %3326 = vmatpush1.msra.mxu0 0.0
    %3327 = vmatprep.subr.mxu0 0.0
    %3328 = vmatpush1.msra.mxu0 0.0
    %3329 = vmatprep.subr.mxu0 0.0
    %3330 = vmatpush1.msra.mxu0 0.0
    %3331 = vmatprep.subr.mxu0 0.0
    %3332 = vmatpush1.msra.mxu0 0.0
    %3333 = vmatprep.subr.mxu0 0.0
    %3334 = vmatpush1.msra.mxu0 0.0
    %3335 = vmatprep.mubr.f32.mxu0 0.0
    %3336 = vmatmul.mubr.f32.gmra.mrb[0].mxu0 %v2652
    %v3337 = vpop.f32.mrb[0].mxu0
    %v3338 = vadd.f32 %v3270, %v3337
    %v3339 = vpop.f32.mrb[0].mxu0
    %3340 = vmatprep.mubr.f32.mxu0 0.0
    %3341 = vmatmul.mubr.f32.gmra.mrb[0].mxu0 %v2655
    %v3342 = vpop.f32.mrb[0].mxu0
    %v3343 = vadd.f32 %v3270, %v3342
    %v3344 = vpop.f32.mrb[0].mxu0
    %3345 = vdwg.mxu0
    %v3346 = vld [vmem:[#allocation2 + $0x3f8] sm:$0xff]
    %v3347 = vld [vmem:[#allocation2 + $0x400] sm:$0xff]
    %v3348 = vld [vmem:[#allocation2 + $0x408] sm:$0xff]
    %v3349 = vld [vmem:[#allocation2 + $0x410] sm:$0xff]
    %v3350 = vld [vmem:[#allocation2 + $0x430] sm:$0x1]
    %v3351 = vlaneseq
    %v3352 = vshrl.u32 %v3351, 7
    %v3353 = vsub.s32 0, %v3352
    %v3354 = vrot.slane %v3350, %v3353
    %3355 = vmatprep.subr.mxu0 0.0
    %3356 = vmatpush1.msra.mxu0 %v3346
    %3357 = vmatprep.subr.mxu0 0.0
    %3358 = vmatpush1.msra.mxu0 %v3347
    %3359 = vmatprep.subr.mxu0 0.0
    %3360 = vmatpush1.msra.mxu0 %v3348
    %3361 = vmatprep.subr.mxu0 0.0
    %3362 = vmatpush1.msra.mxu0 %v3349
    %3363 = vmatprep.subr.mxu0 0.0
    %3364 = vmatpush1.msra.mxu0 0.0
    %3365 = vmatprep.subr.mxu0 0.0
    %3366 = vmatpush1.msra.mxu0 0.0
    %3367 = vmatprep.subr.mxu0 0.0
    %3368 = vmatpush1.msra.mxu0 0.0
    %3369 = vmatprep.subr.mxu0 0.0
    %3370 = vmatpush1.msra.mxu0 0.0
    %3371 = vmatprep.subr.mxu0 0.0
    %3372 = vmatpush1.msra.mxu0 0.0
    %3373 = vmatprep.subr.mxu0 0.0
    %3374 = vmatpush1.msra.mxu0 0.0
    %3375 = vmatprep.subr.mxu0 0.0
    %3376 = vmatpush1.msra.mxu0 0.0
    %3377 = vmatprep.subr.mxu0 0.0
    %3378 = vmatpush1.msra.mxu0 0.0
    %3379 = vmatprep.subr.mxu0 0.0
    %3380 = vmatpush1.msra.mxu0 0.0
    %3381 = vmatprep.subr.mxu0 0.0
    %3382 = vmatpush1.msra.mxu0 0.0
    %3383 = vmatprep.subr.mxu0 0.0
    %3384 = vmatpush1.msra.mxu0 0.0
    %3385 = vmatprep.subr.mxu0 0.0
    %3386 = vmatpush1.msra.mxu0 0.0
    %3387 = vmatprep.subr.mxu0 0.0
    %3388 = vmatpush1.msra.mxu0 0.0
    %3389 = vmatprep.subr.mxu0 0.0
    %3390 = vmatpush1.msra.mxu0 0.0
    %3391 = vmatprep.subr.mxu0 0.0
    %3392 = vmatpush1.msra.mxu0 0.0
    %3393 = vmatprep.subr.mxu0 0.0
    %3394 = vmatpush1.msra.mxu0 0.0
    %3395 = vmatprep.subr.mxu0 0.0
    %3396 = vmatpush1.msra.mxu0 0.0
    %3397 = vmatprep.subr.mxu0 0.0
    %3398 = vmatpush1.msra.mxu0 0.0
    %3399 = vmatprep.subr.mxu0 0.0
    %3400 = vmatpush1.msra.mxu0 0.0
    %3401 = vmatprep.subr.mxu0 0.0
    %3402 = vmatpush1.msra.mxu0 0.0
    %3403 = vmatprep.subr.mxu0 0.0
    %3404 = vmatpush1.msra.mxu0 0.0
    %3405 = vmatprep.subr.mxu0 0.0
    %3406 = vmatpush1.msra.mxu0 0.0
    %3407 = vmatprep.subr.mxu0 0.0
    %3408 = vmatpush1.msra.mxu0 0.0
    %3409 = vmatprep.subr.mxu0 0.0
    %3410 = vmatpush1.msra.mxu0 0.0
    %3411 = vmatprep.subr.mxu0 0.0
    %3412 = vmatpush1.msra.mxu0 0.0
    %3413 = vmatprep.subr.mxu0 0.0
    %3414 = vmatpush1.msra.mxu0 0.0
    %3415 = vmatprep.subr.mxu0 0.0
    %3416 = vmatpush1.msra.mxu0 0.0
    %3417 = vmatprep.subr.mxu0 0.0
    %3418 = vmatpush1.msra.mxu0 0.0
    %3419 = vmatprep.mubr.f32.mxu0 0.0
    %3420 = vmatmul.mubr.f32.gmra.mrb[0].mxu0 %v2652
    %v3421 = vpop.f32.mrb[0].mxu0
    %v3422 = vadd.f32 %v3354, %v3421
    %v3423 = vpop.f32.mrb[0].mxu0
    %3424 = vmatprep.mubr.f32.mxu0 0.0
    %3425 = vmatmul.mubr.f32.gmra.mrb[0].mxu0 %v2655
    %v3426 = vpop.f32.mrb[0].mxu0
    %v3427 = vadd.f32 %v3354, %v3426
    %v3428 = vpop.f32.mrb[0].mxu0
    %3429 = vdwg.mxu0
    %v3431 = vsel %vm497, %v3254, 0
    %v3434 = vsel %vm497, %v3259, 0
    %v3437 = vsel %vm497, %v3338, 0
    %v3440 = vsel %vm497, %v3343, 0
    %3442 = vmatprep.subr.mxu0 0.0
    %3443 = vmatpush1.xpose.msra.mxu0 %v3437
    %3444 = vmatprep.subr.mxu0 0.0
    %3445 = vmatpush1.xpose.msra.mxu0 %v3440
    %3446 = vmatprep.subr.mxu0 0.0
    %3447 = vmatpush1.xpose.msra.mxu0 0.0
    %3448 = vmatprep.subr.mxu0 0.0
    %3449 = vmatpush1.xpose.msra.mxu0 0.0
    %3450 = vmatprep.subr.mxu0 0.0
    %3451 = vmatpush1.xpose.msra.mxu0 0.0
    %3452 = vmatprep.subr.mxu0 0.0
    %3453 = vmatpush1.xpose.msra.mxu0 0.0
    %3454 = vmatprep.subr.mxu0 0.0
    %3455 = vmatpush1.xpose.msra.mxu0 0.0
    %3456 = vmatprep.subr.mxu0 0.0
    %3457 = vmatpush1.xpose.msra.mxu0 0.0
    %3458 = vmatprep.subr.mxu0 0.0
    %3459 = vmatpush1.xpose.msra.mxu0 0.0
    %3460 = vmatprep.subr.mxu0 0.0
    %3461 = vmatpush1.xpose.msra.mxu0 0.0
    %3462 = vmatprep.subr.mxu0 0.0
    %3463 = vmatpush1.xpose.msra.mxu0 0.0
    %3464 = vmatprep.subr.mxu0 0.0
    %3465 = vmatpush1.xpose.msra.mxu0 0.0
    %3466 = vmatprep.subr.mxu0 0.0
    %3467 = vmatpush1.xpose.msra.mxu0 0.0
    %3468 = vmatprep.subr.mxu0 0.0
    %3469 = vmatpush1.xpose.msra.mxu0 0.0
    %3470 = vmatprep.subr.mxu0 0.0
    %3471 = vmatpush1.xpose.msra.mxu0 0.0
    %3472 = vmatprep.subr.mxu0 0.0
    %3473 = vmatpush1.xpose.msra.mxu0 0.0
    %3474 = vmatprep.subr.mxu0 0.0
    %3475 = vmatpush1.xpose.msra.mxu0 0.0
    %3476 = vmatprep.subr.mxu0 0.0
    %3477 = vmatpush1.xpose.msra.mxu0 0.0
    %3478 = vmatprep.subr.mxu0 0.0
    %3479 = vmatpush1.xpose.msra.mxu0 0.0
    %3480 = vmatprep.subr.mxu0 0.0
    %3481 = vmatpush1.xpose.msra.mxu0 0.0
    %3482 = vmatprep.subr.mxu0 0.0
    %3483 = vmatpush1.xpose.msra.mxu0 0.0
    %3484 = vmatprep.subr.mxu0 0.0
    %3485 = vmatpush1.xpose.msra.mxu0 0.0
    %3486 = vmatprep.subr.mxu0 0.0
    %3487 = vmatpush1.xpose.msra.mxu0 0.0
    %3488 = vmatprep.subr.mxu0 0.0
    %3489 = vmatpush1.xpose.msra.mxu0 0.0
    %3490 = vmatprep.subr.mxu0 0.0
    %3491 = vmatpush1.xpose.msra.mxu0 0.0
    %3492 = vmatprep.subr.mxu0 0.0
    %3493 = vmatpush1.xpose.msra.mxu0 0.0
    %3494 = vmatprep.subr.mxu0 0.0
    %3495 = vmatpush1.xpose.msra.mxu0 0.0
    %3496 = vmatprep.subr.mxu0 0.0
    %3497 = vmatpush1.xpose.msra.mxu0 0.0
    %3498 = vmatprep.subr.mxu0 0.0
    %3499 = vmatpush1.xpose.msra.mxu0 0.0
    %3500 = vmatprep.subr.mxu0 0.0
    %3501 = vmatpush1.xpose.msra.mxu0 0.0
    %3502 = vmatprep.subr.mxu0 0.0
    %3503 = vmatpush1.xpose.msra.mxu0 0.0
    %3504 = vmatprep.subr.mxu0 0.0
    %3505 = vmatpush1.xpose.msra.mxu0 0.0
    %3506 = vmatprep.mubr.f32.mxu0 0.0
    %3507 = vmatmul.mubr.f32.gmra.mrb[0].mxu0 %v3431
    %v3508 = vpop.f32.mrb[0].mxu0
    %v3509 = vadd.f32 %v236, %v3508
    %v3510 = vpop.f32.mrb[0].mxu0
    %3511 = vmatprep.mubr.f32.mxu0 0.0
    %3512 = vmatmul.mubr.f32.gmra.mrb[0].mxu0 %v3434
    %v3513 = vpop.f32.mrb[0].mxu0
    %v3514 = vadd.f32 %v237, %v3513
    %v3515 = vpop.f32.mrb[0].mxu0
    %3516 = vdwg.mxu0
    %v3517 = vsel %vm92, %v3509, -inf
    %3518 = vmax.xlane.f32.xlu0 %v3517
    %v3519 = vpop.xlane.xlu0 %3518
    %v3520 = vsel %vm92, %v3514, -inf
    %3521 = vmax.xlane.f32.xlu0 %v3520
    %v3522 = vpop.xlane.xlu0 %3521
    %v3523 = vsub.f32 %v3509, %v3519
    %v3524 = vsub.f32 %v3514, %v3522
    %v3525 = vmul.f32 %v3523, 1.442695
    %v3526 = vpow.pop %v3525
    %v3527 = vmul.f32 %v3524, 1.442695
    %v3528 = vpow.pop %v3527
    %v3529 = vsel %vm92, %v3526, 0.0
    %3530 = vadd.xlane.f32.xlu0 %v3529
    %v3531 = vpop.xlane.xlu0 %3530
    %v3532 = vsel %vm92, %v3528, 0.0
    %3533 = vadd.xlane.f32.xlu0 %v3532
    %v3534 = vpop.xlane.xlu0 %3533
    %v3535 = vrcp.pop %v3531
    %v3536 = vrcp.pop %v3534
    %v3537 = vmul.f32 %v3526, %v3535
    %v3538 = vmul.f32 %v3528, %v3536
    %v3540 = vsel %vm92, %v3537, 0
    %v3543 = vsel %vm92, %v3538, 0
    %3545 = vmatprep.subr.mxu0 0.0
    %3546 = vmatpush1.msra.mxu0 %v3422
    %3547 = vmatprep.subr.mxu0 0.0
    %3548 = vmatpush1.msra.mxu0 %v3427
    %3549 = vmatprep.subr.mxu0 0.0
    %3550 = vmatpush1.msra.mxu0 0.0
    %3551 = vmatprep.subr.mxu0 0.0
    %3552 = vmatpush1.msra.mxu0 0.0
    %3553 = vmatprep.subr.mxu0 0.0
    %3554 = vmatpush1.msra.mxu0 0.0
    %3555 = vmatprep.subr.mxu0 0.0
    %3556 = vmatpush1.msra.mxu0 0.0
    %3557 = vmatprep.subr.mxu0 0.0
    %3558 = vmatpush1.msra.mxu0 0.0
    %3559 = vmatprep.subr.mxu0 0.0
    %3560 = vmatpush1.msra.mxu0 0.0
    %3561 = vmatprep.subr.mxu0 0.0
    %3562 = vmatpush1.msra.mxu0 0.0
    %3563 = vmatprep.subr.mxu0 0.0
    %3564 = vmatpush1.msra.mxu0 0.0
    %3565 = vmatprep.subr.mxu0 0.0
    %3566 = vmatpush1.msra.mxu0 0.0
    %3567 = vmatprep.subr.mxu0 0.0
    %3568 = vmatpush1.msra.mxu0 0.0
    %3569 = vmatprep.subr.mxu0 0.0
    %3570 = vmatpush1.msra.mxu0 0.0
    %3571 = vmatprep.subr.mxu0 0.0
    %3572 = vmatpush1.msra.mxu0 0.0
    %3573 = vmatprep.subr.mxu0 0.0
    %3574 = vmatpush1.msra.mxu0 0.0
    %3575 = vmatprep.subr.mxu0 0.0
    %3576 = vmatpush1.msra.mxu0 0.0
    %3577 = vmatprep.subr.mxu0 0.0
    %3578 = vmatpush1.msra.mxu0 0.0
    %3579 = vmatprep.subr.mxu0 0.0
    %3580 = vmatpush1.msra.mxu0 0.0
    %3581 = vmatprep.subr.mxu0 0.0
    %3582 = vmatpush1.msra.mxu0 0.0
    %3583 = vmatprep.subr.mxu0 0.0
    %3584 = vmatpush1.msra.mxu0 0.0
    %3585 = vmatprep.subr.mxu0 0.0
    %3586 = vmatpush1.msra.mxu0 0.0
    %3587 = vmatprep.subr.mxu0 0.0
    %3588 = vmatpush1.msra.mxu0 0.0
    %3589 = vmatprep.subr.mxu0 0.0
    %3590 = vmatpush1.msra.mxu0 0.0
    %3591 = vmatprep.subr.mxu0 0.0
    %3592 = vmatpush1.msra.mxu0 0.0
    %3593 = vmatprep.subr.mxu0 0.0
    %3594 = vmatpush1.msra.mxu0 0.0
    %3595 = vmatprep.subr.mxu0 0.0
    %3596 = vmatpush1.msra.mxu0 0.0
    %3597 = vmatprep.subr.mxu0 0.0
    %3598 = vmatpush1.msra.mxu0 0.0
    %3599 = vmatprep.subr.mxu0 0.0
    %3600 = vmatpush1.msra.mxu0 0.0
    %3601 = vmatprep.subr.mxu0 0.0
    %3602 = vmatpush1.msra.mxu0 0.0
    %3603 = vmatprep.subr.mxu0 0.0
    %3604 = vmatpush1.msra.mxu0 0.0
    %3605 = vmatprep.subr.mxu0 0.0
    %3606 = vmatpush1.msra.mxu0 0.0
    %3607 = vmatprep.subr.mxu0 0.0
    %3608 = vmatpush1.msra.mxu0 0.0
    %3609 = vmatprep.mubr.f32.mxu0 0.0
    %3610 = vmatmul.mubr.f32.gmra.mrb[0].mxu0 %v3540
    %v3611 = vpop.f32.mrb[0].mxu0
    %v3612 = vadd.f32 0.0, %v3611
    %v3613 = vpop.f32.mrb[0].mxu0
    %3614 = vmatprep.mubr.f32.mxu0 0.0
    %3615 = vmatmul.mubr.f32.gmra.mrb[0].mxu0 %v3543
    %v3616 = vpop.f32.mrb[0].mxu0
    %v3617 = vadd.f32 0.0, %v3616
    %v3618 = vpop.f32.mrb[0].mxu0
    %3619 = vdwg.mxu0
    %v3620 = vld [vmem:[#allocation2 + $0x418] sm:$0xff]
    %v3622 = vsel %vm497, %v3612, 0
    %v3625 = vsel %vm497, %v3617, 0
    %3627 = vmatprep.subr.mxu0 0.0
    %3628 = vmatpush1.msra.mxu0 %v3620
    %3629 = vmatprep.subr.mxu0 0.0
    %3630 = vmatpush1.msra.mxu0 0.0
    %3631 = vmatprep.subr.mxu0 0.0
    %3632 = vmatpush1.msra.mxu0 0.0
    %3633 = vmatprep.subr.mxu0 0.0
    %3634 = vmatpush1.msra.mxu0 0.0
    %3635 = vmatprep.subr.mxu0 0.0
    %3636 = vmatpush1.msra.mxu0 0.0
    %3637 = vmatprep.subr.mxu0 0.0
    %3638 = vmatpush1.msra.mxu0 0.0
    %3639 = vmatprep.subr.mxu0 0.0
    %3640 = vmatpush1.msra.mxu0 0.0
    %3641 = vmatprep.subr.mxu0 0.0
    %3642 = vmatpush1.msra.mxu0 0.0
    %3643 = vmatprep.subr.mxu0 0.0
    %3644 = vmatpush1.msra.mxu0 0.0
    %3645 = vmatprep.subr.mxu0 0.0
    %3646 = vmatpush1.msra.mxu0 0.0
    %3647 = vmatprep.subr.mxu0 0.0
    %3648 = vmatpush1.msra.mxu0 0.0
    %3649 = vmatprep.subr.mxu0 0.0
    %3650 = vmatpush1.msra.mxu0 0.0
    %3651 = vmatprep.subr.mxu0 0.0
    %3652 = vmatpush1.msra.mxu0 0.0
    %3653 = vmatprep.subr.mxu0 0.0
    %3654 = vmatpush1.msra.mxu0 0.0
    %3655 = vmatprep.subr.mxu0 0.0
    %3656 = vmatpush1.msra.mxu0 0.0
    %3657 = vmatprep.subr.mxu0 0.0
    %3658 = vmatpush1.msra.mxu0 0.0
    %3659 = vmatprep.subr.mxu0 0.0
    %3660 = vmatpush1.msra.mxu0 0.0
    %3661 = vmatprep.subr.mxu0 0.0
    %3662 = vmatpush1.msra.mxu0 0.0
    %3663 = vmatprep.subr.mxu0 0.0
    %3664 = vmatpush1.msra.mxu0 0.0
    %3665 = vmatprep.subr.mxu0 0.0
    %3666 = vmatpush1.msra.mxu0 0.0
    %3667 = vmatprep.subr.mxu0 0.0
    %3668 = vmatpush1.msra.mxu0 0.0
    %3669 = vmatprep.subr.mxu0 0.0
    %3670 = vmatpush1.msra.mxu0 0.0
    %3671 = vmatprep.subr.mxu0 0.0
    %3672 = vmatpush1.msra.mxu0 0.0
    %3673 = vmatprep.subr.mxu0 0.0
    %3674 = vmatpush1.msra.mxu0 0.0
    %3675 = vmatprep.subr.mxu0 0.0
    %3676 = vmatpush1.msra.mxu0 0.0
    %3677 = vmatprep.subr.mxu0 0.0
    %3678 = vmatpush1.msra.mxu0 0.0
    %3679 = vmatprep.subr.mxu0 0.0
    %3680 = vmatpush1.msra.mxu0 0.0
    %3681 = vmatprep.subr.mxu0 0.0
    %3682 = vmatpush1.msra.mxu0 0.0
    %3683 = vmatprep.subr.mxu0 0.0
    %3684 = vmatpush1.msra.mxu0 0.0
    %3685 = vmatprep.subr.mxu0 0.0
    %3686 = vmatpush1.msra.mxu0 0.0
    %3687 = vmatprep.subr.mxu0 0.0
    %3688 = vmatpush1.msra.mxu0 0.0
    %3689 = vmatprep.subr.mxu0 0.0
    %3690 = vmatpush1.msra.mxu0 0.0
    %3691 = vmatprep.mubr.f32.mxu0 0.0
    %3692 = vmatmul.mubr.f32.gmra.mrb[0].mxu0 %v3622
    %v3693 = vpop.f32.mrb[0].mxu0
    %v3694 = vadd.f32 0.0, %v3693
    %v3695 = vpop.f32.mrb[0].mxu0
    %3696 = vmatprep.mubr.f32.mxu0 0.0
    %3697 = vmatmul.mubr.f32.gmra.mrb[0].mxu0 %v3625
    %v3698 = vpop.f32.mrb[0].mxu0
    %v3699 = vadd.f32 0.0, %v3698
    %v3700 = vpop.f32.mrb[0].mxu0
    %3701 = vdwg.mxu0
    %v3702 = vadd.f32 %v3176, %v3694
    %v3703 = vadd.f32 %v3177, %v3699
    %v3704 = vld [vmem:[#allocation2 + $0x438] sm:$0xff]
    %v3705 = vld [vmem:[#allocation2 + $0x440] sm:$0xff]
    %v3706 = vld [vmem:[#allocation2 + $0x448] sm:$0xff]
    %v3707 = vld [vmem:[#allocation2 + $0x450] sm:$0xff]
    %v3708 = vld [vmem:[#allocation2 + $0x4a0] sm:$0x1]
    %v3709 = vlaneseq
    %v3710 = vshrl.u32 %v3709, 7
    %v3711 = vsub.s32 0, %v3710
    %v3712 = vrot.slane %v3708, %v3711
    %3713 = vmatprep.subr.mxu0 0.0
    %3714 = vmatpush1.msra.mxu0 %v3704
    %3715 = vmatprep.subr.mxu0 0.0
    %3716 = vmatpush1.msra.mxu0 %v3705
    %3717 = vmatprep.subr.mxu0 0.0
    %3718 = vmatpush1.msra.mxu0 %v3706
    %3719 = vmatprep.subr.mxu0 0.0
    %3720 = vmatpush1.msra.mxu0 %v3707
    %3721 = vmatprep.subr.mxu0 0.0
    %3722 = vmatpush1.msra.mxu0 0.0
    %3723 = vmatprep.subr.mxu0 0.0
    %3724 = vmatpush1.msra.mxu0 0.0
    %3725 = vmatprep.subr.mxu0 0.0
    %3726 = vmatpush1.msra.mxu0 0.0
    %3727 = vmatprep.subr.mxu0 0.0
    %3728 = vmatpush1.msra.mxu0 0.0
    %3729 = vmatprep.subr.mxu0 0.0
    %3730 = vmatpush1.msra.mxu0 0.0
    %3731 = vmatprep.subr.mxu0 0.0
    %3732 = vmatpush1.msra.mxu0 0.0
    %3733 = vmatprep.subr.mxu0 0.0
    %3734 = vmatpush1.msra.mxu0 0.0
    %3735 = vmatprep.subr.mxu0 0.0
    %3736 = vmatpush1.msra.mxu0 0.0
    %3737 = vmatprep.subr.mxu0 0.0
    %3738 = vmatpush1.msra.mxu0 0.0
    %3739 = vmatprep.subr.mxu0 0.0
    %3740 = vmatpush1.msra.mxu0 0.0
    %3741 = vmatprep.subr.mxu0 0.0
    %3742 = vmatpush1.msra.mxu0 0.0
    %3743 = vmatprep.subr.mxu0 0.0
    %3744 = vmatpush1.msra.mxu0 0.0
    %3745 = vmatprep.subr.mxu0 0.0
    %3746 = vmatpush1.msra.mxu0 0.0
    %3747 = vmatprep.subr.mxu0 0.0
    %3748 = vmatpush1.msra.mxu0 0.0
    %3749 = vmatprep.subr.mxu0 0.0
    %3750 = vmatpush1.msra.mxu0 0.0
    %3751 = vmatprep.subr.mxu0 0.0
    %3752 = vmatpush1.msra.mxu0 0.0
    %3753 = vmatprep.subr.mxu0 0.0
    %3754 = vmatpush1.msra.mxu0 0.0
    %3755 = vmatprep.subr.mxu0 0.0
    %3756 = vmatpush1.msra.mxu0 0.0
    %3757 = vmatprep.subr.mxu0 0.0
    %3758 = vmatpush1.msra.mxu0 0.0
    %3759 = vmatprep.subr.mxu0 0.0
    %3760 = vmatpush1.msra.mxu0 0.0
    %3761 = vmatprep.subr.mxu0 0.0
    %3762 = vmatpush1.msra.mxu0 0.0
    %3763 = vmatprep.subr.mxu0 0.0
    %3764 = vmatpush1.msra.mxu0 0.0
    %3765 = vmatprep.subr.mxu0 0.0
    %3766 = vmatpush1.msra.mxu0 0.0
    %3767 = vmatprep.subr.mxu0 0.0
    %3768 = vmatpush1.msra.mxu0 0.0
    %3769 = vmatprep.subr.mxu0 0.0
    %3770 = vmatpush1.msra.mxu0 0.0
    %3771 = vmatprep.subr.mxu0 0.0
    %3772 = vmatpush1.msra.mxu0 0.0
    %3773 = vmatprep.subr.mxu0 0.0
    %3774 = vmatpush1.msra.mxu0 0.0
    %3775 = vmatprep.subr.mxu0 0.0
    %3776 = vmatpush1.msra.mxu0 0.0
    %3777 = vmatprep.mubr.f32.mxu0 0.0
    %3778 = vmatmul.mubr.f32.gmra.mrb[0].mxu0 %v2652
    %v3779 = vpop.f32.mrb[0].mxu0
    %v3780 = vadd.f32 %v3712, %v3779
    %v3781 = vpop.f32.mrb[0].mxu0
    %3782 = vmatprep.mubr.f32.mxu0 0.0
    %3783 = vmatmul.mubr.f32.gmra.mrb[0].mxu0 %v2655
    %v3784 = vpop.f32.mrb[0].mxu0
    %v3785 = vadd.f32 %v3712, %v3784
    %v3786 = vpop.f32.mrb[0].mxu0
    %3787 = vdwg.mxu0
    %v3788 = vld [vmem:[#allocation2 + $0x458] sm:$0xff]
    %v3789 = vld [vmem:[#allocation2 + $0x460] sm:$0xff]
    %v3790 = vld [vmem:[#allocation2 + $0x468] sm:$0xff]
    %v3791 = vld [vmem:[#allocation2 + $0x470] sm:$0xff]
    %v3792 = vld [vmem:[#allocation2 + $0x4a8] sm:$0x1]
    %v3793 = vlaneseq
    %v3794 = vshrl.u32 %v3793, 7
    %v3795 = vsub.s32 0, %v3794
    %v3796 = vrot.slane %v3792, %v3795
    %3797 = vmatprep.subr.mxu0 0.0
    %3798 = vmatpush1.msra.mxu0 %v3788
    %3799 = vmatprep.subr.mxu0 0.0
    %3800 = vmatpush1.msra.mxu0 %v3789
    %3801 = vmatprep.subr.mxu0 0.0
    %3802 = vmatpush1.msra.mxu0 %v3790
    %3803 = vmatprep.subr.mxu0 0.0
    %3804 = vmatpush1.msra.mxu0 %v3791
    %3805 = vmatprep.subr.mxu0 0.0
    %3806 = vmatpush1.msra.mxu0 0.0
    %3807 = vmatprep.subr.mxu0 0.0
    %3808 = vmatpush1.msra.mxu0 0.0
    %3809 = vmatprep.subr.mxu0 0.0
    %3810 = vmatpush1.msra.mxu0 0.0
    %3811 = vmatprep.subr.mxu0 0.0
    %3812 = vmatpush1.msra.mxu0 0.0
    %3813 = vmatprep.subr.mxu0 0.0
    %3814 = vmatpush1.msra.mxu0 0.0
    %3815 = vmatprep.subr.mxu0 0.0
    %3816 = vmatpush1.msra.mxu0 0.0
    %3817 = vmatprep.subr.mxu0 0.0
    %3818 = vmatpush1.msra.mxu0 0.0
    %3819 = vmatprep.subr.mxu0 0.0
    %3820 = vmatpush1.msra.mxu0 0.0
    %3821 = vmatprep.subr.mxu0 0.0
    %3822 = vmatpush1.msra.mxu0 0.0
    %3823 = vmatprep.subr.mxu0 0.0
    %3824 = vmatpush1.msra.mxu0 0.0
    %3825 = vmatprep.subr.mxu0 0.0
    %3826 = vmatpush1.msra.mxu0 0.0
    %3827 = vmatprep.subr.mxu0 0.0
    %3828 = vmatpush1.msra.mxu0 0.0
    %3829 = vmatprep.subr.mxu0 0.0
    %3830 = vmatpush1.msra.mxu0 0.0
    %3831 = vmatprep.subr.mxu0 0.0
    %3832 = vmatpush1.msra.mxu0 0.0
    %3833 = vmatprep.subr.mxu0 0.0
    %3834 = vmatpush1.msra.mxu0 0.0
    %3835 = vmatprep.subr.mxu0 0.0
    %3836 = vmatpush1.msra.mxu0 0.0
    %3837 = vmatprep.subr.mxu0 0.0
    %3838 = vmatpush1.msra.mxu0 0.0
    %3839 = vmatprep.subr.mxu0 0.0
    %3840 = vmatpush1.msra.mxu0 0.0
    %3841 = vmatprep.subr.mxu0 0.0
    %3842 = vmatpush1.msra.mxu0 0.0
    %3843 = vmatprep.subr.mxu0 0.0
    %3844 = vmatpush1.msra.mxu0 0.0
    %3845 = vmatprep.subr.mxu0 0.0
    %3846 = vmatpush1.msra.mxu0 0.0
    %3847 = vmatprep.subr.mxu0 0.0
    %3848 = vmatpush1.msra.mxu0 0.0
    %3849 = vmatprep.subr.mxu0 0.0
    %3850 = vmatpush1.msra.mxu0 0.0
    %3851 = vmatprep.subr.mxu0 0.0
    %3852 = vmatpush1.msra.mxu0 0.0
    %3853 = vmatprep.subr.mxu0 0.0
    %3854 = vmatpush1.msra.mxu0 0.0
    %3855 = vmatprep.subr.mxu0 0.0
    %3856 = vmatpush1.msra.mxu0 0.0
    %3857 = vmatprep.subr.mxu0 0.0
    %3858 = vmatpush1.msra.mxu0 0.0
    %3859 = vmatprep.subr.mxu0 0.0
    %3860 = vmatpush1.msra.mxu0 0.0
    %3861 = vmatprep.mubr.f32.mxu0 0.0
    %3862 = vmatmul.mubr.f32.gmra.mrb[0].mxu0 %v2652
    %v3863 = vpop.f32.mrb[0].mxu0
    %v3864 = vadd.f32 %v3796, %v3863
    %v3865 = vpop.f32.mrb[0].mxu0
    %3866 = vmatprep.mubr.f32.mxu0 0.0
    %3867 = vmatmul.mubr.f32.gmra.mrb[0].mxu0 %v2655
    %v3868 = vpop.f32.mrb[0].mxu0
    %v3869 = vadd.f32 %v3796, %v3868
    %v3870 = vpop.f32.mrb[0].mxu0
    %3871 = vdwg.mxu0
    %v3872 = vld [vmem:[#allocation2 + $0x478] sm:$0xff]
    %v3873 = vld [vmem:[#allocation2 + $0x480] sm:$0xff]
    %v3874 = vld [vmem:[#allocation2 + $0x488] sm:$0xff]
    %v3875 = vld [vmem:[#allocation2 + $0x490] sm:$0xff]
    %v3876 = vld [vmem:[#allocation2 + $0x4b0] sm:$0x1]
    %v3877 = vlaneseq
    %v3878 = vshrl.u32 %v3877, 7
    %v3879 = vsub.s32 0, %v3878
    %v3880 = vrot.slane %v3876, %v3879
    %3881 = vmatprep.subr.mxu0 0.0
    %3882 = vmatpush1.msra.mxu0 %v3872
    %3883 = vmatprep.subr.mxu0 0.0
    %3884 = vmatpush1.msra.mxu0 %v3873
    %3885 = vmatprep.subr.mxu0 0.0
    %3886 = vmatpush1.msra.mxu0 %v3874
    %3887 = vmatprep.subr.mxu0 0.0
    %3888 = vmatpush1.msra.mxu0 %v3875
    %3889 = vmatprep.subr.mxu0 0.0
    %3890 = vmatpush1.msra.mxu0 0.0
    %3891 = vmatprep.subr.mxu0 0.0
    %3892 = vmatpush1.msra.mxu0 0.0
    %3893 = vmatprep.subr.mxu0 0.0
    %3894 = vmatpush1.msra.mxu0 0.0
    %3895 = vmatprep.subr.mxu0 0.0
    %3896 = vmatpush1.msra.mxu0 0.0
    %3897 = vmatprep.subr.mxu0 0.0
    %3898 = vmatpush1.msra.mxu0 0.0
    %3899 = vmatprep.subr.mxu0 0.0
    %3900 = vmatpush1.msra.mxu0 0.0
    %3901 = vmatprep.subr.mxu0 0.0
    %3902 = vmatpush1.msra.mxu0 0.0
    %3903 = vmatprep.subr.mxu0 0.0
    %3904 = vmatpush1.msra.mxu0 0.0
    %3905 = vmatprep.subr.mxu0 0.0
    %3906 = vmatpush1.msra.mxu0 0.0
    %3907 = vmatprep.subr.mxu0 0.0
    %3908 = vmatpush1.msra.mxu0 0.0
    %3909 = vmatprep.subr.mxu0 0.0
    %3910 = vmatpush1.msra.mxu0 0.0
    %3911 = vmatprep.subr.mxu0 0.0
    %3912 = vmatpush1.msra.mxu0 0.0
    %3913 = vmatprep.subr.mxu0 0.0
    %3914 = vmatpush1.msra.mxu0 0.0
    %3915 = vmatprep.subr.mxu0 0.0
    %3916 = vmatpush1.msra.mxu0 0.0
    %3917 = vmatprep.subr.mxu0 0.0
    %3918 = vmatpush1.msra.mxu0 0.0
    %3919 = vmatprep.subr.mxu0 0.0
    %3920 = vmatpush1.msra.mxu0 0.0
    %3921 = vmatprep.subr.mxu0 0.0
    %3922 = vmatpush1.msra.mxu0 0.0
    %3923 = vmatprep.subr.mxu0 0.0
    %3924 = vmatpush1.msra.mxu0 0.0
    %3925 = vmatprep.subr.mxu0 0.0
    %3926 = vmatpush1.msra.mxu0 0.0
    %3927 = vmatprep.subr.mxu0 0.0
    %3928 = vmatpush1.msra.mxu0 0.0
    %3929 = vmatprep.subr.mxu0 0.0
    %3930 = vmatpush1.msra.mxu0 0.0
    %3931 = vmatprep.subr.mxu0 0.0
    %3932 = vmatpush1.msra.mxu0 0.0
    %3933 = vmatprep.subr.mxu0 0.0
    %3934 = vmatpush1.msra.mxu0 0.0
    %3935 = vmatprep.subr.mxu0 0.0
    %3936 = vmatpush1.msra.mxu0 0.0
    %3937 = vmatprep.subr.mxu0 0.0
    %3938 = vmatpush1.msra.mxu0 0.0
    %3939 = vmatprep.subr.mxu0 0.0
    %3940 = vmatpush1.msra.mxu0 0.0
    %3941 = vmatprep.subr.mxu0 0.0
    %3942 = vmatpush1.msra.mxu0 0.0
    %3943 = vmatprep.subr.mxu0 0.0
    %3944 = vmatpush1.msra.mxu0 0.0
    %3945 = vmatprep.mubr.f32.mxu0 0.0
    %3946 = vmatmul.mubr.f32.gmra.mrb[0].mxu0 %v2652
    %v3947 = vpop.f32.mrb[0].mxu0
    %v3948 = vadd.f32 %v3880, %v3947
    %v3949 = vpop.f32.mrb[0].mxu0
    %3950 = vmatprep.mubr.f32.mxu0 0.0
    %3951 = vmatmul.mubr.f32.gmra.mrb[0].mxu0 %v2655
    %v3952 = vpop.f32.mrb[0].mxu0
    %v3953 = vadd.f32 %v3880, %v3952
    %v3954 = vpop.f32.mrb[0].mxu0
    %3955 = vdwg.mxu0
    %v3957 = vsel %vm497, %v3780, 0
    %v3960 = vsel %vm497, %v3785, 0
    %v3963 = vsel %vm497, %v3864, 0
    %v3966 = vsel %vm497, %v3869, 0
    %3968 = vmatprep.subr.mxu0 0.0
    %3969 = vmatpush1.xpose.msra.mxu0 %v3963
    %3970 = vmatprep.subr.mxu0 0.0
    %3971 = vmatpush1.xpose.msra.mxu0 %v3966
    %3972 = vmatprep.subr.mxu0 0.0
    %3973 = vmatpush1.xpose.msra.mxu0 0.0
    %3974 = vmatprep.subr.mxu0 0.0
    %3975 = vmatpush1.xpose.msra.mxu0 0.0
    %3976 = vmatprep.subr.mxu0 0.0
    %3977 = vmatpush1.xpose.msra.mxu0 0.0
    %3978 = vmatprep.subr.mxu0 0.0
    %3979 = vmatpush1.xpose.msra.mxu0 0.0
    %3980 = vmatprep.subr.mxu0 0.0
    %3981 = vmatpush1.xpose.msra.mxu0 0.0
    %3982 = vmatprep.subr.mxu0 0.0
    %3983 = vmatpush1.xpose.msra.mxu0 0.0
    %3984 = vmatprep.subr.mxu0 0.0
    %3985 = vmatpush1.xpose.msra.mxu0 0.0
    %3986 = vmatprep.subr.mxu0 0.0
    %3987 = vmatpush1.xpose.msra.mxu0 0.0
    %3988 = vmatprep.subr.mxu0 0.0
    %3989 = vmatpush1.xpose.msra.mxu0 0.0
    %3990 = vmatprep.subr.mxu0 0.0
    %3991 = vmatpush1.xpose.msra.mxu0 0.0
    %3992 = vmatprep.subr.mxu0 0.0
    %3993 = vmatpush1.xpose.msra.mxu0 0.0
    %3994 = vmatprep.subr.mxu0 0.0
    %3995 = vmatpush1.xpose.msra.mxu0 0.0
    %3996 = vmatprep.subr.mxu0 0.0
    %3997 = vmatpush1.xpose.msra.mxu0 0.0
    %3998 = vmatprep.subr.mxu0 0.0
    %3999 = vmatpush1.xpose.msra.mxu0 0.0
    %4000 = vmatprep.subr.mxu0 0.0
    %4001 = vmatpush1.xpose.msra.mxu0 0.0
    %4002 = vmatprep.subr.mxu0 0.0
    %4003 = vmatpush1.xpose.msra.mxu0 0.0
    %4004 = vmatprep.subr.mxu0 0.0
    %4005 = vmatpush1.xpose.msra.mxu0 0.0
    %4006 = vmatprep.subr.mxu0 0.0
    %4007 = vmatpush1.xpose.msra.mxu0 0.0
    %4008 = vmatprep.subr.mxu0 0.0
    %4009 = vmatpush1.xpose.msra.mxu0 0.0
    %4010 = vmatprep.subr.mxu0 0.0
    %4011 = vmatpush1.xpose.msra.mxu0 0.0
    %4012 = vmatprep.subr.mxu0 0.0
    %4013 = vmatpush1.xpose.msra.mxu0 0.0
    %4014 = vmatprep.subr.mxu0 0.0
    %4015 = vmatpush1.xpose.msra.mxu0 0.0
    %4016 = vmatprep.subr.mxu0 0.0
    %4017 = vmatpush1.xpose.msra.mxu0 0.0
    %4018 = vmatprep.subr.mxu0 0.0
    %4019 = vmatpush1.xpose.msra.mxu0 0.0
    %4020 = vmatprep.subr.mxu0 0.0
    %4021 = vmatpush1.xpose.msra.mxu0 0.0
    %4022 = vmatprep.subr.mxu0 0.0
    %4023 = vmatpush1.xpose.msra.mxu0 0.0
    %4024 = vmatprep.subr.mxu0 0.0
    %4025 = vmatpush1.xpose.msra.mxu0 0.0
    %4026 = vmatprep.subr.mxu0 0.0
    %4027 = vmatpush1.xpose.msra.mxu0 0.0
    %4028 = vmatprep.subr.mxu0 0.0
    %4029 = vmatpush1.xpose.msra.mxu0 0.0
    %4030 = vmatprep.subr.mxu0 0.0
    %4031 = vmatpush1.xpose.msra.mxu0 0.0
    %4032 = vmatprep.mubr.f32.mxu0 0.0
    %4033 = vmatmul.mubr.f32.gmra.mrb[0].mxu0 %v3957
    %v4034 = vpop.f32.mrb[0].mxu0
    %v4035 = vadd.f32 %v236, %v4034
    %v4036 = vpop.f32.mrb[0].mxu0
    %4037 = vmatprep.mubr.f32.mxu0 0.0
    %4038 = vmatmul.mubr.f32.gmra.mrb[0].mxu0 %v3960
    %v4039 = vpop.f32.mrb[0].mxu0
    %v4040 = vadd.f32 %v237, %v4039
    %v4041 = vpop.f32.mrb[0].mxu0
    %4042 = vdwg.mxu0
    %v4043 = vsel %vm92, %v4035, -inf
    %4044 = vmax.xlane.f32.xlu0 %v4043
    %v4045 = vpop.xlane.xlu0 %4044
    %v4046 = vsel %vm92, %v4040, -inf
    %4047 = vmax.xlane.f32.xlu0 %v4046
    %v4048 = vpop.xlane.xlu0 %4047
    %v4049 = vsub.f32 %v4035, %v4045
    %v4050 = vsub.f32 %v4040, %v4048
    %v4051 = vmul.f32 %v4049, 1.442695
    %v4052 = vpow.pop %v4051
    %v4053 = vmul.f32 %v4050, 1.442695
    %v4054 = vpow.pop %v4053
    %v4055 = vsel %vm92, %v4052, 0.0
    %4056 = vadd.xlane.f32.xlu0 %v4055
    %v4057 = vpop.xlane.xlu0 %4056
    %v4058 = vsel %vm92, %v4054, 0.0
    %4059 = vadd.xlane.f32.xlu0 %v4058
    %v4060 = vpop.xlane.xlu0 %4059
    %v4061 = vrcp.pop %v4057
    %v4062 = vrcp.pop %v4060
    %v4063 = vmul.f32 %v4052, %v4061
    %v4064 = vmul.f32 %v4054, %v4062
    %v4066 = vsel %vm92, %v4063, 0
    %v4069 = vsel %vm92, %v4064, 0
    %4071 = vmatprep.subr.mxu0 0.0
    %4072 = vmatpush1.msra.mxu0 %v3948
    %4073 = vmatprep.subr.mxu0 0.0
    %4074 = vmatpush1.msra.mxu0 %v3953
    %4075 = vmatprep.subr.mxu0 0.0
    %4076 = vmatpush1.msra.mxu0 0.0
    %4077 = vmatprep.subr.mxu0 0.0
    %4078 = vmatpush1.msra.mxu0 0.0
    %4079 = vmatprep.subr.mxu0 0.0
    %4080 = vmatpush1.msra.mxu0 0.0
    %4081 = vmatprep.subr.mxu0 0.0
    %4082 = vmatpush1.msra.mxu0 0.0
    %4083 = vmatprep.subr.mxu0 0.0
    %4084 = vmatpush1.msra.mxu0 0.0
    %4085 = vmatprep.subr.mxu0 0.0
    %4086 = vmatpush1.msra.mxu0 0.0
    %4087 = vmatprep.subr.mxu0 0.0
    %4088 = vmatpush1.msra.mxu0 0.0
    %4089 = vmatprep.subr.mxu0 0.0
    %4090 = vmatpush1.msra.mxu0 0.0
    %4091 = vmatprep.subr.mxu0 0.0
    %4092 = vmatpush1.msra.mxu0 0.0
    %4093 = vmatprep.subr.mxu0 0.0
    %4094 = vmatpush1.msra.mxu0 0.0
    %4095 = vmatprep.subr.mxu0 0.0
    %4096 = vmatpush1.msra.mxu0 0.0
    %4097 = vmatprep.subr.mxu0 0.0
    %4098 = vmatpush1.msra.mxu0 0.0
    %4099 = vmatprep.subr.mxu0 0.0
    %4100 = vmatpush1.msra.mxu0 0.0
    %4101 = vmatprep.subr.mxu0 0.0
    %4102 = vmatpush1.msra.mxu0 0.0
    %4103 = vmatprep.subr.mxu0 0.0
    %4104 = vmatpush1.msra.mxu0 0.0
    %4105 = vmatprep.subr.mxu0 0.0
    %4106 = vmatpush1.msra.mxu0 0.0
    %4107 = vmatprep.subr.mxu0 0.0
    %4108 = vmatpush1.msra.mxu0 0.0
    %4109 = vmatprep.subr.mxu0 0.0
    %4110 = vmatpush1.msra.mxu0 0.0
    %4111 = vmatprep.subr.mxu0 0.0
    %4112 = vmatpush1.msra.mxu0 0.0
    %4113 = vmatprep.subr.mxu0 0.0
    %4114 = vmatpush1.msra.mxu0 0.0
    %4115 = vmatprep.subr.mxu0 0.0
    %4116 = vmatpush1.msra.mxu0 0.0
    %4117 = vmatprep.subr.mxu0 0.0
    %4118 = vmatpush1.msra.mxu0 0.0
    %4119 = vmatprep.subr.mxu0 0.0
    %4120 = vmatpush1.msra.mxu0 0.0
    %4121 = vmatprep.subr.mxu0 0.0
    %4122 = vmatpush1.msra.mxu0 0.0
    %4123 = vmatprep.subr.mxu0 0.0
    %4124 = vmatpush1.msra.mxu0 0.0
    %4125 = vmatprep.subr.mxu0 0.0
    %4126 = vmatpush1.msra.mxu0 0.0
    %4127 = vmatprep.subr.mxu0 0.0
    %4128 = vmatpush1.msra.mxu0 0.0
    %4129 = vmatprep.subr.mxu0 0.0
    %4130 = vmatpush1.msra.mxu0 0.0
    %4131 = vmatprep.subr.mxu0 0.0
    %4132 = vmatpush1.msra.mxu0 0.0
    %4133 = vmatprep.subr.mxu0 0.0
    %4134 = vmatpush1.msra.mxu0 0.0
    %4135 = vmatprep.mubr.f32.mxu0 0.0
    %4136 = vmatmul.mubr.f32.gmra.mrb[0].mxu0 %v4066
    %v4137 = vpop.f32.mrb[0].mxu0
    %v4138 = vadd.f32 0.0, %v4137
    %v4139 = vpop.f32.mrb[0].mxu0
    %4140 = vmatprep.mubr.f32.mxu0 0.0
    %4141 = vmatmul.mubr.f32.gmra.mrb[0].mxu0 %v4069
    %v4142 = vpop.f32.mrb[0].mxu0
    %v4143 = vadd.f32 0.0, %v4142
    %v4144 = vpop.f32.mrb[0].mxu0
    %4145 = vdwg.mxu0
    %v4146 = vld [vmem:[#allocation2 + $0x498] sm:$0xff]
    %v4148 = vsel %vm497, %v4138, 0
    %v4151 = vsel %vm497, %v4143, 0
    %4153 = vmatprep.subr.mxu0 0.0
    %4154 = vmatpush1.msra.mxu0 %v4146
    %4155 = vmatprep.subr.mxu0 0.0
    %4156 = vmatpush1.msra.mxu0 0.0
    %4157 = vmatprep.subr.mxu0 0.0
    %4158 = vmatpush1.msra.mxu0 0.0
    %4159 = vmatprep.subr.mxu0 0.0
    %4160 = vmatpush1.msra.mxu0 0.0
    %4161 = vmatprep.subr.mxu0 0.0
    %4162 = vmatpush1.msra.mxu0 0.0
    %4163 = vmatprep.subr.mxu0 0.0
    %4164 = vmatpush1.msra.mxu0 0.0
    %4165 = vmatprep.subr.mxu0 0.0
    %4166 = vmatpush1.msra.mxu0 0.0
    %4167 = vmatprep.subr.mxu0 0.0
    %4168 = vmatpush1.msra.mxu0 0.0
    %4169 = vmatprep.subr.mxu0 0.0
    %4170 = vmatpush1.msra.mxu0 0.0
    %4171 = vmatprep.subr.mxu0 0.0
    %4172 = vmatpush1.msra.mxu0 0.0
    %4173 = vmatprep.subr.mxu0 0.0
    %4174 = vmatpush1.msra.mxu0 0.0
    %4175 = vmatprep.subr.mxu0 0.0
    %4176 = vmatpush1.msra.mxu0 0.0
    %4177 = vmatprep.subr.mxu0 0.0
    %4178 = vmatpush1.msra.mxu0 0.0
    %4179 = vmatprep.subr.mxu0 0.0
    %4180 = vmatpush1.msra.mxu0 0.0
    %4181 = vmatprep.subr.mxu0 0.0
    %4182 = vmatpush1.msra.mxu0 0.0
    %4183 = vmatprep.subr.mxu0 0.0
    %4184 = vmatpush1.msra.mxu0 0.0
    %4185 = vmatprep.subr.mxu0 0.0
    %4186 = vmatpush1.msra.mxu0 0.0
    %4187 = vmatprep.subr.mxu0 0.0
    %4188 = vmatpush1.msra.mxu0 0.0
    %4189 = vmatprep.subr.mxu0 0.0
    %4190 = vmatpush1.msra.mxu0 0.0
    %4191 = vmatprep.subr.mxu0 0.0
    %4192 = vmatpush1.msra.mxu0 0.0
    %4193 = vmatprep.subr.mxu0 0.0
    %4194 = vmatpush1.msra.mxu0 0.0
    %4195 = vmatprep.subr.mxu0 0.0
    %4196 = vmatpush1.msra.mxu0 0.0
    %4197 = vmatprep.subr.mxu0 0.0
    %4198 = vmatpush1.msra.mxu0 0.0
    %4199 = vmatprep.subr.mxu0 0.0
    %4200 = vmatpush1.msra.mxu0 0.0
    %4201 = vmatprep.subr.mxu0 0.0
    %4202 = vmatpush1.msra.mxu0 0.0
    %4203 = vmatprep.subr.mxu0 0.0
    %4204 = vmatpush1.msra.mxu0 0.0
    %4205 = vmatprep.subr.mxu0 0.0
    %4206 = vmatpush1.msra.mxu0 0.0
    %4207 = vmatprep.subr.mxu0 0.0
    %4208 = vmatpush1.msra.mxu0 0.0
    %4209 = vmatprep.subr.mxu0 0.0
    %4210 = vmatpush1.msra.mxu0 0.0
    %4211 = vmatprep.subr.mxu0 0.0
    %4212 = vmatpush1.msra.mxu0 0.0
    %4213 = vmatprep.subr.mxu0 0.0
    %4214 = vmatpush1.msra.mxu0 0.0
    %4215 = vmatprep.subr.mxu0 0.0
    %4216 = vmatpush1.msra.mxu0 0.0
    %4217 = vmatprep.mubr.f32.mxu0 0.0
    %4218 = vmatmul.mubr.f32.gmra.mrb[0].mxu0 %v4148
    %v4219 = vpop.f32.mrb[0].mxu0
    %v4220 = vadd.f32 0.0, %v4219
    %v4221 = vpop.f32.mrb[0].mxu0
    %4222 = vmatprep.mubr.f32.mxu0 0.0
    %4223 = vmatmul.mubr.f32.gmra.mrb[0].mxu0 %v4151
    %v4224 = vpop.f32.mrb[0].mxu0
    %v4225 = vadd.f32 0.0, %v4224
    %v4226 = vpop.f32.mrb[0].mxu0
    %4227 = vdwg.mxu0
    %v4228 = vadd.f32 %v3702, %v4220
    %v4229 = vadd.f32 %v3703, %v4225
    %v4230 = vld [vmem:[#allocation2 + $0x4b8] sm:$0xff]
    %v4231 = vld [vmem:[#allocation2 + $0x4c0] sm:$0xff]
    %v4232 = vld [vmem:[#allocation2 + $0x4c8] sm:$0xff]
    %v4233 = vld [vmem:[#allocation2 + $0x4d0] sm:$0xff]
    %v4234 = vld [vmem:[#allocation2 + $0x520] sm:$0x1]
    %v4235 = vlaneseq
    %v4236 = vshrl.u32 %v4235, 7
    %v4237 = vsub.s32 0, %v4236
    %v4238 = vrot.slane %v4234, %v4237
    %4239 = vmatprep.subr.mxu0 0.0
    %4240 = vmatpush1.msra.mxu0 %v4230
    %4241 = vmatprep.subr.mxu0 0.0
    %4242 = vmatpush1.msra.mxu0 %v4231
    %4243 = vmatprep.subr.mxu0 0.0
    %4244 = vmatpush1.msra.mxu0 %v4232
    %4245 = vmatprep.subr.mxu0 0.0
    %4246 = vmatpush1.msra.mxu0 %v4233
    %4247 = vmatprep.subr.mxu0 0.0
    %4248 = vmatpush1.msra.mxu0 0.0
    %4249 = vmatprep.subr.mxu0 0.0
    %4250 = vmatpush1.msra.mxu0 0.0
    %4251 = vmatprep.subr.mxu0 0.0
    %4252 = vmatpush1.msra.mxu0 0.0
    %4253 = vmatprep.subr.mxu0 0.0
    %4254 = vmatpush1.msra.mxu0 0.0
    %4255 = vmatprep.subr.mxu0 0.0
    %4256 = vmatpush1.msra.mxu0 0.0
    %4257 = vmatprep.subr.mxu0 0.0
    %4258 = vmatpush1.msra.mxu0 0.0
    %4259 = vmatprep.subr.mxu0 0.0
    %4260 = vmatpush1.msra.mxu0 0.0
    %4261 = vmatprep.subr.mxu0 0.0
    %4262 = vmatpush1.msra.mxu0 0.0
    %4263 = vmatprep.subr.mxu0 0.0
    %4264 = vmatpush1.msra.mxu0 0.0
    %4265 = vmatprep.subr.mxu0 0.0
    %4266 = vmatpush1.msra.mxu0 0.0
    %4267 = vmatprep.subr.mxu0 0.0
    %4268 = vmatpush1.msra.mxu0 0.0
    %4269 = vmatprep.subr.mxu0 0.0
    %4270 = vmatpush1.msra.mxu0 0.0
    %4271 = vmatprep.subr.mxu0 0.0
    %4272 = vmatpush1.msra.mxu0 0.0
    %4273 = vmatprep.subr.mxu0 0.0
    %4274 = vmatpush1.msra.mxu0 0.0
    %4275 = vmatprep.subr.mxu0 0.0
    %4276 = vmatpush1.msra.mxu0 0.0
    %4277 = vmatprep.subr.mxu0 0.0
    %4278 = vmatpush1.msra.mxu0 0.0
    %4279 = vmatprep.subr.mxu0 0.0
    %4280 = vmatpush1.msra.mxu0 0.0
    %4281 = vmatprep.subr.mxu0 0.0
    %4282 = vmatpush1.msra.mxu0 0.0
    %4283 = vmatprep.subr.mxu0 0.0
    %4284 = vmatpush1.msra.mxu0 0.0
    %4285 = vmatprep.subr.mxu0 0.0
    %4286 = vmatpush1.msra.mxu0 0.0
    %4287 = vmatprep.subr.mxu0 0.0
    %4288 = vmatpush1.msra.mxu0 0.0
    %4289 = vmatprep.subr.mxu0 0.0
    %4290 = vmatpush1.msra.mxu0 0.0
    %4291 = vmatprep.subr.mxu0 0.0
    %4292 = vmatpush1.msra.mxu0 0.0
    %4293 = vmatprep.subr.mxu0 0.0
    %4294 = vmatpush1.msra.mxu0 0.0
    %4295 = vmatprep.subr.mxu0 0.0
    %4296 = vmatpush1.msra.mxu0 0.0
    %4297 = vmatprep.subr.mxu0 0.0
    %4298 = vmatpush1.msra.mxu0 0.0
    %4299 = vmatprep.subr.mxu0 0.0
    %4300 = vmatpush1.msra.mxu0 0.0
    %4301 = vmatprep.subr.mxu0 0.0
    %4302 = vmatpush1.msra.mxu0 0.0
    %4303 = vmatprep.mubr.f32.mxu0 0.0
    %4304 = vmatmul.mubr.f32.gmra.mrb[0].mxu0 %v2652
    %v4305 = vpop.f32.mrb[0].mxu0
    %v4306 = vadd.f32 %v4238, %v4305
    %v4307 = vpop.f32.mrb[0].mxu0
    %4308 = vmatprep.mubr.f32.mxu0 0.0
    %4309 = vmatmul.mubr.f32.gmra.mrb[0].mxu0 %v2655
    %v4310 = vpop.f32.mrb[0].mxu0
    %v4311 = vadd.f32 %v4238, %v4310
    %v4312 = vpop.f32.mrb[0].mxu0
    %4313 = vdwg.mxu0
    %v4314 = vld [vmem:[#allocation2 + $0x4d8] sm:$0xff]
    %v4315 = vld [vmem:[#allocation2 + $0x4e0] sm:$0xff]
    %v4316 = vld [vmem:[#allocation2 + $0x4e8] sm:$0xff]
    %v4317 = vld [vmem:[#allocation2 + $0x4f0] sm:$0xff]
    %v4318 = vld [vmem:[#allocation2 + $0x528] sm:$0x1]
    %v4319 = vlaneseq
    %v4320 = vshrl.u32 %v4319, 7
    %v4321 = vsub.s32 0, %v4320
    %v4322 = vrot.slane %v4318, %v4321
    %4323 = vmatprep.subr.mxu0 0.0
    %4324 = vmatpush1.msra.mxu0 %v4314
    %4325 = vmatprep.subr.mxu0 0.0
    %4326 = vmatpush1.msra.mxu0 %v4315
    %4327 = vmatprep.subr.mxu0 0.0
    %4328 = vmatpush1.msra.mxu0 %v4316
    %4329 = vmatprep.subr.mxu0 0.0
    %4330 = vmatpush1.msra.mxu0 %v4317
    %4331 = vmatprep.subr.mxu0 0.0
    %4332 = vmatpush1.msra.mxu0 0.0
    %4333 = vmatprep.subr.mxu0 0.0
    %4334 = vmatpush1.msra.mxu0 0.0
    %4335 = vmatprep.subr.mxu0 0.0
    %4336 = vmatpush1.msra.mxu0 0.0
    %4337 = vmatprep.subr.mxu0 0.0
    %4338 = vmatpush1.msra.mxu0 0.0
    %4339 = vmatprep.subr.mxu0 0.0
    %4340 = vmatpush1.msra.mxu0 0.0
    %4341 = vmatprep.subr.mxu0 0.0
    %4342 = vmatpush1.msra.mxu0 0.0
    %4343 = vmatprep.subr.mxu0 0.0
    %4344 = vmatpush1.msra.mxu0 0.0
    %4345 = vmatprep.subr.mxu0 0.0
    %4346 = vmatpush1.msra.mxu0 0.0
    %4347 = vmatprep.subr.mxu0 0.0
    %4348 = vmatpush1.msra.mxu0 0.0
    %4349 = vmatprep.subr.mxu0 0.0
    %4350 = vmatpush1.msra.mxu0 0.0
    %4351 = vmatprep.subr.mxu0 0.0
    %4352 = vmatpush1.msra.mxu0 0.0
    %4353 = vmatprep.subr.mxu0 0.0
    %4354 = vmatpush1.msra.mxu0 0.0
    %4355 = vmatprep.subr.mxu0 0.0
    %4356 = vmatpush1.msra.mxu0 0.0
    %4357 = vmatprep.subr.mxu0 0.0
    %4358 = vmatpush1.msra.mxu0 0.0
    %4359 = vmatprep.subr.mxu0 0.0
    %4360 = vmatpush1.msra.mxu0 0.0
    %4361 = vmatprep.subr.mxu0 0.0
    %4362 = vmatpush1.msra.mxu0 0.0
    %4363 = vmatprep.subr.mxu0 0.0
    %4364 = vmatpush1.msra.mxu0 0.0
    %4365 = vmatprep.subr.mxu0 0.0
    %4366 = vmatpush1.msra.mxu0 0.0
    %4367 = vmatprep.subr.mxu0 0.0
    %4368 = vmatpush1.msra.mxu0 0.0
    %4369 = vmatprep.subr.mxu0 0.0
    %4370 = vmatpush1.msra.mxu0 0.0
    %4371 = vmatprep.subr.mxu0 0.0
    %4372 = vmatpush1.msra.mxu0 0.0
    %4373 = vmatprep.subr.mxu0 0.0
    %4374 = vmatpush1.msra.mxu0 0.0
    %4375 = vmatprep.subr.mxu0 0.0
    %4376 = vmatpush1.msra.mxu0 0.0
    %4377 = vmatprep.subr.mxu0 0.0
    %4378 = vmatpush1.msra.mxu0 0.0
    %4379 = vmatprep.subr.mxu0 0.0
    %4380 = vmatpush1.msra.mxu0 0.0
    %4381 = vmatprep.subr.mxu0 0.0
    %4382 = vmatpush1.msra.mxu0 0.0
    %4383 = vmatprep.subr.mxu0 0.0
    %4384 = vmatpush1.msra.mxu0 0.0
    %4385 = vmatprep.subr.mxu0 0.0
    %4386 = vmatpush1.msra.mxu0 0.0
    %4387 = vmatprep.mubr.f32.mxu0 0.0
    %4388 = vmatmul.mubr.f32.gmra.mrb[0].mxu0 %v2652
    %v4389 = vpop.f32.mrb[0].mxu0
    %v4390 = vadd.f32 %v4322, %v4389
    %v4391 = vpop.f32.mrb[0].mxu0
    %4392 = vmatprep.mubr.f32.mxu0 0.0
    %4393 = vmatmul.mubr.f32.gmra.mrb[0].mxu0 %v2655
    %v4394 = vpop.f32.mrb[0].mxu0
    %v4395 = vadd.f32 %v4322, %v4394
    %v4396 = vpop.f32.mrb[0].mxu0
    %4397 = vdwg.mxu0
    %v4398 = vld [vmem:[#allocation2 + $0x4f8] sm:$0xff]
    %v4399 = vld [vmem:[#allocation2 + $0x500] sm:$0xff]
    %v4400 = vld [vmem:[#allocation2 + $0x508] sm:$0xff]
    %v4401 = vld [vmem:[#allocation2 + $0x510] sm:$0xff]
    %v4402 = vld [vmem:[#allocation2 + $0x530] sm:$0x1]
    %v4403 = vlaneseq
    %v4404 = vshrl.u32 %v4403, 7
    %v4405 = vsub.s32 0, %v4404
    %v4406 = vrot.slane %v4402, %v4405
    %4407 = vmatprep.subr.mxu0 0.0
    %4408 = vmatpush1.msra.mxu0 %v4398
    %4409 = vmatprep.subr.mxu0 0.0
    %4410 = vmatpush1.msra.mxu0 %v4399
    %4411 = vmatprep.subr.mxu0 0.0
    %4412 = vmatpush1.msra.mxu0 %v4400
    %4413 = vmatprep.subr.mxu0 0.0
    %4414 = vmatpush1.msra.mxu0 %v4401
    %4415 = vmatprep.subr.mxu0 0.0
    %4416 = vmatpush1.msra.mxu0 0.0
    %4417 = vmatprep.subr.mxu0 0.0
    %4418 = vmatpush1.msra.mxu0 0.0
    %4419 = vmatprep.subr.mxu0 0.0
    %4420 = vmatpush1.msra.mxu0 0.0
    %4421 = vmatprep.subr.mxu0 0.0
    %4422 = vmatpush1.msra.mxu0 0.0
    %4423 = vmatprep.subr.mxu0 0.0
    %4424 = vmatpush1.msra.mxu0 0.0
    %4425 = vmatprep.subr.mxu0 0.0
    %4426 = vmatpush1.msra.mxu0 0.0
    %4427 = vmatprep.subr.mxu0 0.0
    %4428 = vmatpush1.msra.mxu0 0.0
    %4429 = vmatprep.subr.mxu0 0.0
    %4430 = vmatpush1.msra.mxu0 0.0
    %4431 = vmatprep.subr.mxu0 0.0
    %4432 = vmatpush1.msra.mxu0 0.0
    %4433 = vmatprep.subr.mxu0 0.0
    %4434 = vmatpush1.msra.mxu0 0.0
    %4435 = vmatprep.subr.mxu0 0.0
    %4436 = vmatpush1.msra.mxu0 0.0
    %4437 = vmatprep.subr.mxu0 0.0
    %4438 = vmatpush1.msra.mxu0 0.0
    %4439 = vmatprep.subr.mxu0 0.0
    %4440 = vmatpush1.msra.mxu0 0.0
    %4441 = vmatprep.subr.mxu0 0.0
    %4442 = vmatpush1.msra.mxu0 0.0
    %4443 = vmatprep.subr.mxu0 0.0
    %4444 = vmatpush1.msra.mxu0 0.0
    %4445 = vmatprep.subr.mxu0 0.0
    %4446 = vmatpush1.msra.mxu0 0.0
    %4447 = vmatprep.subr.mxu0 0.0
    %4448 = vmatpush1.msra.mxu0 0.0
    %4449 = vmatprep.subr.mxu0 0.0
    %4450 = vmatpush1.msra.mxu0 0.0
    %4451 = vmatprep.subr.mxu0 0.0
    %4452 = vmatpush1.msra.mxu0 0.0
    %4453 = vmatprep.subr.mxu0 0.0
    %4454 = vmatpush1.msra.mxu0 0.0
    %4455 = vmatprep.subr.mxu0 0.0
    %4456 = vmatpush1.msra.mxu0 0.0
    %4457 = vmatprep.subr.mxu0 0.0
    %4458 = vmatpush1.msra.mxu0 0.0
    %4459 = vmatprep.subr.mxu0 0.0
    %4460 = vmatpush1.msra.mxu0 0.0
    %4461 = vmatprep.subr.mxu0 0.0
    %4462 = vmatpush1.msra.mxu0 0.0
    %4463 = vmatprep.subr.mxu0 0.0
    %4464 = vmatpush1.msra.mxu0 0.0
    %4465 = vmatprep.subr.mxu0 0.0
    %4466 = vmatpush1.msra.mxu0 0.0
    %4467 = vmatprep.subr.mxu0 0.0
    %4468 = vmatpush1.msra.mxu0 0.0
    %4469 = vmatprep.subr.mxu0 0.0
    %4470 = vmatpush1.msra.mxu0 0.0
    %4471 = vmatprep.mubr.f32.mxu0 0.0
    %4472 = vmatmul.mubr.f32.gmra.mrb[0].mxu0 %v2652
    %v4473 = vpop.f32.mrb[0].mxu0
    %v4474 = vadd.f32 %v4406, %v4473
    %v4475 = vpop.f32.mrb[0].mxu0
    %4476 = vmatprep.mubr.f32.mxu0 0.0
    %4477 = vmatmul.mubr.f32.gmra.mrb[0].mxu0 %v2655
    %v4478 = vpop.f32.mrb[0].mxu0
    %v4479 = vadd.f32 %v4406, %v4478
    %v4480 = vpop.f32.mrb[0].mxu0
    %4481 = vdwg.mxu0
    %v4483 = vsel %vm497, %v4306, 0
    %v4486 = vsel %vm497, %v4311, 0
    %v4489 = vsel %vm497, %v4390, 0
    %v4492 = vsel %vm497, %v4395, 0
    %4494 = vmatprep.subr.mxu0 0.0
    %4495 = vmatpush1.xpose.msra.mxu0 %v4489
    %4496 = vmatprep.subr.mxu0 0.0
    %4497 = vmatpush1.xpose.msra.mxu0 %v4492
    %4498 = vmatprep.subr.mxu0 0.0
    %4499 = vmatpush1.xpose.msra.mxu0 0.0
    %4500 = vmatprep.subr.mxu0 0.0
    %4501 = vmatpush1.xpose.msra.mxu0 0.0
    %4502 = vmatprep.subr.mxu0 0.0
    %4503 = vmatpush1.xpose.msra.mxu0 0.0
    %4504 = vmatprep.subr.mxu0 0.0
    %4505 = vmatpush1.xpose.msra.mxu0 0.0
    %4506 = vmatprep.subr.mxu0 0.0
    %4507 = vmatpush1.xpose.msra.mxu0 0.0
    %4508 = vmatprep.subr.mxu0 0.0
    %4509 = vmatpush1.xpose.msra.mxu0 0.0
    %4510 = vmatprep.subr.mxu0 0.0
    %4511 = vmatpush1.xpose.msra.mxu0 0.0
    %4512 = vmatprep.subr.mxu0 0.0
    %4513 = vmatpush1.xpose.msra.mxu0 0.0
    %4514 = vmatprep.subr.mxu0 0.0
    %4515 = vmatpush1.xpose.msra.mxu0 0.0
    %4516 = vmatprep.subr.mxu0 0.0
    %4517 = vmatpush1.xpose.msra.mxu0 0.0
    %4518 = vmatprep.subr.mxu0 0.0
    %4519 = vmatpush1.xpose.msra.mxu0 0.0
    %4520 = vmatprep.subr.mxu0 0.0
    %4521 = vmatpush1.xpose.msra.mxu0 0.0
    %4522 = vmatprep.subr.mxu0 0.0
    %4523 = vmatpush1.xpose.msra.mxu0 0.0
    %4524 = vmatprep.subr.mxu0 0.0
    %4525 = vmatpush1.xpose.msra.mxu0 0.0
    %4526 = vmatprep.subr.mxu0 0.0
    %4527 = vmatpush1.xpose.msra.mxu0 0.0
    %4528 = vmatprep.subr.mxu0 0.0
    %4529 = vmatpush1.xpose.msra.mxu0 0.0
    %4530 = vmatprep.subr.mxu0 0.0
    %4531 = vmatpush1.xpose.msra.mxu0 0.0
    %4532 = vmatprep.subr.mxu0 0.0
    %4533 = vmatpush1.xpose.msra.mxu0 0.0
    %4534 = vmatprep.subr.mxu0 0.0
    %4535 = vmatpush1.xpose.msra.mxu0 0.0
    %4536 = vmatprep.subr.mxu0 0.0
    %4537 = vmatpush1.xpose.msra.mxu0 0.0
    %4538 = vmatprep.subr.mxu0 0.0
    %4539 = vmatpush1.xpose.msra.mxu0 0.0
    %4540 = vmatprep.subr.mxu0 0.0
    %4541 = vmatpush1.xpose.msra.mxu0 0.0
    %4542 = vmatprep.subr.mxu0 0.0
    %4543 = vmatpush1.xpose.msra.mxu0 0.0
    %4544 = vmatprep.subr.mxu0 0.0
    %4545 = vmatpush1.xpose.msra.mxu0 0.0
    %4546 = vmatprep.subr.mxu0 0.0
    %4547 = vmatpush1.xpose.msra.mxu0 0.0
    %4548 = vmatprep.subr.mxu0 0.0
    %4549 = vmatpush1.xpose.msra.mxu0 0.0
    %4550 = vmatprep.subr.mxu0 0.0
    %4551 = vmatpush1.xpose.msra.mxu0 0.0
    %4552 = vmatprep.subr.mxu0 0.0
    %4553 = vmatpush1.xpose.msra.mxu0 0.0
    %4554 = vmatprep.subr.mxu0 0.0
    %4555 = vmatpush1.xpose.msra.mxu0 0.0
    %4556 = vmatprep.subr.mxu0 0.0
    %4557 = vmatpush1.xpose.msra.mxu0 0.0
    %4558 = vmatprep.mubr.f32.mxu0 0.0
    %4559 = vmatmul.mubr.f32.gmra.mrb[0].mxu0 %v4483
    %v4560 = vpop.f32.mrb[0].mxu0
    %v4561 = vadd.f32 %v236, %v4560
    %v4562 = vpop.f32.mrb[0].mxu0
    %4563 = vmatprep.mubr.f32.mxu0 0.0
    %4564 = vmatmul.mubr.f32.gmra.mrb[0].mxu0 %v4486
    %v4565 = vpop.f32.mrb[0].mxu0
    %v4566 = vadd.f32 %v237, %v4565
    %v4567 = vpop.f32.mrb[0].mxu0
    %4568 = vdwg.mxu0
    %v4569 = vsel %vm92, %v4561, -inf
    %4570 = vmax.xlane.f32.xlu0 %v4569
    %v4571 = vpop.xlane.xlu0 %4570
    %v4572 = vsel %vm92, %v4566, -inf
    %4573 = vmax.xlane.f32.xlu0 %v4572
    %v4574 = vpop.xlane.xlu0 %4573
    %v4575 = vsub.f32 %v4561, %v4571
    %v4576 = vsub.f32 %v4566, %v4574
    %v4577 = vmul.f32 %v4575, 1.442695
    %v4578 = vpow.pop %v4577
    %v4579 = vmul.f32 %v4576, 1.442695
    %v4580 = vpow.pop %v4579
    %v4581 = vsel %vm92, %v4578, 0.0
    %4582 = vadd.xlane.f32.xlu0 %v4581
    %v4583 = vpop.xlane.xlu0 %4582
    %v4584 = vsel %vm92, %v4580, 0.0
    %4585 = vadd.xlane.f32.xlu0 %v4584
    %v4586 = vpop.xlane.xlu0 %4585
    %v4587 = vrcp.pop %v4583
    %v4588 = vrcp.pop %v4586
    %v4589 = vmul.f32 %v4578, %v4587
    %v4590 = vmul.f32 %v4580, %v4588
    %v4592 = vsel %vm92, %v4589, 0
    %v4595 = vsel %vm92, %v4590, 0
    %4597 = vmatprep.subr.mxu0 0.0
    %4598 = vmatpush1.msra.mxu0 %v4474
    %4599 = vmatprep.subr.mxu0 0.0
    %4600 = vmatpush1.msra.mxu0 %v4479
    %4601 = vmatprep.subr.mxu0 0.0
    %4602 = vmatpush1.msra.mxu0 0.0
    %4603 = vmatprep.subr.mxu0 0.0
    %4604 = vmatpush1.msra.mxu0 0.0
    %4605 = vmatprep.subr.mxu0 0.0
    %4606 = vmatpush1.msra.mxu0 0.0
    %4607 = vmatprep.subr.mxu0 0.0
    %4608 = vmatpush1.msra.mxu0 0.0
    %4609 = vmatprep.subr.mxu0 0.0
    %4610 = vmatpush1.msra.mxu0 0.0
    %4611 = vmatprep.subr.mxu0 0.0
    %4612 = vmatpush1.msra.mxu0 0.0
    %4613 = vmatprep.subr.mxu0 0.0
    %4614 = vmatpush1.msra.mxu0 0.0
    %4615 = vmatprep.subr.mxu0 0.0
    %4616 = vmatpush1.msra.mxu0 0.0
    %4617 = vmatprep.subr.mxu0 0.0
    %4618 = vmatpush1.msra.mxu0 0.0
    %4619 = vmatprep.subr.mxu0 0.0
    %4620 = vmatpush1.msra.mxu0 0.0
    %4621 = vmatprep.subr.mxu0 0.0
    %4622 = vmatpush1.msra.mxu0 0.0
    %4623 = vmatprep.subr.mxu0 0.0
    %4624 = vmatpush1.msra.mxu0 0.0
    %4625 = vmatprep.subr.mxu0 0.0
    %4626 = vmatpush1.msra.mxu0 0.0
    %4627 = vmatprep.subr.mxu0 0.0
    %4628 = vmatpush1.msra.mxu0 0.0
    %4629 = vmatprep.subr.mxu0 0.0
    %4630 = vmatpush1.msra.mxu0 0.0
    %4631 = vmatprep.subr.mxu0 0.0
    %4632 = vmatpush1.msra.mxu0 0.0
    %4633 = vmatprep.subr.mxu0 0.0
    %4634 = vmatpush1.msra.mxu0 0.0
    %4635 = vmatprep.subr.mxu0 0.0
    %4636 = vmatpush1.msra.mxu0 0.0
    %4637 = vmatprep.subr.mxu0 0.0
    %4638 = vmatpush1.msra.mxu0 0.0
    %4639 = vmatprep.subr.mxu0 0.0
    %4640 = vmatpush1.msra.mxu0 0.0
    %4641 = vmatprep.subr.mxu0 0.0
    %4642 = vmatpush1.msra.mxu0 0.0
    %4643 = vmatprep.subr.mxu0 0.0
    %4644 = vmatpush1.msra.mxu0 0.0
    %4645 = vmatprep.subr.mxu0 0.0
    %4646 = vmatpush1.msra.mxu0 0.0
    %4647 = vmatprep.subr.mxu0 0.0
    %4648 = vmatpush1.msra.mxu0 0.0
    %4649 = vmatprep.subr.mxu0 0.0
    %4650 = vmatpush1.msra.mxu0 0.0
    %4651 = vmatprep.subr.mxu0 0.0
    %4652 = vmatpush1.msra.mxu0 0.0
    %4653 = vmatprep.subr.mxu0 0.0
    %4654 = vmatpush1.msra.mxu0 0.0
    %4655 = vmatprep.subr.mxu0 0.0
    %4656 = vmatpush1.msra.mxu0 0.0
    %4657 = vmatprep.subr.mxu0 0.0
    %4658 = vmatpush1.msra.mxu0 0.0
    %4659 = vmatprep.subr.mxu0 0.0
    %4660 = vmatpush1.msra.mxu0 0.0
    %4661 = vmatprep.mubr.f32.mxu0 0.0
    %4662 = vmatmul.mubr.f32.gmra.mrb[0].mxu0 %v4592
    %v4663 = vpop.f32.mrb[0].mxu0
    %v4664 = vadd.f32 0.0, %v4663
    %v4665 = vpop.f32.mrb[0].mxu0
    %4666 = vmatprep.mubr.f32.mxu0 0.0
    %4667 = vmatmul.mubr.f32.gmra.mrb[0].mxu0 %v4595
    %v4668 = vpop.f32.mrb[0].mxu0
    %v4669 = vadd.f32 0.0, %v4668
    %v4670 = vpop.f32.mrb[0].mxu0
    %4671 = vdwg.mxu0
    %v4672 = vld [vmem:[#allocation2 + $0x518] sm:$0xff]
    %v4674 = vsel %vm497, %v4664, 0
    %v4677 = vsel %vm497, %v4669, 0
    %4679 = vmatprep.subr.mxu0 0.0
    %4680 = vmatpush1.msra.mxu0 %v4672
    %4681 = vmatprep.subr.mxu0 0.0
    %4682 = vmatpush1.msra.mxu0 0.0
    %4683 = vmatprep.subr.mxu0 0.0
    %4684 = vmatpush1.msra.mxu0 0.0
    %4685 = vmatprep.subr.mxu0 0.0
    %4686 = vmatpush1.msra.mxu0 0.0
    %4687 = vmatprep.subr.mxu0 0.0
    %4688 = vmatpush1.msra.mxu0 0.0
    %4689 = vmatprep.subr.mxu0 0.0
    %4690 = vmatpush1.msra.mxu0 0.0
    %4691 = vmatprep.subr.mxu0 0.0
    %4692 = vmatpush1.msra.mxu0 0.0
    %4693 = vmatprep.subr.mxu0 0.0
    %4694 = vmatpush1.msra.mxu0 0.0
    %4695 = vmatprep.subr.mxu0 0.0
    %4696 = vmatpush1.msra.mxu0 0.0
    %4697 = vmatprep.subr.mxu0 0.0
    %4698 = vmatpush1.msra.mxu0 0.0
    %4699 = vmatprep.subr.mxu0 0.0
    %4700 = vmatpush1.msra.mxu0 0.0
    %4701 = vmatprep.subr.mxu0 0.0
    %4702 = vmatpush1.msra.mxu0 0.0
    %4703 = vmatprep.subr.mxu0 0.0
    %4704 = vmatpush1.msra.mxu0 0.0
    %4705 = vmatprep.subr.mxu0 0.0
    %4706 = vmatpush1.msra.mxu0 0.0
    %4707 = vmatprep.subr.mxu0 0.0
    %4708 = vmatpush1.msra.mxu0 0.0
    %4709 = vmatprep.subr.mxu0 0.0
    %4710 = vmatpush1.msra.mxu0 0.0
    %4711 = vmatprep.subr.mxu0 0.0
    %4712 = vmatpush1.msra.mxu0 0.0
    %4713 = vmatprep.subr.mxu0 0.0
    %4714 = vmatpush1.msra.mxu0 0.0
    %4715 = vmatprep.subr.mxu0 0.0
    %4716 = vmatpush1.msra.mxu0 0.0
    %4717 = vmatprep.subr.mxu0 0.0
    %4718 = vmatpush1.msra.mxu0 0.0
    %4719 = vmatprep.subr.mxu0 0.0
    %4720 = vmatpush1.msra.mxu0 0.0
    %4721 = vmatprep.subr.mxu0 0.0
    %4722 = vmatpush1.msra.mxu0 0.0
    %4723 = vmatprep.subr.mxu0 0.0
    %4724 = vmatpush1.msra.mxu0 0.0
    %4725 = vmatprep.subr.mxu0 0.0
    %4726 = vmatpush1.msra.mxu0 0.0
    %4727 = vmatprep.subr.mxu0 0.0
    %4728 = vmatpush1.msra.mxu0 0.0
    %4729 = vmatprep.subr.mxu0 0.0
    %4730 = vmatpush1.msra.mxu0 0.0
    %4731 = vmatprep.subr.mxu0 0.0
    %4732 = vmatpush1.msra.mxu0 0.0
    %4733 = vmatprep.subr.mxu0 0.0
    %4734 = vmatpush1.msra.mxu0 0.0
    %4735 = vmatprep.subr.mxu0 0.0
    %4736 = vmatpush1.msra.mxu0 0.0
    %4737 = vmatprep.subr.mxu0 0.0
    %4738 = vmatpush1.msra.mxu0 0.0
    %4739 = vmatprep.subr.mxu0 0.0
    %4740 = vmatpush1.msra.mxu0 0.0
    %4741 = vmatprep.subr.mxu0 0.0
    %4742 = vmatpush1.msra.mxu0 0.0
    %4743 = vmatprep.mubr.f32.mxu0 0.0
    %4744 = vmatmul.mubr.f32.gmra.mrb[0].mxu0 %v4674
    %v4745 = vpop.f32.mrb[0].mxu0
    %v4746 = vadd.f32 0.0, %v4745
    %v4747 = vpop.f32.mrb[0].mxu0
    %4748 = vmatprep.mubr.f32.mxu0 0.0
    %4749 = vmatmul.mubr.f32.gmra.mrb[0].mxu0 %v4677
    %v4750 = vpop.f32.mrb[0].mxu0
    %v4751 = vadd.f32 0.0, %v4750
    %v4752 = vpop.f32.mrb[0].mxu0
    %4753 = vdwg.mxu0
    %v4754 = vadd.f32 %v4228, %v4746
    %v4755 = vadd.f32 %v4229, %v4751
    %v4756 = vadd.f32 %v4754, %v2639
    %v4757 = vadd.f32 %v4755, %v2640
    %v4758 = vsel %vm174, %v4756, 0.0
    %4759 = vadd.xlane.f32.xlu0 %v4758
    %v4760 = vpop.xlane.xlu0 %4759
    %v4761 = vsel %vm174, %v4757, 0.0
    %4762 = vadd.xlane.f32.xlu0 %v4761
    %v4763 = vpop.xlane.xlu0 %4762
    %v4764 = vmul.f32 %v4760, %v181
    %v4765 = vmul.f32 %v4763, %v181
    %v4766 = vsub.f32 %v4756, %v4764
    %v4767 = vsub.f32 %v4757, %v4765
    %v4768 = vmul.f32 %v4766, %v4766
    %v4769 = vmul.f32 %v4767, %v4767
    %v4770 = vsel %vm174, %v4768, 0.0
    %4771 = vadd.xlane.f32.xlu0 %v4770
    %v4772 = vpop.xlane.xlu0 %4771
    %v4773 = vsel %vm174, %v4769, 0.0
    %4774 = vadd.xlane.f32.xlu0 %v4773
    %v4775 = vpop.xlane.xlu0 %4774
    %v4776 = vmul.f32 %v4772, %v181
    %v4777 = vmul.f32 %v4775, %v181
    %v4778 = vadd.f32 %v4776, 1e-12
    %v4779 = vadd.f32 %v4777, 1e-12
    %v4780 = vrsqrt.pop %v4778
    %v4781 = vrsqrt.pop %v4779
    %v4782 = vmul.f32 %v4766, %v4780
    %v4783 = vmul.f32 %v4767, %v4781
    %v4784 = vld [vmem:[#allocation2 + $0x540] sm:$0x1]
    %v4785 = vlaneseq
    %v4786 = vshrl.u32 %v4785, 7
    %v4787 = vsub.s32 0, %v4786
    %v4788 = vrot.slane %v4784, %v4787
    %v4789 = vmul.f32 %v4782, %v4788
    %v4790 = vmul.f32 %v4783, %v4788
    %v4791 = vld [vmem:[#allocation2 + $0x548] sm:$0x1]
    %v4792 = vlaneseq
    %v4793 = vshrl.u32 %v4792, 7
    %v4794 = vsub.s32 0, %v4793
    %v4795 = vrot.slane %v4791, %v4794
    %v4796 = vadd.f32 %v4789, %v4795
    %v4797 = vadd.f32 %v4790, %v4795
    %v4798 = vld [vmem:[#allocation2 + $0x550] sm:$0xff]
    %v4799 = vld [vmem:[#allocation2 + $0x558] sm:$0xff]
    %v4800 = vld [vmem:[#allocation2 + $0x560] sm:$0xff]
    %v4801 = vld [vmem:[#allocation2 + $0x568] sm:$0xff]
    %v4802 = vld [vmem:[#allocation2 + $0x570] sm:$0x1]
    %v4803 = vlaneseq
    %v4804 = vshrl.u32 %v4803, 7
    %v4805 = vsub.s32 0, %v4804
    %v4806 = vrot.slane %v4802, %v4805
    %v4808 = vsel %vm174, %v4796, 0
    %v4811 = vsel %vm174, %v4797, 0
    %4813 = vmatprep.subr.mxu0 0.0
    %4814 = vmatpush1.msra.mxu0 %v4798
    %4815 = vmatprep.subr.mxu0 0.0
    %4816 = vmatpush1.msra.mxu0 %v4799
    %4817 = vmatprep.subr.mxu0 0.0
    %4818 = vmatpush1.msra.mxu0 %v4800
    %4819 = vmatprep.subr.mxu0 0.0
    %4820 = vmatpush1.msra.mxu0 %v4801
    %4821 = vmatprep.subr.mxu0 0.0
    %4822 = vmatpush1.msra.mxu0 0.0
    %4823 = vmatprep.subr.mxu0 0.0
    %4824 = vmatpush1.msra.mxu0 0.0
    %4825 = vmatprep.subr.mxu0 0.0
    %4826 = vmatpush1.msra.mxu0 0.0
    %4827 = vmatprep.subr.mxu0 0.0
    %4828 = vmatpush1.msra.mxu0 0.0
    %4829 = vmatprep.subr.mxu0 0.0
    %4830 = vmatpush1.msra.mxu0 0.0
    %4831 = vmatprep.subr.mxu0 0.0
    %4832 = vmatpush1.msra.mxu0 0.0
    %4833 = vmatprep.subr.mxu0 0.0
    %4834 = vmatpush1.msra.mxu0 0.0
    %4835 = vmatprep.subr.mxu0 0.0
    %4836 = vmatpush1.msra.mxu0 0.0
    %4837 = vmatprep.subr.mxu0 0.0
    %4838 = vmatpush1.msra.mxu0 0.0
    %4839 = vmatprep.subr.mxu0 0.0
    %4840 = vmatpush1.msra.mxu0 0.0
    %4841 = vmatprep.subr.mxu0 0.0
    %4842 = vmatpush1.msra.mxu0 0.0
    %4843 = vmatprep.subr.mxu0 0.0
    %4844 = vmatpush1.msra.mxu0 0.0
    %4845 = vmatprep.subr.mxu0 0.0
    %4846 = vmatpush1.msra.mxu0 0.0
    %4847 = vmatprep.subr.mxu0 0.0
    %4848 = vmatpush1.msra.mxu0 0.0
    %4849 = vmatprep.subr.mxu0 0.0
    %4850 = vmatpush1.msra.mxu0 0.0
    %4851 = vmatprep.subr.mxu0 0.0
    %4852 = vmatpush1.msra.mxu0 0.0
    %4853 = vmatprep.subr.mxu0 0.0
    %4854 = vmatpush1.msra.mxu0 0.0
    %4855 = vmatprep.subr.mxu0 0.0
    %4856 = vmatpush1.msra.mxu0 0.0
    %4857 = vmatprep.subr.mxu0 0.0
    %4858 = vmatpush1.msra.mxu0 0.0
    %4859 = vmatprep.subr.mxu0 0.0
    %4860 = vmatpush1.msra.mxu0 0.0
    %4861 = vmatprep.subr.mxu0 0.0
    %4862 = vmatpush1.msra.mxu0 0.0
    %4863 = vmatprep.subr.mxu0 0.0
    %4864 = vmatpush1.msra.mxu0 0.0
    %4865 = vmatprep.subr.mxu0 0.0
    %4866 = vmatpush1.msra.mxu0 0.0
    %4867 = vmatprep.subr.mxu0 0.0
    %4868 = vmatpush1.msra.mxu0 0.0
    %4869 = vmatprep.subr.mxu0 0.0
    %4870 = vmatpush1.msra.mxu0 0.0
    %4871 = vmatprep.subr.mxu0 0.0
    %4872 = vmatpush1.msra.mxu0 0.0
    %4873 = vmatprep.subr.mxu0 0.0
    %4874 = vmatpush1.msra.mxu0 0.0
    %4875 = vmatprep.subr.mxu0 0.0
    %4876 = vmatpush1.msra.mxu0 0.0
    %4877 = vmatprep.mubr.f32.mxu0 0.0
    %4878 = vmatmul.mubr.f32.gmra.mrb[0].mxu0 %v4808
    %v4879 = vpop.f32.mrb[0].mxu0
    %v4880 = vadd.f32 %v4806, %v4879
    %v4881 = vpop.f32.mrb[0].mxu0
    %4882 = vmatprep.mubr.f32.mxu0 0.0
    %4883 = vmatmul.mubr.f32.gmra.mrb[0].mxu0 %v4811
    %v4884 = vpop.f32.mrb[0].mxu0
    %v4885 = vadd.f32 %v4806, %v4884
    %v4886 = vpop.f32.mrb[0].mxu0
    %4887 = vdwg.mxu0
    %v4888 = vmul.f32 %v4880, 0.5
    %v4889 = vmul.f32 %v4885, 0.5
    %v4890 = vmul.f32 %v4880, 0.044715
    %v4891 = vmul.f32 %v4885, 0.044715
    %v4892 = vmul.f32 %v4890, %v4880
    %v4893 = vmul.f32 %v4891, %v4885
    %v4894 = vmul.f32 %v4892, %v4880
    %v4895 = vmul.f32 %v4893, %v4885
    %v4896 = vadd.f32 %v4880, %v4894
    %v4897 = vadd.f32 %v4885, %v4895
    %v4898 = vmul.f32 %v4896, 0.7978846
    %v4899 = vmul.f32 %v4897, 0.7978846
    %v4900 = vtanh.pop %v4898
    %v4901 = vtanh.pop %v4899
    %v4902 = vadd.f32 %v4900, 1.0
    %v4903 = vadd.f32 %v4901, 1.0
    %v4904 = vmul.f32 %v4888, %v4902
    %v4905 = vmul.f32 %v4889, %v4903
    %v4906 = vld [vmem:[#allocation2 + $0x578] sm:$0xff]
    %v4907 = vld [vmem:[#allocation2 + $0x580] sm:$0xff]
    %v4908 = vld [vmem:[#allocation2 + $0x588] sm:$0xff]
    %v4909 = vld [vmem:[#allocation2 + $0x590] sm:$0xff]
    %v4910 = vld [vmem:[#allocation2 + $0x598] sm:$0xff]
    %v4911 = vld [vmem:[#allocation2 + $0x5a0] sm:$0xff]
    %v4912 = vld [vmem:[#allocation2 + $0x5a8] sm:$0xff]
    %v4913 = vld [vmem:[#allocation2 + $0x5b0] sm:$0xff]
    %v4914 = vld [vmem:[#allocation2 + $0x5b8] sm:$0x1]
    %v4915 = vlaneseq
    %v4916 = vshrl.u32 %v4915, 7
    %v4917 = vsub.s32 0, %v4916
    %v4918 = vrot.slane %v4914, %v4917
    %v4920 = vsel %vm2517, %v4904, 0
    %v4923 = vsel %vm2517, %v4905, 0
    %4925 = vmatprep.subr.mxu0 0.0
    %4926 = vmatpush1.msra.mxu0 %v4906
    %4927 = vmatprep.subr.mxu0 0.0
    %4928 = vmatpush1.msra.mxu0 %v4907
    %4929 = vmatprep.subr.mxu0 0.0
    %4930 = vmatpush1.msra.mxu0 %v4908
    %4931 = vmatprep.subr.mxu0 0.0
    %4932 = vmatpush1.msra.mxu0 %v4909
    %4933 = vmatprep.subr.mxu0 0.0
    %4934 = vmatpush1.msra.mxu0 %v4910
    %4935 = vmatprep.subr.mxu0 0.0
    %4936 = vmatpush1.msra.mxu0 %v4911
    %4937 = vmatprep.subr.mxu0 0.0
    %4938 = vmatpush1.msra.mxu0 %v4912
    %4939 = vmatprep.subr.mxu0 0.0
    %4940 = vmatpush1.msra.mxu0 %v4913
    %4941 = vmatprep.subr.mxu0 0.0
    %4942 = vmatpush1.msra.mxu0 0.0
    %4943 = vmatprep.subr.mxu0 0.0
    %4944 = vmatpush1.msra.mxu0 0.0
    %4945 = vmatprep.subr.mxu0 0.0
    %4946 = vmatpush1.msra.mxu0 0.0
    %4947 = vmatprep.subr.mxu0 0.0
    %4948 = vmatpush1.msra.mxu0 0.0
    %4949 = vmatprep.subr.mxu0 0.0
    %4950 = vmatpush1.msra.mxu0 0.0
    %4951 = vmatprep.subr.mxu0 0.0
    %4952 = vmatpush1.msra.mxu0 0.0
    %4953 = vmatprep.subr.mxu0 0.0
    %4954 = vmatpush1.msra.mxu0 0.0
    %4955 = vmatprep.subr.mxu0 0.0
    %4956 = vmatpush1.msra.mxu0 0.0
    %4957 = vmatprep.subr.mxu0 0.0
    %4958 = vmatpush1.msra.mxu0 0.0
    %4959 = vmatprep.subr.mxu0 0.0
    %4960 = vmatpush1.msra.mxu0 0.0
    %4961 = vmatprep.subr.mxu0 0.0
    %4962 = vmatpush1.msra.mxu0 0.0
    %4963 = vmatprep.subr.mxu0 0.0
    %4964 = vmatpush1.msra.mxu0 0.0
    %4965 = vmatprep.subr.mxu0 0.0
    %4966 = vmatpush1.msra.mxu0 0.0
    %4967 = vmatprep.subr.mxu0 0.0
    %4968 = vmatpush1.msra.mxu0 0.0
    %4969 = vmatprep.subr.mxu0 0.0
    %4970 = vmatpush1.msra.mxu0 0.0
    %4971 = vmatprep.subr.mxu0 0.0
    %4972 = vmatpush1.msra.mxu0 0.0
    %4973 = vmatprep.subr.mxu0 0.0
    %4974 = vmatpush1.msra.mxu0 0.0
    %4975 = vmatprep.subr.mxu0 0.0
    %4976 = vmatpush1.msra.mxu0 0.0
    %4977 = vmatprep.subr.mxu0 0.0
    %4978 = vmatpush1.msra.mxu0 0.0
    %4979 = vmatprep.subr.mxu0 0.0
    %4980 = vmatpush1.msra.mxu0 0.0
    %4981 = vmatprep.subr.mxu0 0.0
    %4982 = vmatpush1.msra.mxu0 0.0
    %4983 = vmatprep.subr.mxu0 0.0
    %4984 = vmatpush1.msra.mxu0 0.0
    %4985 = vmatprep.subr.mxu0 0.0
    %4986 = vmatpush1.msra.mxu0 0.0
    %4987 = vmatprep.subr.mxu0 0.0
    %4988 = vmatpush1.msra.mxu0 0.0
    %4989 = vmatprep.mubr.f32.mxu0 0.0
    %4990 = vmatmul.mubr.f32.gmra.mrb[0].mxu0 %v4920
    %v4991 = vpop.f32.mrb[0].mxu0
    %v4992 = vadd.f32 %v4918, %v4991
    %v4993 = vpop.f32.mrb[0].mxu0
    %4994 = vmatprep.mubr.f32.mxu0 0.0
    %4995 = vmatmul.mubr.f32.gmra.mrb[0].mxu0 %v4923
    %v4996 = vpop.f32.mrb[0].mxu0
    %v4997 = vadd.f32 %v4918, %v4996
    %v4998 = vpop.f32.mrb[0].mxu0
    %4999 = vdwg.mxu0
    %v5000 = vadd.f32 %v4992, %v4796
    %v5001 = vadd.f32 %v4997, %v4797
    %v5002 = vsel %vm174, %v5000, 0.0
    %5003 = vadd.xlane.f32.xlu0 %v5002
    %v5004 = vpop.xlane.xlu0 %5003
    %v5005 = vsel %vm174, %v5001, 0.0
    %5006 = vadd.xlane.f32.xlu0 %v5005
    %v5007 = vpop.xlane.xlu0 %5006
    %v5008 = vmul.f32 %v5004, %v181
    %v5009 = vmul.f32 %v5007, %v181
    %v5010 = vsub.f32 %v5000, %v5008
    %v5011 = vsub.f32 %v5001, %v5009
    %v5012 = vmul.f32 %v5010, %v5010
    %v5013 = vmul.f32 %v5011, %v5011
    %v5014 = vsel %vm174, %v5012, 0.0
    %5015 = vadd.xlane.f32.xlu0 %v5014
    %v5016 = vpop.xlane.xlu0 %5015
    %v5017 = vsel %vm174, %v5013, 0.0
    %5018 = vadd.xlane.f32.xlu0 %v5017
    %v5019 = vpop.xlane.xlu0 %5018
    %v5020 = vmul.f32 %v5016, %v181
    %v5021 = vmul.f32 %v5019, %v181
    %v5022 = vadd.f32 %v5020, 1e-12
    %v5023 = vadd.f32 %v5021, 1e-12
    %v5024 = vrsqrt.pop %v5022
    %v5025 = vrsqrt.pop %v5023
    %v5026 = vmul.f32 %v5010, %v5024
    %v5027 = vmul.f32 %v5011, %v5025
    %v5028 = vld [vmem:[#allocation2 + $0x5c0] sm:$0x1]
    %v5029 = vlaneseq
    %v5030 = vshrl.u32 %v5029, 7
    %v5031 = vsub.s32 0, %v5030
    %v5032 = vrot.slane %v5028, %v5031
    %v5033 = vmul.f32 %v5026, %v5032
    %v5034 = vmul.f32 %v5027, %v5032
    %v5035 = vld [vmem:[#allocation2 + $0x5c8] sm:$0x1]
    %v5036 = vlaneseq
    %v5037 = vshrl.u32 %v5036, 7
    %v5038 = vsub.s32 0, %v5037
    %v5039 = vrot.slane %v5035, %v5038
    %v5040 = vadd.f32 %v5033, %v5039
    %v5041 = vadd.f32 %v5034, %v5039
    %v5042 = vld [vmem:[#allocation2 + $0x5d0] sm:$0xff]
    %v5043 = vld [vmem:[#allocation2 + $0x5d8] sm:$0xff]
    %v5044 = vld [vmem:[#allocation2 + $0x5e0] sm:$0xff]
    %v5045 = vld [vmem:[#allocation2 + $0x5e8] sm:$0xff]
    %v5046 = vld [vmem:[#allocation2 + $0x5f0] sm:$0x1]
    %v5047 = vlaneseq
    %v5048 = vshrl.u32 %v5047, 7
    %v5049 = vsub.s32 0, %v5048
    %v5050 = vrot.slane %v5046, %v5049
    %v5052 = vsel %vm174, %v5040, 0
    %v5055 = vsel %vm174, %v5041, 0
    %5057 = vmatprep.subr.mxu0 0.0
    %5058 = vmatpush1.msra.mxu0 %v5042
    %5059 = vmatprep.subr.mxu0 0.0
    %5060 = vmatpush1.msra.mxu0 %v5043
    %5061 = vmatprep.subr.mxu0 0.0
    %5062 = vmatpush1.msra.mxu0 %v5044
    %5063 = vmatprep.subr.mxu0 0.0
    %5064 = vmatpush1.msra.mxu0 %v5045
    %5065 = vmatprep.subr.mxu0 0.0
    %5066 = vmatpush1.msra.mxu0 0.0
    %5067 = vmatprep.subr.mxu0 0.0
    %5068 = vmatpush1.msra.mxu0 0.0
    %5069 = vmatprep.subr.mxu0 0.0
    %5070 = vmatpush1.msra.mxu0 0.0
    %5071 = vmatprep.subr.mxu0 0.0
    %5072 = vmatpush1.msra.mxu0 0.0
    %5073 = vmatprep.subr.mxu0 0.0
    %5074 = vmatpush1.msra.mxu0 0.0
    %5075 = vmatprep.subr.mxu0 0.0
    %5076 = vmatpush1.msra.mxu0 0.0
    %5077 = vmatprep.subr.mxu0 0.0
    %5078 = vmatpush1.msra.mxu0 0.0
    %5079 = vmatprep.subr.mxu0 0.0
    %5080 = vmatpush1.msra.mxu0 0.0
    %5081 = vmatprep.subr.mxu0 0.0
    %5082 = vmatpush1.msra.mxu0 0.0
    %5083 = vmatprep.subr.mxu0 0.0
    %5084 = vmatpush1.msra.mxu0 0.0
    %5085 = vmatprep.subr.mxu0 0.0
    %5086 = vmatpush1.msra.mxu0 0.0
    %5087 = vmatprep.subr.mxu0 0.0
    %5088 = vmatpush1.msra.mxu0 0.0
    %5089 = vmatprep.subr.mxu0 0.0
    %5090 = vmatpush1.msra.mxu0 0.0
    %5091 = vmatprep.subr.mxu0 0.0
    %5092 = vmatpush1.msra.mxu0 0.0
    %5093 = vmatprep.subr.mxu0 0.0
    %5094 = vmatpush1.msra.mxu0 0.0
    %5095 = vmatprep.subr.mxu0 0.0
    %5096 = vmatpush1.msra.mxu0 0.0
    %5097 = vmatprep.subr.mxu0 0.0
    %5098 = vmatpush1.msra.mxu0 0.0
    %5099 = vmatprep.subr.mxu0 0.0
    %5100 = vmatpush1.msra.mxu0 0.0
    %5101 = vmatprep.subr.mxu0 0.0
    %5102 = vmatpush1.msra.mxu0 0.0
    %5103 = vmatprep.subr.mxu0 0.0
    %5104 = vmatpush1.msra.mxu0 0.0
    %5105 = vmatprep.subr.mxu0 0.0
    %5106 = vmatpush1.msra.mxu0 0.0
    %5107 = vmatprep.subr.mxu0 0.0
    %5108 = vmatpush1.msra.mxu0 0.0
    %5109 = vmatprep.subr.mxu0 0.0
    %5110 = vmatpush1.msra.mxu0 0.0
    %5111 = vmatprep.subr.mxu0 0.0
    %5112 = vmatpush1.msra.mxu0 0.0
    %5113 = vmatprep.subr.mxu0 0.0
    %5114 = vmatpush1.msra.mxu0 0.0
    %5115 = vmatprep.subr.mxu0 0.0
    %5116 = vmatpush1.msra.mxu0 0.0
    %5117 = vmatprep.subr.mxu0 0.0
    %5118 = vmatpush1.msra.mxu0 0.0
    %5119 = vmatprep.subr.mxu0 0.0
    %5120 = vmatpush1.msra.mxu0 0.0
    %5121 = vmatprep.mubr.f32.mxu0 0.0
    %5122 = vmatmul.mubr.f32.gmra.mrb[0].mxu0 %v5052
    %v5123 = vpop.f32.mrb[0].mxu0
    %v5124 = vadd.f32 %v5050, %v5123
    %v5125 = vpop.f32.mrb[0].mxu0
    %5126 = vmatprep.mubr.f32.mxu0 0.0
    %5127 = vmatmul.mubr.f32.gmra.mrb[0].mxu0 %v5055
    %v5128 = vpop.f32.mrb[0].mxu0
    %v5129 = vadd.f32 %v5050, %v5128
    %v5130 = vpop.f32.mrb[0].mxu0
    %5131 = vdwg.mxu0
    %v5132 = vmul.f32 %v5124, 0.5
    %v5133 = vmul.f32 %v5129, 0.5
    %v5134 = vmul.f32 %v5124, 0.044715
    %v5135 = vmul.f32 %v5129, 0.044715
    %v5136 = vmul.f32 %v5134, %v5124
    %v5137 = vmul.f32 %v5135, %v5129
    %v5138 = vmul.f32 %v5136, %v5124
    %v5139 = vmul.f32 %v5137, %v5129
    %v5140 = vadd.f32 %v5124, %v5138
    %v5141 = vadd.f32 %v5129, %v5139
    %v5142 = vmul.f32 %v5140, 0.7978846
    %v5143 = vmul.f32 %v5141, 0.7978846
    %v5144 = vtanh.pop %v5142
    %v5145 = vtanh.pop %v5143
    %v5146 = vadd.f32 %v5144, 1.0
    %v5147 = vadd.f32 %v5145, 1.0
    %v5148 = vmul.f32 %v5132, %v5146
    %v5149 = vmul.f32 %v5133, %v5147
    %v5150 = vsel %vm174, %v5148, 0.0
    %5151 = vadd.xlane.f32.xlu0 %v5150
    %v5152 = vpop.xlane.xlu0 %5151
    %v5153 = vsel %vm174, %v5149, 0.0
    %5154 = vadd.xlane.f32.xlu0 %v5153
    %v5155 = vpop.xlane.xlu0 %5154
    %v5156 = vmul.f32 %v5152, %v181
    %v5157 = vmul.f32 %v5155, %v181
    %v5158 = vsub.f32 %v5148, %v5156
    %v5159 = vsub.f32 %v5149, %v5157
    %v5160 = vmul.f32 %v5158, %v5158
    %v5161 = vmul.f32 %v5159, %v5159
    %v5162 = vsel %vm174, %v5160, 0.0
    %5163 = vadd.xlane.f32.xlu0 %v5162
    %v5164 = vpop.xlane.xlu0 %5163
    %v5165 = vsel %vm174, %v5161, 0.0
    %5166 = vadd.xlane.f32.xlu0 %v5165
    %v5167 = vpop.xlane.xlu0 %5166
    %v5168 = vmul.f32 %v5164, %v181
    %v5169 = vmul.f32 %v5167, %v181
    %v5170 = vadd.f32 %v5168, 1e-12
    %v5171 = vadd.f32 %v5169, 1e-12
    %v5172 = vrsqrt.pop %v5170
    %v5173 = vrsqrt.pop %v5171
    %v5174 = vmul.f32 %v5158, %v5172
    %v5175 = vmul.f32 %v5159, %v5173
    %v5176 = vld [vmem:[#allocation2 + $0x5f8] sm:$0x1]
    %v5177 = vlaneseq
    %v5178 = vshrl.u32 %v5177, 7
    %v5179 = vsub.s32 0, %v5178
    %v5180 = vrot.slane %v5176, %v5179
    %v5181 = vmul.f32 %v5174, %v5180
    %v5182 = vmul.f32 %v5175, %v5180
    %v5183 = vld [vmem:[#allocation2 + $0x600] sm:$0x1]
    %v5184 = vlaneseq
    %v5185 = vshrl.u32 %v5184, 7
    %v5186 = vsub.s32 0, %v5185
    %v5187 = vrot.slane %v5183, %v5186
    %v5188 = vadd.f32 %v5181, %v5187
    %v5189 = vadd.f32 %v5182, %v5187
    %v5190 = vld [vmem:[#allocation2 + $0x608] sm:$0xff]
    %v5191 = vld [vmem:[#allocation2 + $0x610] sm:$0xff]
    %v5192 = vld [vmem:[#allocation2 + $0x618] sm:$0xff]
    %v5193 = vld [vmem:[#allocation2 + $0x620] sm:$0xff]
    %v5194 = vld [vmem:[#allocation2 + $0x628] sm:$0x1]
    %v5195 = vlaneseq
    %v5196 = vshrl.u32 %v5195, 7
    %v5197 = vsub.s32 0, %v5196
    %v5198 = vrot.slane %v5194, %v5197
    %v5200 = vsel %vm174, %v5188, 0
    %v5203 = vsel %vm174, %v5189, 0
    %5205 = vmatprep.subr.mxu0 0.0
    %5206 = vmatpush1.msra.mxu0 %v5190
    %5207 = vmatprep.subr.mxu0 0.0
    %5208 = vmatpush1.msra.mxu0 %v5191
    %5209 = vmatprep.subr.mxu0 0.0
    %5210 = vmatpush1.msra.mxu0 %v5192
    %5211 = vmatprep.subr.mxu0 0.0
    %5212 = vmatpush1.msra.mxu0 %v5193
    %5213 = vmatprep.subr.mxu0 0.0
    %5214 = vmatpush1.msra.mxu0 0.0
    %5215 = vmatprep.subr.mxu0 0.0
    %5216 = vmatpush1.msra.mxu0 0.0
    %5217 = vmatprep.subr.mxu0 0.0
    %5218 = vmatpush1.msra.mxu0 0.0
    %5219 = vmatprep.subr.mxu0 0.0
    %5220 = vmatpush1.msra.mxu0 0.0
    %5221 = vmatprep.subr.mxu0 0.0
    %5222 = vmatpush1.msra.mxu0 0.0
    %5223 = vmatprep.subr.mxu0 0.0
    %5224 = vmatpush1.msra.mxu0 0.0
    %5225 = vmatprep.subr.mxu0 0.0
    %5226 = vmatpush1.msra.mxu0 0.0
    %5227 = vmatprep.subr.mxu0 0.0
    %5228 = vmatpush1.msra.mxu0 0.0
    %5229 = vmatprep.subr.mxu0 0.0
    %5230 = vmatpush1.msra.mxu0 0.0
    %5231 = vmatprep.subr.mxu0 0.0
    %5232 = vmatpush1.msra.mxu0 0.0
    %5233 = vmatprep.subr.mxu0 0.0
    %5234 = vmatpush1.msra.mxu0 0.0
    %5235 = vmatprep.subr.mxu0 0.0
    %5236 = vmatpush1.msra.mxu0 0.0
    %5237 = vmatprep.subr.mxu0 0.0
    %5238 = vmatpush1.msra.mxu0 0.0
    %5239 = vmatprep.subr.mxu0 0.0
    %5240 = vmatpush1.msra.mxu0 0.0
    %5241 = vmatprep.subr.mxu0 0.0
    %5242 = vmatpush1.msra.mxu0 0.0
    %5243 = vmatprep.subr.mxu0 0.0
    %5244 = vmatpush1.msra.mxu0 0.0
    %5245 = vmatprep.subr.mxu0 0.0
    %5246 = vmatpush1.msra.mxu0 0.0
    %5247 = vmatprep.subr.mxu0 0.0
    %5248 = vmatpush1.msra.mxu0 0.0
    %5249 = vmatprep.subr.mxu0 0.0
    %5250 = vmatpush1.msra.mxu0 0.0
    %5251 = vmatprep.subr.mxu0 0.0
    %5252 = vmatpush1.msra.mxu0 0.0
    %5253 = vmatprep.subr.mxu0 0.0
    %5254 = vmatpush1.msra.mxu0 0.0
    %5255 = vmatprep.subr.mxu0 0.0
    %5256 = vmatpush1.msra.mxu0 0.0
    %5257 = vmatprep.subr.mxu0 0.0
    %5258 = vmatpush1.msra.mxu0 0.0
    %5259 = vmatprep.subr.mxu0 0.0
    %5260 = vmatpush1.msra.mxu0 0.0
    %5261 = vmatprep.subr.mxu0 0.0
    %5262 = vmatpush1.msra.mxu0 0.0
    %5263 = vmatprep.subr.mxu0 0.0
    %5264 = vmatpush1.msra.mxu0 0.0
    %5265 = vmatprep.subr.mxu0 0.0
    %5266 = vmatpush1.msra.mxu0 0.0
    %5267 = vmatprep.subr.mxu0 0.0
    %5268 = vmatpush1.msra.mxu0 0.0
    %5269 = vmatprep.mubr.f32.mxu0 0.0
    %5270 = vmatmul.mubr.f32.gmra.mrb[0].mxu0 %v5200
    %v5271 = vpop.f32.mrb[0].mxu0
    %v5272 = vadd.f32 %v5198, %v5271
    %v5273 = vpop.f32.mrb[0].mxu0
    %5274 = vmatprep.mubr.f32.mxu0 0.0
    %5275 = vmatmul.mubr.f32.gmra.mrb[0].mxu0 %v5203
    %v5276 = vpop.f32.mrb[0].mxu0
    %v5277 = vadd.f32 %v5198, %v5276
    %v5278 = vpop.f32.mrb[0].mxu0
    %5279 = vdwg.mxu0
    %5280 = vst [vmem:[#allocation5] sm:$0xff] %v5272
    %5281 = vst [vmem:[#allocation5 + $0x8] sm:$0xff] %v5277
    // Predicated region
    $region18: #{bert_mlm_forward.1} parent=1 // pred_check
      _
    $region19: #{bert_mlm_forward.1} parent=1 // pred_check_branch
      %5283 = sbr.rel (0) target = $region21
    $region20: #{bert_mlm_forward.1} parent=1 // pred_region
      %s5285 = ssub.s32 256, 256
      %5286 = vsyncadd [#allocation4], %s5285
      %s5287 = sshll.u32 [#allocation5], 4
      %s5288 = int_to_ptr.vmem [resolvable:$true] %s5287
      %5293 = dma.vmem_to_hbm [thread:$0]  %s5288, 256, %s3, [#allocation4], 128, 128, 8
    $region21: #{bert_mlm_forward.1} parent=1 // pred_fallthru
      _
    // Predicated region
    $region22: #{bert_mlm_forward.1} parent=1 // pred_check
      _
    $region23: #{bert_mlm_forward.1} parent=1 // pred_check_branch
      %5295 = sbr.rel (0) target = $region25
    $region24: #{bert_mlm_forward.1} parent=1 // pred_region
      %5296 = dma.done [#allocation4], 256
    $region25: #{bert_mlm_forward.1} parent=1 // pred_fallthru
      _
    %5297 = vsyncpa [#allocation3], 1
    %5298 = vsyncpa [#allocation4], 1

</llo_original>
